<compile_context>
chip_gen: v7x
topology: tpu7x:2x2x1
jax: 0.10.0
libtpu: 0.0.40
codegen_flags: <defaults>
</compile_context>

<pallas_src>
import math
import numpy as np
import jax
import jax.numpy as jnp
from jax.experimental import pallas as pl
from jax.experimental.pallas import tpu as pltpu


# ----------------------------------------------------------------------------
# Hyper-parameter helpers (mirror the reference fp32 cumsum / cumprod)
# ----------------------------------------------------------------------------
def _radii_row(n_levels, init_radius, radius_step, multiplicative):
    if multiplicative:
        f = np.cumprod(np.full((1 + n_levels,), radius_step, np.float32))
        return np.float32(init_radius / radius_step) * f
    f = np.cumsum(np.full((1 + n_levels,), radius_step, np.float32))
    return np.float32(init_radius - radius_step) + f


def _nearest_indices(n_in, n_out):
    """F.interpolate(mode='nearest') source indices: floor(dst * n_in / n_out)."""
    return np.floor(np.arange(n_out) * (n_in / n_out)).astype(np.int64)


def _octave_matrices(H, W, idx_h, idx_w, ks, bins):
    """Host precompute of the folded band+selection matrices for one octave.

    Returns
      Acat: (n_k * H_i, H) bf16   row box-sum (window in octave space) composed
                                  with the row-selection back into octave-0 rows,
                                  stacked over radii so the kernel does one matmul.
      Bd  : (n_k, bins*W, bins*W_i) bf16  block-diagonal column box-sum composed
                                  with the per-bin column selection.
    All entries are exact 0/1 -> bf16 is lossless.
    """
    n_k = len(ks)
    Hi, Wi = len(idx_h), len(idx_w)
    Acat = np.zeros((n_k * Hi, H), np.float32)
    Bd = np.zeros((n_k, bins * W, bins * Wi), np.float32)
    for ki, k in enumerate(ks):
        for r in range(Hi):
            lo, hi = max(0, r - k + 1), min(Hi, r + k + 1)
            Acat[ki * Hi + r, idx_h[lo:hi]] = 1.0
        Bk = np.zeros((W, Wi), np.float32)
        for j in range(Wi):
            lo, hi = max(0, j - k + 1), min(Wi, j + k + 1)
            Bk[idx_w[lo:hi], j] = 1.0
        for c in range(bins):
            Bd[ki, c * W:(c + 1) * W, c * Wi:(c + 1) * Wi] = Bk
    return jnp.asarray(Acat, jnp.bfloat16), jnp.asarray(Bd, jnp.bfloat16)


# ----------------------------------------------------------------------------
# Pallas kernel: box-estimated windowed entropy for ALL octaves of one image.
# ----------------------------------------------------------------------------
def _make_pyramid_kernel(H, W, bins, n_k, octave_dims):
    n_oct = len(octave_dims)

    def kernel(*refs):
        # refs = (x_ref, [acat_ref, bd_ref] * n_oct, out_ref_0, ..., out_ref_{n_oct-1})
        x_ref = refs[0]
        mat_refs = refs[1:1 + 2 * n_oct]
        out_refs = refs[1 + 2 * n_oct:]

        a = x_ref[0, 0, :, :]                                   # (H, W) f32
        # torch: (A * bins).byte() == truncation toward zero for A in [0, 1)
        q = jnp.floor(a * bins).astype(jnp.int32)

        # level sets, bins channels concatenated along lanes -> (H, bins*W):
        #   block 0      = ~(q == uncounted_bin=0)
        #   block c >= 1 = (q == c)
        ls = [(q != 0)] + [(q == c) for c in range(1, bins)]
        L = jnp.concatenate([s.astype(jnp.bfloat16) for s in ls], axis=-1)

        for oi, (Hi, Wi) in enumerate(octave_dims):
            acat = mat_refs[2 * oi][...]                        # (n_k*Hi, H) bf16
            bd_ref = mat_refs[2 * oi + 1]                       # (n_k, bins*W, bins*Wi)

            # one fused row box-sum matmul for all radii of this octave
            t_all = jnp.dot(acat, L, preferred_element_type=jnp.float32)
            # exact: integer counts <= 2*k_max << 256, representable in bf16
            t_all = t_all.astype(jnp.bfloat16)                  # (n_k*Hi, bins*W)

            ents = []
            for ki in range(n_k):
                t_k = t_all[ki * Hi:(ki + 1) * Hi, :]           # (Hi, bins*W)
                # column box-sums for all bins at once via the block-diag matrix
                areas = jnp.dot(t_k, bd_ref[ki],
                                preferred_element_type=jnp.float32)  # (Hi, bins*Wi)
                areas = jnp.maximum(areas, 1.0)                 # clamp(min=1.0)

                inv0 = 1.0 / areas[:, :Wi]                      # one reciprocal per k
                ent = jnp.zeros((Hi, Wi), jnp.float32)
                for c in range(1, bins):
                    r = areas[:, c * Wi:(c + 1) * Wi] * inv0
                    ent = ent - r * jnp.log(r)
                ents.append(ent)

            # single lane-dense store (n_k*Wi lanes) instead of n_k masked stores
            out_refs[oi][0, :, :] = jnp.concatenate(ents, axis=-1)

    return kernel


def emi_pyramid_entropy_pallas(x, ks, bins, octave_info):
    """x: (B, 1, H, W) f32 -> list of (B, n_k, H_i, W_i) f32, one per octave."""
    B, C, H, W = x.shape
    assert C == 1
    n_k = len(ks)
    n_oct = len(octave_info)

    mats = []
    octave_dims = []
    vmem_est = 4 * H * W
    for (Hi, Wi, idx_h, idx_w) in octave_info:
        Acat, Bd = _octave_matrices(H, W, idx_h, idx_w, ks, bins)
        mats.extend([Acat, Bd])
        octave_dims.append((Hi, Wi))
        vmem_est += (2 * n_k * Hi * H            # Acat (bf16)
                     + 2 * n_k * bins * W * bins * Wi   # Bd (bf16)
                     + 4 * Hi * n_k * Wi)        # output block (f32)
    vmem_limit = int(min(max(2 * vmem_est + (8 << 20), 16 << 20), 48 << 20))

    kernel = _make_pyramid_kernel(H, W, bins, n_k, octave_dims)

    in_specs = [pl.BlockSpec((1, 1, H, W), lambda b: (b, 0, 0, 0))]
    for (Hi, Wi) in octave_dims:
        # constant index maps: band matrices stay resident, no per-step DMA
        in_specs.append(pl.BlockSpec((n_k * Hi, H), lambda b: (0, 0)))
        in_specs.append(pl.BlockSpec((n_k, bins * W, bins * Wi), lambda b: (0, 0, 0)))

    out_shapes = tuple(jax.ShapeDtypeStruct((B, Hi, n_k * Wi), jnp.float32)
                       for (Hi, Wi) in octave_dims)
    out_specs = tuple(pl.BlockSpec((1, Hi, n_k * Wi), lambda b: (b, 0, 0))
                      for (Hi, Wi) in octave_dims)

    outs = pl.pallas_call(
        kernel,
        out_shape=out_shapes,
        grid=(B,),
        in_specs=in_specs,
        out_specs=out_specs,
        compiler_params=pltpu.CompilerParams(
            dimension_semantics=("parallel",),
            vmem_limit_bytes=vmem_limit,
        ),
    )(x, *mats)

    # lane-dense (B, H_i, n_k*W_i) -> (B, n_k, H_i, W_i)
    results = []
    for (Hi, Wi), o in zip(octave_dims, outs):
        results.append(jnp.transpose(o.reshape(B, Hi, n_k, Wi), (0, 2, 1, 3)))
    return results


# ----------------------------------------------------------------------------
# Module-level wrapper mirroring EMIScalePyramid.forward
# ----------------------------------------------------------------------------
class EMIScalePyramidPallas:
    def __init__(self, n_levels=3, init_radius=1.6, min_size=15, radius_step=1.6,
                 multiplicative=False, bins=8, mode="box"):
        self.n_levels = n_levels
        self.init_radius = init_radius
        self.min_size = min_size
        self.radius_step = radius_step
        self.multiplicative = multiplicative
        self.bins = bins
        self.mode = mode
        if self.multiplicative:
            assert math.sqrt(2) * init_radius * radius_step ** (n_levels - 1) < min_size
        else:
            assert math.sqrt(2) * (init_radius + radius_step * (n_levels - 1)) < min_size
        assert mode == "box", "only mode='box' is implemented (see TODO at top)"

    def __call__(self, x):
        B, C, H, W = x.shape
        assert C == 1
        radii_row = _radii_row(self.n_levels, self.init_radius,
                               self.radius_step, self.multiplicative)
        ks = [int(v) for v in radii_row]          # torch int(k.item()) truncation
        radii = jnp.broadcast_to(jnp.asarray(radii_row, x.dtype),
                                 (B, 1 + self.n_levels))
        pixel_dists = jnp.ones((B, self.n_levels), x.dtype)

        num_octaves = int(math.log(min(H, W) / self.min_size) / math.log(2) + 1)

        # Per-octave row/column index sets (exactly F.interpolate 'nearest'
        # halving, composed back into octave-0 coordinates).
        octave_info = []
        idx_h, idx_w = np.arange(H), np.arange(W)
        h_cur, w_cur = H, W
        for i in range(num_octaves):
            octave_info.append((h_cur, w_cur, idx_h, idx_w))
            if i + 1 < num_octaves:
                h_next, w_next = h_cur // 2, w_cur // 2
                idx_h = idx_h[_nearest_indices(h_cur, h_next)]
                idx_w = idx_w[_nearest_indices(w_cur, w_next)]
                h_cur, w_cur = h_next, w_next

        pyr_list, radii_list, pixel_dists_list = [], [], []
        if num_octaves > 0:
            ents = emi_pyramid_entropy_pallas(x, ks, self.bins, octave_info)
            for i in range(num_octaves):
                pyr_list.append(ents[i][:, None])               # (B, 1, n_k, H_i, W_i)
                radii_list.append(2.0 * radii[:, :-1])
                pixel_dists_list.append((2.0 ** i) * pixel_dists)
        return pyr_list, radii_list, pixel_dists_list


# ----------------------------------------------------------------------------
# Pure-JAX reference of box_est_entropy (integral-image formulation) for checking
# ----------------------------------------------------------------------------
def _box_est_entropy_ref(x, ks, bins):
    B, C, H, W = x.shape
    q = jnp.floor(x[:, 0] * bins).astype(jnp.int32)
    ls = [(q != 0).astype(jnp.float32)] + [(q == c).astype(jnp.float32)
                                           for c in range(1, bins)]
    ls = jnp.stack(ls, axis=1)                                   # (B, bins, H, W)
    pad = max(ks) + 1
    lsp = jnp.pad(ls, ((0, 0), (0, 0), (pad, pad), (pad, pad)))
    S = jnp.cumsum(jnp.cumsum(lsp, axis=-2), axis=-1)
    areas = []
    for k in ks:
        br = S[:, :, pad + k:pad + k + H, pad + k:pad + k + W]
        bl = S[:, :, pad + k:pad + k + H, pad - k:pad - k + W]
        tr = S[:, :, pad - k:pad - k + H, pad + k:pad + k + W]
        tl = S[:, :, pad - k:pad - k + H, pad - k:pad - k + W]
        areas.append((br - bl - tr + tl)[:, :, None])
    areas = jnp.maximum(jnp.concatenate(areas, axis=2), 1.0)
    r = areas[:, 1:] / areas[:, :1]
    return -jnp.sum(r * jnp.log(r), axis=1)                      # (B, n_k, H, W)


if __name__ == "__main__":
    key = jax.random.PRNGKey(0)
    B, C, H, W = 2, 1, 32, 32
    x = jax.random.uniform(key, (B, C, H, W), dtype=jnp.float32)

    model = EMIScalePyramidPallas()  # n_levels=3, init_radius=1.6, radius_step=1.6, bins=8
    pyr_list, radii_list, pixel_dists_list = model(x)
    pyr_list = [jax.block_until_ready(p) for p in pyr_list]

    # sanity check against the pure-JAX integral-image reference, octave by octave
    ks = [int(v) for v in _radii_row(3, 1.6, 1.6, False)]
    cur = x
    for lvl, p in enumerate(pyr_list):
        ref = _box_est_entropy_ref(cur, ks, 8)
        np.testing.assert_allclose(np.asarray(p[:, 0]), np.asarray(ref),
                                   rtol=1e-5, atol=1e-5)
        h, w = cur.shape[-2], cur.shape[-1]
        cur = cur[:, :, _nearest_indices(h, h // 2)][:, :, :, _nearest_indices(w, w // 2)]

    print("KERNEL_OK")
</pallas_src>

<mosaic_0001>
module attributes {stable_mosaic.version = 11 : i64} {
  func.func @kernel(%arg0: i32, %arg1: memref<1x1x32x32xf32, #tpu.memory_space<vmem>>, %arg2: memref<128x32xbf16, #tpu.memory_space<vmem>>, %arg3: memref<4x256x256xbf16, #tpu.memory_space<vmem>>, %arg4: memref<64x32xbf16, #tpu.memory_space<vmem>>, %arg5: memref<4x256x128xbf16, #tpu.memory_space<vmem>>, %arg6: memref<1x32x128xf32, #tpu.memory_space<vmem>>, %arg7: memref<1x16x64xf32, #tpu.memory_space<vmem>>) attributes {dimension_semantics = [#tpu.dimension_semantics<parallel>], iteration_bounds = array<i64: 2>, scalar_prefetch = 0 : i64, scratch_operands = 0 : i64, tpu.core_type = #tpu.core_type<tc>, window_params = [{transform_indices = @transform_0, window_bounds = array<i64: 1, 1, 32, 32>}, {pipeline_mode = #tpu.pipeline_mode<synchronous>, transform_indices = @transform_1, window_bounds = array<i64: 128, 32>}, {pipeline_mode = #tpu.pipeline_mode<synchronous>, transform_indices = @transform_2, window_bounds = array<i64: 4, 256, 256>}, {pipeline_mode = #tpu.pipeline_mode<synchronous>, transform_indices = @transform_3, window_bounds = array<i64: 64, 32>}, {pipeline_mode = #tpu.pipeline_mode<synchronous>, transform_indices = @transform_4, window_bounds = array<i64: 4, 256, 128>}, {transform_indices = @transform_5, window_bounds = array<i64: 1, 32, 128>}, {transform_indices = @transform_6, window_bounds = array<i64: 1, 16, 64>}]} {
    %c0 = arith.constant 0 : index
    %c0_0 = arith.constant 0 : index
    %c0_1 = arith.constant 0 : index
    %c0_2 = arith.constant 0 : index
    %0 = vector.load %arg1[%c0, %c0_0, %c0_1, %c0_2] : memref<1x1x32x32xf32, #tpu.memory_space<vmem>>, vector<1x1x32x32xf32>
    %1 = vector.shape_cast %0 : vector<1x1x32x32xf32> to vector<32x32xf32>
    %cst = arith.constant 8.000000e+00 : f32
    %2 = vector.broadcast %cst : f32 to vector<32x32xf32>
    %3 = arith.mulf %1, %2 : vector<32x32xf32>
    %4 = math.floor %3 : vector<32x32xf32>
    %5 = arith.fptosi %4 : vector<32x32xf32> to vector<32x32xi32>
    %c0_i32 = arith.constant 0 : i32
    %6 = vector.broadcast %c0_i32 : i32 to vector<32x32xi32>
    %7 = arith.cmpi ne, %5, %6 : vector<32x32xi32>
    %c1_i32 = arith.constant 1 : i32
    %8 = vector.broadcast %c1_i32 : i32 to vector<32x32xi32>
    %9 = arith.cmpi eq, %5, %8 : vector<32x32xi32>
    %c2_i32 = arith.constant 2 : i32
    %10 = vector.broadcast %c2_i32 : i32 to vector<32x32xi32>
    %11 = arith.cmpi eq, %5, %10 : vector<32x32xi32>
    %c3_i32 = arith.constant 3 : i32
    %12 = vector.broadcast %c3_i32 : i32 to vector<32x32xi32>
    %13 = arith.cmpi eq, %5, %12 : vector<32x32xi32>
    %c4_i32 = arith.constant 4 : i32
    %14 = vector.broadcast %c4_i32 : i32 to vector<32x32xi32>
    %15 = arith.cmpi eq, %5, %14 : vector<32x32xi32>
    %c5_i32 = arith.constant 5 : i32
    %16 = vector.broadcast %c5_i32 : i32 to vector<32x32xi32>
    %17 = arith.cmpi eq, %5, %16 : vector<32x32xi32>
    %c6_i32 = arith.constant 6 : i32
    %18 = vector.broadcast %c6_i32 : i32 to vector<32x32xi32>
    %19 = arith.cmpi eq, %5, %18 : vector<32x32xi32>
    %c7_i32 = arith.constant 7 : i32
    %20 = vector.broadcast %c7_i32 : i32 to vector<32x32xi32>
    %21 = arith.cmpi eq, %5, %20 : vector<32x32xi32>
    %22 = arith.extui %7 : vector<32x32xi1> to vector<32x32xi32>
    %23 = arith.sitofp %22 : vector<32x32xi32> to vector<32x32xf32>
    %24 = arith.truncf %23 : vector<32x32xf32> to vector<32x32xbf16>
    %25 = arith.extui %9 : vector<32x32xi1> to vector<32x32xi32>
    %26 = arith.sitofp %25 : vector<32x32xi32> to vector<32x32xf32>
    %27 = arith.truncf %26 : vector<32x32xf32> to vector<32x32xbf16>
    %28 = arith.extui %11 : vector<32x32xi1> to vector<32x32xi32>
    %29 = arith.sitofp %28 : vector<32x32xi32> to vector<32x32xf32>
    %30 = arith.truncf %29 : vector<32x32xf32> to vector<32x32xbf16>
    %31 = arith.extui %13 : vector<32x32xi1> to vector<32x32xi32>
    %32 = arith.sitofp %31 : vector<32x32xi32> to vector<32x32xf32>
    %33 = arith.truncf %32 : vector<32x32xf32> to vector<32x32xbf16>
    %34 = arith.extui %15 : vector<32x32xi1> to vector<32x32xi32>
    %35 = arith.sitofp %34 : vector<32x32xi32> to vector<32x32xf32>
    %36 = arith.truncf %35 : vector<32x32xf32> to vector<32x32xbf16>
    %37 = arith.extui %17 : vector<32x32xi1> to vector<32x32xi32>
    %38 = arith.sitofp %37 : vector<32x32xi32> to vector<32x32xf32>
    %39 = arith.truncf %38 : vector<32x32xf32> to vector<32x32xbf16>
    %40 = arith.extui %19 : vector<32x32xi1> to vector<32x32xi32>
    %41 = arith.sitofp %40 : vector<32x32xi32> to vector<32x32xf32>
    %42 = arith.truncf %41 : vector<32x32xf32> to vector<32x32xbf16>
    %43 = arith.extui %21 : vector<32x32xi1> to vector<32x32xi32>
    %44 = arith.sitofp %43 : vector<32x32xi32> to vector<32x32xf32>
    %45 = arith.truncf %44 : vector<32x32xf32> to vector<32x32xbf16>
    %46 = tpu.concatenate %24, %27, %30, %33, %36, %39, %42, %45 in 1 : vector<32x32xbf16>, vector<32x32xbf16>, vector<32x32xbf16>, vector<32x32xbf16>, vector<32x32xbf16>, vector<32x32xbf16>, vector<32x32xbf16>, vector<32x32xbf16> -> vector<32x256xbf16>
    %c0_3 = arith.constant 0 : index
    %c0_4 = arith.constant 0 : index
    %47 = vector.load %arg2[%c0_3, %c0_4] : memref<128x32xbf16, #tpu.memory_space<vmem>>, vector<128x32xbf16>
    %cst_5 = arith.constant dense<0.000000e+00> : vector<128x256xf32>
    %48 = tpu.matmul %47, %46, %cst_5 {dimension_numbers = #tpu.dot_dimension_numbers<[1], [0], [0], [1], [0, 0, 1, 1], [], []>} : vector<128x32xbf16>, vector<32x256xbf16>, vector<128x256xf32> -> vector<128x256xf32>
    %49 = arith.truncf %48 : vector<128x256xf32> to vector<128x256xbf16>
    %50 = vector.extract_strided_slice %49 {offsets = [0, 0], sizes = [32, 256], strides = [1, 1]} : vector<128x256xbf16> to vector<32x256xbf16>
    %c0_6 = arith.constant 0 : index
    %c0_7 = arith.constant 0 : index
    %c0_8 = arith.constant 0 : index
    %51 = vector.load %arg3[%c0_6, %c0_7, %c0_8] : memref<4x256x256xbf16, #tpu.memory_space<vmem>>, vector<1x256x256xbf16>
    %52 = vector.shape_cast %51 : vector<1x256x256xbf16> to vector<256x256xbf16>
    %cst_9 = arith.constant dense<0.000000e+00> : vector<32x256xf32>
    %53 = tpu.matmul %50, %52, %cst_9 {dimension_numbers = #tpu.dot_dimension_numbers<[1], [0], [0], [1], [0, 0, 1, 1], [], []>} : vector<32x256xbf16>, vector<256x256xbf16>, vector<32x256xf32> -> vector<32x256xf32>
    %cst_10 = arith.constant 1.000000e+00 : f32
    %54 = vector.broadcast %cst_10 : f32 to vector<32x256xf32>
    %55 = arith.maximumf %53, %54 : vector<32x256xf32>
    %56 = vector.extract_strided_slice %55 {offsets = [0, 0], sizes = [32, 32], strides = [1, 1]} : vector<32x256xf32> to vector<32x32xf32>
    %cst_11 = arith.constant 1.000000e+00 : f32
    %57 = vector.broadcast %cst_11 : f32 to vector<32x32xf32>
    %58 = arith.divf %57, %56 : vector<32x32xf32>
    %cst_12 = arith.constant 0.000000e+00 : f32
    %59 = vector.broadcast %cst_12 : f32 to vector<32x32xf32>
    %60 = vector.extract_strided_slice %55 {offsets = [0, 32], sizes = [32, 32], strides = [1, 1]} : vector<32x256xf32> to vector<32x32xf32>
    %61 = arith.mulf %60, %58 : vector<32x32xf32>
    %62 = math.log %61 : vector<32x32xf32>
    %63 = arith.mulf %61, %62 : vector<32x32xf32>
    %64 = arith.subf %59, %63 : vector<32x32xf32>
    %65 = vector.extract_strided_slice %55 {offsets = [0, 64], sizes = [32, 32], strides = [1, 1]} : vector<32x256xf32> to vector<32x32xf32>
    %66 = arith.mulf %65, %58 : vector<32x32xf32>
    %67 = math.log %66 : vector<32x32xf32>
    %68 = arith.mulf %66, %67 : vector<32x32xf32>
    %69 = arith.subf %64, %68 : vector<32x32xf32>
    %70 = vector.extract_strided_slice %55 {offsets = [0, 96], sizes = [32, 32], strides = [1, 1]} : vector<32x256xf32> to vector<32x32xf32>
    %71 = arith.mulf %70, %58 : vector<32x32xf32>
    %72 = math.log %71 : vector<32x32xf32>
    %73 = arith.mulf %71, %72 : vector<32x32xf32>
    %74 = arith.subf %69, %73 : vector<32x32xf32>
    %75 = vector.extract_strided_slice %55 {offsets = [0, 128], sizes = [32, 32], strides = [1, 1]} : vector<32x256xf32> to vector<32x32xf32>
    %76 = arith.mulf %75, %58 : vector<32x32xf32>
    %77 = math.log %76 : vector<32x32xf32>
    %78 = arith.mulf %76, %77 : vector<32x32xf32>
    %79 = arith.subf %74, %78 : vector<32x32xf32>
    %80 = vector.extract_strided_slice %55 {offsets = [0, 160], sizes = [32, 32], strides = [1, 1]} : vector<32x256xf32> to vector<32x32xf32>
    %81 = arith.mulf %80, %58 : vector<32x32xf32>
    %82 = math.log %81 : vector<32x32xf32>
    %83 = arith.mulf %81, %82 : vector<32x32xf32>
    %84 = arith.subf %79, %83 : vector<32x32xf32>
    %85 = vector.extract_strided_slice %55 {offsets = [0, 192], sizes = [32, 32], strides = [1, 1]} : vector<32x256xf32> to vector<32x32xf32>
    %86 = arith.mulf %85, %58 : vector<32x32xf32>
    %87 = math.log %86 : vector<32x32xf32>
    %88 = arith.mulf %86, %87 : vector<32x32xf32>
    %89 = arith.subf %84, %88 : vector<32x32xf32>
    %90 = vector.extract_strided_slice %55 {offsets = [0, 224], sizes = [32, 32], strides = [1, 1]} : vector<32x256xf32> to vector<32x32xf32>
    %91 = arith.mulf %90, %58 : vector<32x32xf32>
    %92 = math.log %91 : vector<32x32xf32>
    %93 = arith.mulf %91, %92 : vector<32x32xf32>
    %94 = arith.subf %89, %93 : vector<32x32xf32>
    %95 = vector.extract_strided_slice %49 {offsets = [32, 0], sizes = [32, 256], strides = [1, 1]} : vector<128x256xbf16> to vector<32x256xbf16>
    %c1 = arith.constant 1 : index
    %c0_13 = arith.constant 0 : index
    %c0_14 = arith.constant 0 : index
    %96 = vector.load %arg3[%c1, %c0_13, %c0_14] : memref<4x256x256xbf16, #tpu.memory_space<vmem>>, vector<1x256x256xbf16>
    %97 = vector.shape_cast %96 : vector<1x256x256xbf16> to vector<256x256xbf16>
    %cst_15 = arith.constant dense<0.000000e+00> : vector<32x256xf32>
    %98 = tpu.matmul %95, %97, %cst_15 {dimension_numbers = #tpu.dot_dimension_numbers<[1], [0], [0], [1], [0, 0, 1, 1], [], []>} : vector<32x256xbf16>, vector<256x256xbf16>, vector<32x256xf32> -> vector<32x256xf32>
    %cst_16 = arith.constant 1.000000e+00 : f32
    %99 = vector.broadcast %cst_16 : f32 to vector<32x256xf32>
    %100 = arith.maximumf %98, %99 : vector<32x256xf32>
    %101 = vector.extract_strided_slice %100 {offsets = [0, 0], sizes = [32, 32], strides = [1, 1]} : vector<32x256xf32> to vector<32x32xf32>
    %cst_17 = arith.constant 1.000000e+00 : f32
    %102 = vector.broadcast %cst_17 : f32 to vector<32x32xf32>
    %103 = arith.divf %102, %101 : vector<32x32xf32>
    %cst_18 = arith.constant 0.000000e+00 : f32
    %104 = vector.broadcast %cst_18 : f32 to vector<32x32xf32>
    %105 = vector.extract_strided_slice %100 {offsets = [0, 32], sizes = [32, 32], strides = [1, 1]} : vector<32x256xf32> to vector<32x32xf32>
    %106 = arith.mulf %105, %103 : vector<32x32xf32>
    %107 = math.log %106 : vector<32x32xf32>
    %108 = arith.mulf %106, %107 : vector<32x32xf32>
    %109 = arith.subf %104, %108 : vector<32x32xf32>
    %110 = vector.extract_strided_slice %100 {offsets = [0, 64], sizes = [32, 32], strides = [1, 1]} : vector<32x256xf32> to vector<32x32xf32>
    %111 = arith.mulf %110, %103 : vector<32x32xf32>
    %112 = math.log %111 : vector<32x32xf32>
    %113 = arith.mulf %111, %112 : vector<32x32xf32>
    %114 = arith.subf %109, %113 : vector<32x32xf32>
    %115 = vector.extract_strided_slice %100 {offsets = [0, 96], sizes = [32, 32], strides = [1, 1]} : vector<32x256xf32> to vector<32x32xf32>
    %116 = arith.mulf %115, %103 : vector<32x32xf32>
    %117 = math.log %116 : vector<32x32xf32>
    %118 = arith.mulf %116, %117 : vector<32x32xf32>
    %119 = arith.subf %114, %118 : vector<32x32xf32>
    %120 = vector.extract_strided_slice %100 {offsets = [0, 128], sizes = [32, 32], strides = [1, 1]} : vector<32x256xf32> to vector<32x32xf32>
    %121 = arith.mulf %120, %103 : vector<32x32xf32>
    %122 = math.log %121 : vector<32x32xf32>
    %123 = arith.mulf %121, %122 : vector<32x32xf32>
    %124 = arith.subf %119, %123 : vector<32x32xf32>
    %125 = vector.extract_strided_slice %100 {offsets = [0, 160], sizes = [32, 32], strides = [1, 1]} : vector<32x256xf32> to vector<32x32xf32>
    %126 = arith.mulf %125, %103 : vector<32x32xf32>
    %127 = math.log %126 : vector<32x32xf32>
    %128 = arith.mulf %126, %127 : vector<32x32xf32>
    %129 = arith.subf %124, %128 : vector<32x32xf32>
    %130 = vector.extract_strided_slice %100 {offsets = [0, 192], sizes = [32, 32], strides = [1, 1]} : vector<32x256xf32> to vector<32x32xf32>
    %131 = arith.mulf %130, %103 : vector<32x32xf32>
    %132 = math.log %131 : vector<32x32xf32>
    %133 = arith.mulf %131, %132 : vector<32x32xf32>
    %134 = arith.subf %129, %133 : vector<32x32xf32>
    %135 = vector.extract_strided_slice %100 {offsets = [0, 224], sizes = [32, 32], strides = [1, 1]} : vector<32x256xf32> to vector<32x32xf32>
    %136 = arith.mulf %135, %103 : vector<32x32xf32>
    %137 = math.log %136 : vector<32x32xf32>
    %138 = arith.mulf %136, %137 : vector<32x32xf32>
    %139 = arith.subf %134, %138 : vector<32x32xf32>
    %140 = vector.extract_strided_slice %49 {offsets = [64, 0], sizes = [32, 256], strides = [1, 1]} : vector<128x256xbf16> to vector<32x256xbf16>
    %c2 = arith.constant 2 : index
    %c0_19 = arith.constant 0 : index
    %c0_20 = arith.constant 0 : index
    %141 = vector.load %arg3[%c2, %c0_19, %c0_20] : memref<4x256x256xbf16, #tpu.memory_space<vmem>>, vector<1x256x256xbf16>
    %142 = vector.shape_cast %141 : vector<1x256x256xbf16> to vector<256x256xbf16>
    %cst_21 = arith.constant dense<0.000000e+00> : vector<32x256xf32>
    %143 = tpu.matmul %140, %142, %cst_21 {dimension_numbers = #tpu.dot_dimension_numbers<[1], [0], [0], [1], [0, 0, 1, 1], [], []>} : vector<32x256xbf16>, vector<256x256xbf16>, vector<32x256xf32> -> vector<32x256xf32>
    %cst_22 = arith.constant 1.000000e+00 : f32
    %144 = vector.broadcast %cst_22 : f32 to vector<32x256xf32>
    %145 = arith.maximumf %143, %144 : vector<32x256xf32>
    %146 = vector.extract_strided_slice %145 {offsets = [0, 0], sizes = [32, 32], strides = [1, 1]} : vector<32x256xf32> to vector<32x32xf32>
    %cst_23 = arith.constant 1.000000e+00 : f32
    %147 = vector.broadcast %cst_23 : f32 to vector<32x32xf32>
    %148 = arith.divf %147, %146 : vector<32x32xf32>
    %cst_24 = arith.constant 0.000000e+00 : f32
    %149 = vector.broadcast %cst_24 : f32 to vector<32x32xf32>
    %150 = vector.extract_strided_slice %145 {offsets = [0, 32], sizes = [32, 32], strides = [1, 1]} : vector<32x256xf32> to vector<32x32xf32>
    %151 = arith.mulf %150, %148 : vector<32x32xf32>
    %152 = math.log %151 : vector<32x32xf32>
    %153 = arith.mulf %151, %152 : vector<32x32xf32>
    %154 = arith.subf %149, %153 : vector<32x32xf32>
    %155 = vector.extract_strided_slice %145 {offsets = [0, 64], sizes = [32, 32], strides = [1, 1]} : vector<32x256xf32> to vector<32x32xf32>
    %156 = arith.mulf %155, %148 : vector<32x32xf32>
    %157 = math.log %156 : vector<32x32xf32>
    %158 = arith.mulf %156, %157 : vector<32x32xf32>
    %159 = arith.subf %154, %158 : vector<32x32xf32>
    %160 = vector.extract_strided_slice %145 {offsets = [0, 96], sizes = [32, 32], strides = [1, 1]} : vector<32x256xf32> to vector<32x32xf32>
    %161 = arith.mulf %160, %148 : vector<32x32xf32>
    %162 = math.log %161 : vector<32x32xf32>
    %163 = arith.mulf %161, %162 : vector<32x32xf32>
    %164 = arith.subf %159, %163 : vector<32x32xf32>
    %165 = vector.extract_strided_slice %145 {offsets = [0, 128], sizes = [32, 32], strides = [1, 1]} : vector<32x256xf32> to vector<32x32xf32>
    %166 = arith.mulf %165, %148 : vector<32x32xf32>
    %167 = math.log %166 : vector<32x32xf32>
    %168 = arith.mulf %166, %167 : vector<32x32xf32>
    %169 = arith.subf %164, %168 : vector<32x32xf32>
    %170 = vector.extract_strided_slice %145 {offsets = [0, 160], sizes = [32, 32], strides = [1, 1]} : vector<32x256xf32> to vector<32x32xf32>
    %171 = arith.mulf %170, %148 : vector<32x32xf32>
    %172 = math.log %171 : vector<32x32xf32>
    %173 = arith.mulf %171, %172 : vector<32x32xf32>
    %174 = arith.subf %169, %173 : vector<32x32xf32>
    %175 = vector.extract_strided_slice %145 {offsets = [0, 192], sizes = [32, 32], strides = [1, 1]} : vector<32x256xf32> to vector<32x32xf32>
    %176 = arith.mulf %175, %148 : vector<32x32xf32>
    %177 = math.log %176 : vector<32x32xf32>
    %178 = arith.mulf %176, %177 : vector<32x32xf32>
    %179 = arith.subf %174, %178 : vector<32x32xf32>
    %180 = vector.extract_strided_slice %145 {offsets = [0, 224], sizes = [32, 32], strides = [1, 1]} : vector<32x256xf32> to vector<32x32xf32>
    %181 = arith.mulf %180, %148 : vector<32x32xf32>
    %182 = math.log %181 : vector<32x32xf32>
    %183 = arith.mulf %181, %182 : vector<32x32xf32>
    %184 = arith.subf %179, %183 : vector<32x32xf32>
    %185 = vector.extract_strided_slice %49 {offsets = [96, 0], sizes = [32, 256], strides = [1, 1]} : vector<128x256xbf16> to vector<32x256xbf16>
    %c3 = arith.constant 3 : index
    %c0_25 = arith.constant 0 : index
    %c0_26 = arith.constant 0 : index
    %186 = vector.load %arg3[%c3, %c0_25, %c0_26] : memref<4x256x256xbf16, #tpu.memory_space<vmem>>, vector<1x256x256xbf16>
    %187 = vector.shape_cast %186 : vector<1x256x256xbf16> to vector<256x256xbf16>
    %cst_27 = arith.constant dense<0.000000e+00> : vector<32x256xf32>
    %188 = tpu.matmul %185, %187, %cst_27 {dimension_numbers = #tpu.dot_dimension_numbers<[1], [0], [0], [1], [0, 0, 1, 1], [], []>} : vector<32x256xbf16>, vector<256x256xbf16>, vector<32x256xf32> -> vector<32x256xf32>
    %cst_28 = arith.constant 1.000000e+00 : f32
    %189 = vector.broadcast %cst_28 : f32 to vector<32x256xf32>
    %190 = arith.maximumf %188, %189 : vector<32x256xf32>
    %191 = vector.extract_strided_slice %190 {offsets = [0, 0], sizes = [32, 32], strides = [1, 1]} : vector<32x256xf32> to vector<32x32xf32>
    %cst_29 = arith.constant 1.000000e+00 : f32
    %192 = vector.broadcast %cst_29 : f32 to vector<32x32xf32>
    %193 = arith.divf %192, %191 : vector<32x32xf32>
    %cst_30 = arith.constant 0.000000e+00 : f32
    %194 = vector.broadcast %cst_30 : f32 to vector<32x32xf32>
    %195 = vector.extract_strided_slice %190 {offsets = [0, 32], sizes = [32, 32], strides = [1, 1]} : vector<32x256xf32> to vector<32x32xf32>
    %196 = arith.mulf %195, %193 : vector<32x32xf32>
    %197 = math.log %196 : vector<32x32xf32>
    %198 = arith.mulf %196, %197 : vector<32x32xf32>
    %199 = arith.subf %194, %198 : vector<32x32xf32>
    %200 = vector.extract_strided_slice %190 {offsets = [0, 64], sizes = [32, 32], strides = [1, 1]} : vector<32x256xf32> to vector<32x32xf32>
    %201 = arith.mulf %200, %193 : vector<32x32xf32>
    %202 = math.log %201 : vector<32x32xf32>
    %203 = arith.mulf %201, %202 : vector<32x32xf32>
    %204 = arith.subf %199, %203 : vector<32x32xf32>
    %205 = vector.extract_strided_slice %190 {offsets = [0, 96], sizes = [32, 32], strides = [1, 1]} : vector<32x256xf32> to vector<32x32xf32>
    %206 = arith.mulf %205, %193 : vector<32x32xf32>
    %207 = math.log %206 : vector<32x32xf32>
    %208 = arith.mulf %206, %207 : vector<32x32xf32>
    %209 = arith.subf %204, %208 : vector<32x32xf32>
    %210 = vector.extract_strided_slice %190 {offsets = [0, 128], sizes = [32, 32], strides = [1, 1]} : vector<32x256xf32> to vector<32x32xf32>
    %211 = arith.mulf %210, %193 : vector<32x32xf32>
    %212 = math.log %211 : vector<32x32xf32>
    %213 = arith.mulf %211, %212 : vector<32x32xf32>
    %214 = arith.subf %209, %213 : vector<32x32xf32>
    %215 = vector.extract_strided_slice %190 {offsets = [0, 160], sizes = [32, 32], strides = [1, 1]} : vector<32x256xf32> to vector<32x32xf32>
    %216 = arith.mulf %215, %193 : vector<32x32xf32>
    %217 = math.log %216 : vector<32x32xf32>
    %218 = arith.mulf %216, %217 : vector<32x32xf32>
    %219 = arith.subf %214, %218 : vector<32x32xf32>
    %220 = vector.extract_strided_slice %190 {offsets = [0, 192], sizes = [32, 32], strides = [1, 1]} : vector<32x256xf32> to vector<32x32xf32>
    %221 = arith.mulf %220, %193 : vector<32x32xf32>
    %222 = math.log %221 : vector<32x32xf32>
    %223 = arith.mulf %221, %222 : vector<32x32xf32>
    %224 = arith.subf %219, %223 : vector<32x32xf32>
    %225 = vector.extract_strided_slice %190 {offsets = [0, 224], sizes = [32, 32], strides = [1, 1]} : vector<32x256xf32> to vector<32x32xf32>
    %226 = arith.mulf %225, %193 : vector<32x32xf32>
    %227 = math.log %226 : vector<32x32xf32>
    %228 = arith.mulf %226, %227 : vector<32x32xf32>
    %229 = arith.subf %224, %228 : vector<32x32xf32>
    %230 = tpu.concatenate %94, %139, %184, %229 in 1 : vector<32x32xf32>, vector<32x32xf32>, vector<32x32xf32>, vector<32x32xf32> -> vector<32x128xf32>
    %c0_31 = arith.constant 0 : index
    %c0_32 = arith.constant 0 : index
    %c0_33 = arith.constant 0 : index
    %231 = vector.load %arg6[%c0_31, %c0_32, %c0_33] : memref<1x32x128xf32, #tpu.memory_space<vmem>>, vector<1x32x128xf32>
    %232 = vector.shape_cast %231 : vector<1x32x128xf32> to vector<32x128xf32>
    %233 = vector.shape_cast %230 : vector<32x128xf32> to vector<1x32x128xf32>
    tpu.vector_store %arg6[%c0_31, %c0_32, %c0_33], %233 {strides = array<i32>} : memref<1x32x128xf32, #tpu.memory_space<vmem>>, vector<1x32x128xf32>,
    %c0_34 = arith.constant 0 : index
    %c0_35 = arith.constant 0 : index
    %234 = vector.load %arg4[%c0_34, %c0_35] : memref<64x32xbf16, #tpu.memory_space<vmem>>, vector<64x32xbf16>
    %cst_36 = arith.constant dense<0.000000e+00> : vector<64x256xf32>
    %235 = tpu.matmul %234, %46, %cst_36 {dimension_numbers = #tpu.dot_dimension_numbers<[1], [0], [0], [1], [0, 0, 1, 1], [], []>} : vector<64x32xbf16>, vector<32x256xbf16>, vector<64x256xf32> -> vector<64x256xf32>
    %236 = arith.truncf %235 : vector<64x256xf32> to vector<64x256xbf16>
    %237 = vector.extract_strided_slice %236 {offsets = [0, 0], sizes = [16, 256], strides = [1, 1]} : vector<64x256xbf16> to vector<16x256xbf16>
    %c0_37 = arith.constant 0 : index
    %c0_38 = arith.constant 0 : index
    %c0_39 = arith.constant 0 : index
    %238 = vector.load %arg5[%c0_37, %c0_38, %c0_39] : memref<4x256x128xbf16, #tpu.memory_space<vmem>>, vector<1x256x128xbf16>
    %239 = vector.shape_cast %238 : vector<1x256x128xbf16> to vector<256x128xbf16>
    %cst_40 = arith.constant dense<0.000000e+00> : vector<16x128xf32>
    %240 = tpu.matmul %237, %239, %cst_40 {dimension_numbers = #tpu.dot_dimension_numbers<[1], [0], [0], [1], [0, 0, 1, 1], [], []>} : vector<16x256xbf16>, vector<256x128xbf16>, vector<16x128xf32> -> vector<16x128xf32>
    %cst_41 = arith.constant 1.000000e+00 : f32
    %241 = vector.broadcast %cst_41 : f32 to vector<16x128xf32>
    %242 = arith.maximumf %240, %241 : vector<16x128xf32>
    %243 = vector.extract_strided_slice %242 {offsets = [0, 0], sizes = [16, 16], strides = [1, 1]} : vector<16x128xf32> to vector<16x16xf32>
    %cst_42 = arith.constant 1.000000e+00 : f32
    %244 = vector.broadcast %cst_42 : f32 to vector<16x16xf32>
    %245 = arith.divf %244, %243 : vector<16x16xf32>
    %cst_43 = arith.constant 0.000000e+00 : f32
    %246 = vector.broadcast %cst_43 : f32 to vector<16x16xf32>
    %247 = vector.extract_strided_slice %242 {offsets = [0, 16], sizes = [16, 16], strides = [1, 1]} : vector<16x128xf32> to vector<16x16xf32>
    %248 = arith.mulf %247, %245 : vector<16x16xf32>
    %249 = math.log %248 : vector<16x16xf32>
    %250 = arith.mulf %248, %249 : vector<16x16xf32>
    %251 = arith.subf %246, %250 : vector<16x16xf32>
    %252 = vector.extract_strided_slice %242 {offsets = [0, 32], sizes = [16, 16], strides = [1, 1]} : vector<16x128xf32> to vector<16x16xf32>
    %253 = arith.mulf %252, %245 : vector<16x16xf32>
    %254 = math.log %253 : vector<16x16xf32>
    %255 = arith.mulf %253, %254 : vector<16x16xf32>
    %256 = arith.subf %251, %255 : vector<16x16xf32>
    %257 = vector.extract_strided_slice %242 {offsets = [0, 48], sizes = [16, 16], strides = [1, 1]} : vector<16x128xf32> to vector<16x16xf32>
    %258 = arith.mulf %257, %245 : vector<16x16xf32>
    %259 = math.log %258 : vector<16x16xf32>
    %260 = arith.mulf %258, %259 : vector<16x16xf32>
    %261 = arith.subf %256, %260 : vector<16x16xf32>
    %262 = vector.extract_strided_slice %242 {offsets = [0, 64], sizes = [16, 16], strides = [1, 1]} : vector<16x128xf32> to vector<16x16xf32>
    %263 = arith.mulf %262, %245 : vector<16x16xf32>
    %264 = math.log %263 : vector<16x16xf32>
    %265 = arith.mulf %263, %264 : vector<16x16xf32>
    %266 = arith.subf %261, %265 : vector<16x16xf32>
    %267 = vector.extract_strided_slice %242 {offsets = [0, 80], sizes = [16, 16], strides = [1, 1]} : vector<16x128xf32> to vector<16x16xf32>
    %268 = arith.mulf %267, %245 : vector<16x16xf32>
    %269 = math.log %268 : vector<16x16xf32>
    %270 = arith.mulf %268, %269 : vector<16x16xf32>
    %271 = arith.subf %266, %270 : vector<16x16xf32>
    %272 = vector.extract_strided_slice %242 {offsets = [0, 96], sizes = [16, 16], strides = [1, 1]} : vector<16x128xf32> to vector<16x16xf32>
    %273 = arith.mulf %272, %245 : vector<16x16xf32>
    %274 = math.log %273 : vector<16x16xf32>
    %275 = arith.mulf %273, %274 : vector<16x16xf32>
    %276 = arith.subf %271, %275 : vector<16x16xf32>
    %277 = vector.extract_strided_slice %242 {offsets = [0, 112], sizes = [16, 16], strides = [1, 1]} : vector<16x128xf32> to vector<16x16xf32>
    %278 = arith.mulf %277, %245 : vector<16x16xf32>
    %279 = math.log %278 : vector<16x16xf32>
    %280 = arith.mulf %278, %279 : vector<16x16xf32>
    %281 = arith.subf %276, %280 : vector<16x16xf32>
    %282 = vector.extract_strided_slice %236 {offsets = [16, 0], sizes = [16, 256], strides = [1, 1]} : vector<64x256xbf16> to vector<16x256xbf16>
    %c1_44 = arith.constant 1 : index
    %c0_45 = arith.constant 0 : index
    %c0_46 = arith.constant 0 : index
    %283 = vector.load %arg5[%c1_44, %c0_45, %c0_46] : memref<4x256x128xbf16, #tpu.memory_space<vmem>>, vector<1x256x128xbf16>
    %284 = vector.shape_cast %283 : vector<1x256x128xbf16> to vector<256x128xbf16>
    %cst_47 = arith.constant dense<0.000000e+00> : vector<16x128xf32>
    %285 = tpu.matmul %282, %284, %cst_47 {dimension_numbers = #tpu.dot_dimension_numbers<[1], [0], [0], [1], [0, 0, 1, 1], [], []>} : vector<16x256xbf16>, vector<256x128xbf16>, vector<16x128xf32> -> vector<16x128xf32>
    %cst_48 = arith.constant 1.000000e+00 : f32
    %286 = vector.broadcast %cst_48 : f32 to vector<16x128xf32>
    %287 = arith.maximumf %285, %286 : vector<16x128xf32>
    %288 = vector.extract_strided_slice %287 {offsets = [0, 0], sizes = [16, 16], strides = [1, 1]} : vector<16x128xf32> to vector<16x16xf32>
    %cst_49 = arith.constant 1.000000e+00 : f32
    %289 = vector.broadcast %cst_49 : f32 to vector<16x16xf32>
    %290 = arith.divf %289, %288 : vector<16x16xf32>
    %cst_50 = arith.constant 0.000000e+00 : f32
    %291 = vector.broadcast %cst_50 : f32 to vector<16x16xf32>
    %292 = vector.extract_strided_slice %287 {offsets = [0, 16], sizes = [16, 16], strides = [1, 1]} : vector<16x128xf32> to vector<16x16xf32>
    %293 = arith.mulf %292, %290 : vector<16x16xf32>
    %294 = math.log %293 : vector<16x16xf32>
    %295 = arith.mulf %293, %294 : vector<16x16xf32>
    %296 = arith.subf %291, %295 : vector<16x16xf32>
    %297 = vector.extract_strided_slice %287 {offsets = [0, 32], sizes = [16, 16], strides = [1, 1]} : vector<16x128xf32> to vector<16x16xf32>
    %298 = arith.mulf %297, %290 : vector<16x16xf32>
    %299 = math.log %298 : vector<16x16xf32>
    %300 = arith.mulf %298, %299 : vector<16x16xf32>
    %301 = arith.subf %296, %300 : vector<16x16xf32>
    %302 = vector.extract_strided_slice %287 {offsets = [0, 48], sizes = [16, 16], strides = [1, 1]} : vector<16x128xf32> to vector<16x16xf32>
    %303 = arith.mulf %302, %290 : vector<16x16xf32>
    %304 = math.log %303 : vector<16x16xf32>
    %305 = arith.mulf %303, %304 : vector<16x16xf32>
    %306 = arith.subf %301, %305 : vector<16x16xf32>
    %307 = vector.extract_strided_slice %287 {offsets = [0, 64], sizes = [16, 16], strides = [1, 1]} : vector<16x128xf32> to vector<16x16xf32>
    %308 = arith.mulf %307, %290 : vector<16x16xf32>
    %309 = math.log %308 : vector<16x16xf32>
    %310 = arith.mulf %308, %309 : vector<16x16xf32>
    %311 = arith.subf %306, %310 : vector<16x16xf32>
    %312 = vector.extract_strided_slice %287 {offsets = [0, 80], sizes = [16, 16], strides = [1, 1]} : vector<16x128xf32> to vector<16x16xf32>
    %313 = arith.mulf %312, %290 : vector<16x16xf32>
    %314 = math.log %313 : vector<16x16xf32>
    %315 = arith.mulf %313, %314 : vector<16x16xf32>
    %316 = arith.subf %311, %315 : vector<16x16xf32>
    %317 = vector.extract_strided_slice %287 {offsets = [0, 96], sizes = [16, 16], strides = [1, 1]} : vector<16x128xf32> to vector<16x16xf32>
    %318 = arith.mulf %317, %290 : vector<16x16xf32>
    %319 = math.log %318 : vector<16x16xf32>
    %320 = arith.mulf %318, %319 : vector<16x16xf32>
    %321 = arith.subf %316, %320 : vector<16x16xf32>
    %322 = vector.extract_strided_slice %287 {offsets = [0, 112], sizes = [16, 16], strides = [1, 1]} : vector<16x128xf32> to vector<16x16xf32>
    %323 = arith.mulf %322, %290 : vector<16x16xf32>
    %324 = math.log %323 : vector<16x16xf32>
    %325 = arith.mulf %323, %324 : vector<16x16xf32>
    %326 = arith.subf %321, %325 : vector<16x16xf32>
    %327 = vector.extract_strided_slice %236 {offsets = [32, 0], sizes = [16, 256], strides = [1, 1]} : vector<64x256xbf16> to vector<16x256xbf16>
    %c2_51 = arith.constant 2 : index
    %c0_52 = arith.constant 0 : index
    %c0_53 = arith.constant 0 : index
    %328 = vector.load %arg5[%c2_51, %c0_52, %c0_53] : memref<4x256x128xbf16, #tpu.memory_space<vmem>>, vector<1x256x128xbf16>
    %329 = vector.shape_cast %328 : vector<1x256x128xbf16> to vector<256x128xbf16>
    %cst_54 = arith.constant dense<0.000000e+00> : vector<16x128xf32>
    %330 = tpu.matmul %327, %329, %cst_54 {dimension_numbers = #tpu.dot_dimension_numbers<[1], [0], [0], [1], [0, 0, 1, 1], [], []>} : vector<16x256xbf16>, vector<256x128xbf16>, vector<16x128xf32> -> vector<16x128xf32>
    %cst_55 = arith.constant 1.000000e+00 : f32
    %331 = vector.broadcast %cst_55 : f32 to vector<16x128xf32>
    %332 = arith.maximumf %330, %331 : vector<16x128xf32>
    %333 = vector.extract_strided_slice %332 {offsets = [0, 0], sizes = [16, 16], strides = [1, 1]} : vector<16x128xf32> to vector<16x16xf32>
    %cst_56 = arith.constant 1.000000e+00 : f32
    %334 = vector.broadcast %cst_56 : f32 to vector<16x16xf32>
    %335 = arith.divf %334, %333 : vector<16x16xf32>
    %cst_57 = arith.constant 0.000000e+00 : f32
    %336 = vector.broadcast %cst_57 : f32 to vector<16x16xf32>
    %337 = vector.extract_strided_slice %332 {offsets = [0, 16], sizes = [16, 16], strides = [1, 1]} : vector<16x128xf32> to vector<16x16xf32>
    %338 = arith.mulf %337, %335 : vector<16x16xf32>
    %339 = math.log %338 : vector<16x16xf32>
    %340 = arith.mulf %338, %339 : vector<16x16xf32>
    %341 = arith.subf %336, %340 : vector<16x16xf32>
    %342 = vector.extract_strided_slice %332 {offsets = [0, 32], sizes = [16, 16], strides = [1, 1]} : vector<16x128xf32> to vector<16x16xf32>
    %343 = arith.mulf %342, %335 : vector<16x16xf32>
    %344 = math.log %343 : vector<16x16xf32>
    %345 = arith.mulf %343, %344 : vector<16x16xf32>
    %346 = arith.subf %341, %345 : vector<16x16xf32>
    %347 = vector.extract_strided_slice %332 {offsets = [0, 48], sizes = [16, 16], strides = [1, 1]} : vector<16x128xf32> to vector<16x16xf32>
    %348 = arith.mulf %347, %335 : vector<16x16xf32>
    %349 = math.log %348 : vector<16x16xf32>
    %350 = arith.mulf %348, %349 : vector<16x16xf32>
    %351 = arith.subf %346, %350 : vector<16x16xf32>
    %352 = vector.extract_strided_slice %332 {offsets = [0, 64], sizes = [16, 16], strides = [1, 1]} : vector<16x128xf32> to vector<16x16xf32>
    %353 = arith.mulf %352, %335 : vector<16x16xf32>
    %354 = math.log %353 : vector<16x16xf32>
    %355 = arith.mulf %353, %354 : vector<16x16xf32>
    %356 = arith.subf %351, %355 : vector<16x16xf32>
    %357 = vector.extract_strided_slice %332 {offsets = [0, 80], sizes = [16, 16], strides = [1, 1]} : vector<16x128xf32> to vector<16x16xf32>
    %358 = arith.mulf %357, %335 : vector<16x16xf32>
    %359 = math.log %358 : vector<16x16xf32>
    %360 = arith.mulf %358, %359 : vector<16x16xf32>
    %361 = arith.subf %356, %360 : vector<16x16xf32>
    %362 = vector.extract_strided_slice %332 {offsets = [0, 96], sizes = [16, 16], strides = [1, 1]} : vector<16x128xf32> to vector<16x16xf32>
    %363 = arith.mulf %362, %335 : vector<16x16xf32>
    %364 = math.log %363 : vector<16x16xf32>
    %365 = arith.mulf %363, %364 : vector<16x16xf32>
    %366 = arith.subf %361, %365 : vector<16x16xf32>
    %367 = vector.extract_strided_slice %332 {offsets = [0, 112], sizes = [16, 16], strides = [1, 1]} : vector<16x128xf32> to vector<16x16xf32>
    %368 = arith.mulf %367, %335 : vector<16x16xf32>
    %369 = math.log %368 : vector<16x16xf32>
    %370 = arith.mulf %368, %369 : vector<16x16xf32>
    %371 = arith.subf %366, %370 : vector<16x16xf32>
    %372 = vector.extract_strided_slice %236 {offsets = [48, 0], sizes = [16, 256], strides = [1, 1]} : vector<64x256xbf16> to vector<16x256xbf16>
    %c3_58 = arith.constant 3 : index
    %c0_59 = arith.constant 0 : index
    %c0_60 = arith.constant 0 : index
    %373 = vector.load %arg5[%c3_58, %c0_59, %c0_60] : memref<4x256x128xbf16, #tpu.memory_space<vmem>>, vector<1x256x128xbf16>
    %374 = vector.shape_cast %373 : vector<1x256x128xbf16> to vector<256x128xbf16>
    %cst_61 = arith.constant dense<0.000000e+00> : vector<16x128xf32>
    %375 = tpu.matmul %372, %374, %cst_61 {dimension_numbers = #tpu.dot_dimension_numbers<[1], [0], [0], [1], [0, 0, 1, 1], [], []>} : vector<16x256xbf16>, vector<256x128xbf16>, vector<16x128xf32> -> vector<16x128xf32>
    %cst_62 = arith.constant 1.000000e+00 : f32
    %376 = vector.broadcast %cst_62 : f32 to vector<16x128xf32>
    %377 = arith.maximumf %375, %376 : vector<16x128xf32>
    %378 = vector.extract_strided_slice %377 {offsets = [0, 0], sizes = [16, 16], strides = [1, 1]} : vector<16x128xf32> to vector<16x16xf32>
    %cst_63 = arith.constant 1.000000e+00 : f32
    %379 = vector.broadcast %cst_63 : f32 to vector<16x16xf32>
    %380 = arith.divf %379, %378 : vector<16x16xf32>
    %cst_64 = arith.constant 0.000000e+00 : f32
    %381 = vector.broadcast %cst_64 : f32 to vector<16x16xf32>
    %382 = vector.extract_strided_slice %377 {offsets = [0, 16], sizes = [16, 16], strides = [1, 1]} : vector<16x128xf32> to vector<16x16xf32>
    %383 = arith.mulf %382, %380 : vector<16x16xf32>
    %384 = math.log %383 : vector<16x16xf32>
    %385 = arith.mulf %383, %384 : vector<16x16xf32>
    %386 = arith.subf %381, %385 : vector<16x16xf32>
    %387 = vector.extract_strided_slice %377 {offsets = [0, 32], sizes = [16, 16], strides = [1, 1]} : vector<16x128xf32> to vector<16x16xf32>
    %388 = arith.mulf %387, %380 : vector<16x16xf32>
    %389 = math.log %388 : vector<16x16xf32>
    %390 = arith.mulf %388, %389 : vector<16x16xf32>
    %391 = arith.subf %386, %390 : vector<16x16xf32>
    %392 = vector.extract_strided_slice %377 {offsets = [0, 48], sizes = [16, 16], strides = [1, 1]} : vector<16x128xf32> to vector<16x16xf32>
    %393 = arith.mulf %392, %380 : vector<16x16xf32>
    %394 = math.log %393 : vector<16x16xf32>
    %395 = arith.mulf %393, %394 : vector<16x16xf32>
    %396 = arith.subf %391, %395 : vector<16x16xf32>
    %397 = vector.extract_strided_slice %377 {offsets = [0, 64], sizes = [16, 16], strides = [1, 1]} : vector<16x128xf32> to vector<16x16xf32>
    %398 = arith.mulf %397, %380 : vector<16x16xf32>
    %399 = math.log %398 : vector<16x16xf32>
    %400 = arith.mulf %398, %399 : vector<16x16xf32>
    %401 = arith.subf %396, %400 : vector<16x16xf32>
    %402 = vector.extract_strided_slice %377 {offsets = [0, 80], sizes = [16, 16], strides = [1, 1]} : vector<16x128xf32> to vector<16x16xf32>
    %403 = arith.mulf %402, %380 : vector<16x16xf32>
    %404 = math.log %403 : vector<16x16xf32>
    %405 = arith.mulf %403, %404 : vector<16x16xf32>
    %406 = arith.subf %401, %405 : vector<16x16xf32>
    %407 = vector.extract_strided_slice %377 {offsets = [0, 96], sizes = [16, 16], strides = [1, 1]} : vector<16x128xf32> to vector<16x16xf32>
    %408 = arith.mulf %407, %380 : vector<16x16xf32>
    %409 = math.log %408 : vector<16x16xf32>
    %410 = arith.mulf %408, %409 : vector<16x16xf32>
    %411 = arith.subf %406, %410 : vector<16x16xf32>
    %412 = vector.extract_strided_slice %377 {offsets = [0, 112], sizes = [16, 16], strides = [1, 1]} : vector<16x128xf32> to vector<16x16xf32>
    %413 = arith.mulf %412, %380 : vector<16x16xf32>
    %414 = math.log %413 : vector<16x16xf32>
    %415 = arith.mulf %413, %414 : vector<16x16xf32>
    %416 = arith.subf %411, %415 : vector<16x16xf32>
    %417 = tpu.concatenate %281, %326, %371, %416 in 1 : vector<16x16xf32>, vector<16x16xf32>, vector<16x16xf32>, vector<16x16xf32> -> vector<16x64xf32>
    %c0_65 = arith.constant 0 : index
    %c0_66 = arith.constant 0 : index
    %c0_67 = arith.constant 0 : index
    %418 = vector.load %arg7[%c0_65, %c0_66, %c0_67] : memref<1x16x64xf32, #tpu.memory_space<vmem>>, vector<1x16x64xf32>
    %419 = vector.shape_cast %418 : vector<1x16x64xf32> to vector<16x64xf32>
    %420 = vector.shape_cast %417 : vector<16x64xf32> to vector<1x16x64xf32>
    tpu.vector_store %arg7[%c0_65, %c0_66, %c0_67], %420 {strides = array<i32>} : memref<1x16x64xf32, #tpu.memory_space<vmem>>, vector<1x16x64xf32>,
    return
  }
  func.func @transform_0(%arg0: i32) -> (i32, i32, i32, i32) {
    %c0_i32 = arith.constant 0 : i32
    %c0_i32_0 = arith.constant 0 : i32
    %c0_i32_1 = arith.constant 0 : i32
    %c0_i32_2 = arith.constant 0 : i32
    return %arg0, %c0_i32, %c0_i32_0, %c0_i32_1 : i32, i32, i32, i32
  }
  func.func @transform_1(%arg0: i32) -> (i32, i32) {
    %c0_i32 = arith.constant 0 : i32
    %c0_i32_0 = arith.constant 0 : i32
    %c0_i32_1 = arith.constant 0 : i32
    return %c0_i32, %c0_i32_0 : i32, i32
  }
  func.func @transform_2(%arg0: i32) -> (i32, i32, i32) {
    %c0_i32 = arith.constant 0 : i32
    %c0_i32_0 = arith.constant 0 : i32
    %c0_i32_1 = arith.constant 0 : i32
    %c0_i32_2 = arith.constant 0 : i32
    return %c0_i32, %c0_i32_0, %c0_i32_1 : i32, i32, i32
  }
  func.func @transform_3(%arg0: i32) -> (i32, i32) {
    %c0_i32 = arith.constant 0 : i32
    %c0_i32_0 = arith.constant 0 : i32
    %c0_i32_1 = arith.constant 0 : i32
    return %c0_i32, %c0_i32_0 : i32, i32
  }
  func.func @transform_4(%arg0: i32) -> (i32, i32, i32) {
    %c0_i32 = arith.constant 0 : i32
    %c0_i32_0 = arith.constant 0 : i32
    %c0_i32_1 = arith.constant 0 : i32
    %c0_i32_2 = arith.constant 0 : i32
    return %c0_i32, %c0_i32_0, %c0_i32_1 : i32, i32, i32
  }
  func.func @transform_5(%arg0: i32) -> (i32, i32, i32) {
    %c0_i32 = arith.constant 0 : i32
    %c0_i32_0 = arith.constant 0 : i32
    %c0_i32_1 = arith.constant 0 : i32
    return %arg0, %c0_i32, %c0_i32_0 : i32, i32, i32
  }
  func.func @transform_6(%arg0: i32) -> (i32, i32, i32) {
    %c0_i32 = arith.constant 0 : i32
    %c0_i32_0 = arith.constant 0 : i32
    %c0_i32_1 = arith.constant 0 : i32
    return %arg0, %c0_i32, %c0_i32_0 : i32, i32, i32
  }
}

</mosaic_0001>

<llo_original>
// kernel: tpu_custom_call.1
$region0: #{tpu_custom_call.1}
  #allocation0 [shape = 'u32[]', space=smem, size = 0x4, offset = 0x4, fixed_abs, tag = 'smem constant byte address 0x4 - core index']
  #allocation1 [shape = 'u32[144,128]{1,0:T(1,128)}', space=vmem, size = 0x12000, scoped, tag = 'internal scratch']
  %s0 = inlined_call_operand.vmem [shape: f32[2,1,32,32], index: 0, kind: input, shape index: {}]
  %s1 = inlined_call_operand.vmem [shape: bf16[128,32], index: 1, kind: input, shape index: {}]
  %s2 = inlined_call_operand.hbm [shape: bf16[4,256,256], index: 2, kind: input, shape index: {}]
  %s3 = inlined_call_operand.vmem [shape: bf16[64,32], index: 3, kind: input, shape index: {}]
  %s4 = inlined_call_operand.hbm [shape: bf16[4,256,128], index: 4, kind: input, shape index: {}]
  %s5 = inlined_call_operand.hbm [shape: f32[2,32,128], index: 5, kind: output, shape index: {0}]
  %s6 = inlined_call_operand.hbm [shape: f32[2,16,64], index: 6, kind: output, shape index: {1}]
  %7 = xla_tuple %s5, %s6
  %s8 = sld [smem:[#allocation0]]
  $region69: #{tpu_custom_call.1} parent=0
    _
  %s10 = ssub.s32 1, %s8
  %s11 = scalar_select 0, %s10, %s8
  $region1: #{tpu_custom_call.1} parent=0
    #allocation2 [shape = 'u8[524288]{0}', space=vmem, size = 0x80000, scoped, tag = 'input window, operand 2, single buffered']
    #allocation3 [shape = 's32[2]{0}', space=sflag, size = 0x8, scoped, tag = 'scoped memory for tpu_custom_call.1']
    #allocation4 [shape = 's32[2]{0}', space=sflag, size = 0x8, scoped, tag = 'scoped memory for tpu_custom_call.1']
    #allocation5 [shape = 'u8[262144]{0}', space=vmem, size = 0x40000, scoped, tag = 'input window, operand 4, single buffered']
    #allocation6 [shape = 's32[1]{0}', space=sflag, size = 0x4, scoped, tag = 'scoped memory for tpu_custom_call.1']
    #allocation7 [shape = 'u8[32768]{0}', space=vmem, size = 0x8000, scoped, tag = 'output window, operand 0']
    #allocation8 [shape = 'u8[16384]{0}', space=vmem, size = 0x4000, scoped, tag = 'output window, operand 1']
    #allocation9 [shape = 's32[2]{0}', space=sflag, size = 0x8, scoped, tag = 'scoped memory for tpu_custom_call.1']
    %12 = vsyncpa [#allocation3], 0
    %13 = vsyncpa [#allocation6], 0
    %14 = vsyncpa [#allocation4], 0
    %s15 = scalar_lea.sflag [#allocation4], 1
    %16 = vsyncpa %s15, 0
    %17 = vsyncpa [#allocation9], 0
    %s18 = scalar_lea.sflag [#allocation9], 1
    %19 = vsyncpa %s18, 0
    loop: start=0, step=1, limit=4
    $region2: #{tpu_custom_call.1} parent=1 // loop_pre_header
      _
    $region3: #{tpu_custom_call.1} parent=1 // loop_header
      %s21 = sphi 0, %s25
      %p22 = scmp.ge.s32.totalorder %s21, 4
      %s31 = sphi 0, %s33
      %s34 = sphi 0, %s31
      %s35 = sphi 0, %s34
      %s51 = sphi 0, %s35
      %s55 = sphi 0, %s55
      %s57 = sphi 0, %s55
      %s58 = sphi 0, %s57
      %s72 = sphi 0, %s58
      %s76 = sphi 0, %s76
      %s78 = sphi 0, %s76
      %s79 = sphi 0, %s78
      %s93 = sphi 0, %s79
      %s97 = sphi 0, %s97
      %s99 = sphi 0, %s97
      %s100 = sphi 0, %s99
      %s114 = sphi 0, %s100
      %s118 = sphi 0, %s118
      %s120 = sphi 0, %s118
      %s121 = sphi 0, %s120
      %s135 = sphi 0, %s121
      %s141 = sphi 0, %s143
      %s144 = sphi 0, %s141
      %s145 = sphi 0, %s144
      %s161 = sphi 0, %s145
      %s167 = sphi 0, %s169
      %s170 = sphi 0, %s167
      %s171 = sphi 0, %s170
      %s187 = sphi 0, %s171
    $region4: #{tpu_custom_call.1} parent=1 // loop_header_branch
      %24 = sbr.rel (%p22) target = $region8
    $region5: #{tpu_custom_call.1} parent=1 // loop_body
      %s26 = ssub.s32 %s21, 1
      %s27 = ssub.s32 %s21, 2
      %s28 = sadd.s32 %s21, 1
      %s29 = ssub.s32 %s21, %s28
      %p30 = scmp.eq.s32.totalorder %s29, 0
      %s32 = sadd.s32 %s31, 1
      %s33 = scalar_select %p30, %s31, %s32
      %p36 = pneg %p30
      %p37 = scmp.eq.s32.totalorder %s21, 1
      %p38 = por %p36, %p37
      %p39 = scmp.ne.s32.totalorder %s31, %s34
      %p40 = scmp.eq.s32.totalorder %s21, 0
      %p41 = por %p39, %p40
      %p42 = scmp.ne.s32.totalorder %s31, %s34
      %p43 = scmp.eq.s32.totalorder %s26, 1
      %p44 = por %p42, %p43
      %p45 = scmp.ne.s32.totalorder %s34, %s35
      %p46 = scmp.eq.s32.totalorder %s26, 0
      %p47 = por %p45, %p46
      %p48 = scmp.ne.s32.totalorder %s34, %s35
      %p49 = scmp.eq.s32.totalorder %s27, 1
      %p50 = por %p48, %p49
      %p52 = scmp.ne.s32.totalorder %s35, %s51
      %p53 = scmp.eq.s32.totalorder %s27, 0
      %p54 = por %p52, %p53
      %s56 = sadd.s32 %s55, 1
      %p59 = scmp.eq.s32.totalorder %s21, 1
      %p60 = scmp.ne.s32.totalorder %s55, %s57
      %p61 = scmp.eq.s32.totalorder %s21, 0
      %p62 = por %p60, %p61
      %p63 = scmp.ne.s32.totalorder %s55, %s57
      %p64 = scmp.eq.s32.totalorder %s26, 1
      %p65 = por %p63, %p64
      %p66 = scmp.ne.s32.totalorder %s57, %s58
      %p67 = scmp.eq.s32.totalorder %s26, 0
      %p68 = por %p66, %p67
      %p69 = scmp.ne.s32.totalorder %s57, %s58
      %p70 = scmp.eq.s32.totalorder %s27, 1
      %p71 = por %p69, %p70
      %p73 = scmp.ne.s32.totalorder %s58, %s72
      %p74 = scmp.eq.s32.totalorder %s27, 0
      %p75 = por %p73, %p74
      %s77 = sadd.s32 %s76, 1
      %p80 = scmp.eq.s32.totalorder %s21, 1
      %p81 = scmp.ne.s32.totalorder %s76, %s78
      %p82 = scmp.eq.s32.totalorder %s21, 0
      %p83 = por %p81, %p82
      %p84 = scmp.ne.s32.totalorder %s76, %s78
      %p85 = scmp.eq.s32.totalorder %s26, 1
      %p86 = por %p84, %p85
      %p87 = scmp.ne.s32.totalorder %s78, %s79
      %p88 = scmp.eq.s32.totalorder %s26, 0
      %p89 = por %p87, %p88
      %p90 = scmp.ne.s32.totalorder %s78, %s79
      %p91 = scmp.eq.s32.totalorder %s27, 1
      %p92 = por %p90, %p91
      %p94 = scmp.ne.s32.totalorder %s79, %s93
      %p95 = scmp.eq.s32.totalorder %s27, 0
      %p96 = por %p94, %p95
      %s98 = sadd.s32 %s97, 1
      %p101 = scmp.eq.s32.totalorder %s21, 1
      %p102 = scmp.ne.s32.totalorder %s97, %s99
      %p103 = scmp.eq.s32.totalorder %s21, 0
      %p104 = por %p102, %p103
      %p105 = scmp.ne.s32.totalorder %s97, %s99
      %p106 = scmp.eq.s32.totalorder %s26, 1
      %p107 = por %p105, %p106
      %p108 = scmp.ne.s32.totalorder %s99, %s100
      %p109 = scmp.eq.s32.totalorder %s26, 0
      %p110 = por %p108, %p109
      %p111 = scmp.ne.s32.totalorder %s99, %s100
      %p112 = scmp.eq.s32.totalorder %s27, 1
      %p113 = por %p111, %p112
      %p115 = scmp.ne.s32.totalorder %s100, %s114
      %p116 = scmp.eq.s32.totalorder %s27, 0
      %p117 = por %p115, %p116
      %s119 = sadd.s32 %s118, 1
      %p122 = scmp.eq.s32.totalorder %s21, 1
      %p123 = scmp.ne.s32.totalorder %s118, %s120
      %p124 = scmp.eq.s32.totalorder %s21, 0
      %p125 = por %p123, %p124
      %p126 = scmp.ne.s32.totalorder %s118, %s120
      %p127 = scmp.eq.s32.totalorder %s26, 1
      %p128 = por %p126, %p127
      %p129 = scmp.ne.s32.totalorder %s120, %s121
      %p130 = scmp.eq.s32.totalorder %s26, 0
      %p131 = por %p129, %p130
      %p132 = scmp.ne.s32.totalorder %s120, %s121
      %p133 = scmp.eq.s32.totalorder %s27, 1
      %p134 = por %p132, %p133
      %p136 = scmp.ne.s32.totalorder %s121, %s135
      %p137 = scmp.eq.s32.totalorder %s27, 0
      %p138 = por %p136, %p137
      %s139 = ssub.s32 %s21, %s28
      %p140 = scmp.eq.s32.totalorder %s139, 0
      %s142 = sadd.s32 %s141, 1
      %s143 = scalar_select %p140, %s141, %s142
      %p146 = pneg %p140
      %p147 = scmp.eq.s32.totalorder %s21, 1
      %p148 = por %p146, %p147
      %p149 = scmp.ne.s32.totalorder %s141, %s144
      %p150 = scmp.eq.s32.totalorder %s21, 0
      %p151 = por %p149, %p150
      %p152 = scmp.ne.s32.totalorder %s141, %s144
      %p153 = scmp.eq.s32.totalorder %s26, 1
      %p154 = por %p152, %p153
      %p155 = scmp.ne.s32.totalorder %s144, %s145
      %p156 = scmp.eq.s32.totalorder %s26, 0
      %p157 = por %p155, %p156
      %p158 = scmp.ne.s32.totalorder %s144, %s145
      %p159 = scmp.eq.s32.totalorder %s27, 1
      %p160 = por %p158, %p159
      %p162 = scmp.ne.s32.totalorder %s145, %s161
      %p163 = scmp.eq.s32.totalorder %s27, 0
      %p164 = por %p162, %p163
      %s165 = ssub.s32 %s21, %s28
      %p166 = scmp.eq.s32.totalorder %s165, 0
      %s168 = sadd.s32 %s167, 1
      %s169 = scalar_select %p166, %s167, %s168
      %p172 = pneg %p166
      %p173 = scmp.eq.s32.totalorder %s21, 1
      %p174 = por %p172, %p173
      %p175 = scmp.ne.s32.totalorder %s167, %s170
      %p176 = scmp.eq.s32.totalorder %s21, 0
      %p177 = por %p175, %p176
      %p178 = scmp.ne.s32.totalorder %s167, %s170
      %p179 = scmp.eq.s32.totalorder %s26, 1
      %p180 = por %p178, %p179
      %p181 = scmp.ne.s32.totalorder %s170, %s171
      %p182 = scmp.eq.s32.totalorder %s26, 0
      %p183 = por %p181, %p182
      %p184 = scmp.ne.s32.totalorder %s170, %s171
      %p185 = scmp.eq.s32.totalorder %s27, 1
      %p186 = por %p184, %p185
      %p188 = scmp.ne.s32.totalorder %s171, %s187
      %p189 = scmp.eq.s32.totalorder %s27, 0
      %p190 = por %p188, %p189
      %p191 = scmp.le.s32.totalorder 1, %s21
      %p192 = scmp.lt.s32.totalorder %s21, 3
      %p193 = pnand %p191, %p192
      %p194 = pneg %p193
      // Predicated region
      $region9: #{tpu_custom_call.1} parent=5 // pred_check
        _
      $region10: #{tpu_custom_call.1} parent=5 // pred_check_branch
        %196 = sbr.rel (%p193) target = $region12
      $region11: #{tpu_custom_call.1} parent=5 // pred_region
        %s197 = ssub.s32 %s21, 1
        // Predicated region
        $region13: #{tpu_custom_call.1} parent=11 // pred_check
          %p198 = pneg %p68
        $region14: #{tpu_custom_call.1} parent=11 // pred_check_branch
          %200 = sbr.rel (%p198) target = $region16
        $region15: #{tpu_custom_call.1} parent=11 // pred_region
          _
        $region16: #{tpu_custom_call.1} parent=11 // pred_fallthru
          _
        // Predicated region
        $region17: #{tpu_custom_call.1} parent=11 // pred_check
          %p201 = pneg %p89
        $region18: #{tpu_custom_call.1} parent=11 // pred_check_branch
          %203 = sbr.rel (%p201) target = $region20
        $region19: #{tpu_custom_call.1} parent=11 // pred_region
          %s205 = ssub.s32 16384, 16384
          %206 = vsyncadd [#allocation3], %s205
          %s207 = sshll.u32 [#allocation2], 4
          %s208 = int_to_ptr.vmem [resolvable:$true] %s207
          %213 = dma.hbm_to_vmem [thread:$0]  %s2, 16384, %s208, [#allocation3], 128, 128, 8
        $region20: #{tpu_custom_call.1} parent=11 // pred_fallthru
          _
        // Predicated region
        $region21: #{tpu_custom_call.1} parent=11 // pred_check
          %p214 = pneg %p110
        $region22: #{tpu_custom_call.1} parent=11 // pred_check_branch
          %216 = sbr.rel (%p214) target = $region24
        $region23: #{tpu_custom_call.1} parent=11 // pred_region
          _
        $region24: #{tpu_custom_call.1} parent=11 // pred_fallthru
          _
        // Predicated region
        $region25: #{tpu_custom_call.1} parent=11 // pred_check
          %p217 = pneg %p131
        $region26: #{tpu_custom_call.1} parent=11 // pred_check_branch
          %219 = sbr.rel (%p217) target = $region28
        $region27: #{tpu_custom_call.1} parent=11 // pred_region
          %s221 = ssub.s32 8192, 8192
          %222 = vsyncadd [#allocation6], %s221
          %s223 = sshll.u32 [#allocation5], 4
          %s224 = int_to_ptr.vmem [resolvable:$true] %s223
          %229 = dma.hbm_to_vmem [thread:$0]  %s4, 8192, %s224, [#allocation6], 64, 64, 4
        $region28: #{tpu_custom_call.1} parent=11 // pred_fallthru
          _
      $region12: #{tpu_custom_call.1} parent=5 // pred_fallthru
        _
      %p230 = scmp.lt.s32.totalorder %s21, 2
      // Predicated region
      $region29: #{tpu_custom_call.1} parent=5 // pred_check
        %p231 = pneg %p230
      $region30: #{tpu_custom_call.1} parent=5 // pred_check_branch
        %233 = sbr.rel (%p231) target = $region32
      $region31: #{tpu_custom_call.1} parent=5 // pred_region
        // Predicated region
        $region33: #{tpu_custom_call.1} parent=31 // pred_check
          %p234 = pneg %p41
        $region34: #{tpu_custom_call.1} parent=31 // pred_check_branch
          %236 = sbr.rel (%p234) target = $region36
        $region35: #{tpu_custom_call.1} parent=31 // pred_region
          %p237 = scmp.lt.s32.totalorder %s21, 1
          %s238 = scalar_select %p237, %s21, 1
          %s239 = smul.addr %s238, 4
          %s240 = smul.addr %s239, 8
          %s241 = scalar_lea.vmem %s0, %s240
        $region36: #{tpu_custom_call.1} parent=31 // pred_fallthru
          _
      $region32: #{tpu_custom_call.1} parent=5 // pred_fallthru
        _
      %p242 = scmp.le.s32.totalorder 1, %s21
      %p243 = scmp.lt.s32.totalorder %s21, 3
      %p244 = pnand %p242, %p243
      %p245 = pneg %p244
      // Predicated region
      $region37: #{tpu_custom_call.1} parent=5 // pred_check
        _
      $region38: #{tpu_custom_call.1} parent=5 // pred_check_branch
        %247 = sbr.rel (%p244) target = $region40
      $region39: #{tpu_custom_call.1} parent=5 // pred_region
        %s248 = ssub.s32 %s21, 1
        // Predicated region
        $region41: #{tpu_custom_call.1} parent=39 // pred_check
          %p249 = pneg %p89
        $region42: #{tpu_custom_call.1} parent=39 // pred_check_branch
          %251 = sbr.rel (%p249) target = $region44
        $region43: #{tpu_custom_call.1} parent=39 // pred_region
          %252 = dma.done [#allocation3], 16384
        $region44: #{tpu_custom_call.1} parent=39 // pred_fallthru
          _
        // Predicated region
        $region45: #{tpu_custom_call.1} parent=39 // pred_check
          %p253 = pneg %p131
        $region46: #{tpu_custom_call.1} parent=39 // pred_check_branch
          %255 = sbr.rel (%p253) target = $region48
        $region47: #{tpu_custom_call.1} parent=39 // pred_region
          %256 = dma.done [#allocation6], 8192
        $region48: #{tpu_custom_call.1} parent=39 // pred_fallthru
          _
        %p257 = scmp.lt.s32.totalorder %s26, 1
        %s258 = scalar_select %p257, %s26, 1
        %s259 = smul.addr %s258, 4
        %s260 = smul.addr %s259, 8
        %s261 = scalar_lea.vmem %s0, %s260
        %p262 = pneg %p47
        %p263 = pneg %p44
        %p264 = pneg %p68
        %p265 = pneg %p65
        %p266 = pneg %p89
        %p267 = pneg %p86
        %p268 = pneg %p110
        %p269 = pneg %p107
        %p270 = pneg %p131
        %p271 = pneg %p128
        %p272 = pneg %p157
        %p273 = pneg %p154
        %s274 = sand.u32 %s144, 1
        %s275 = scalar_lea.sflag [#allocation4], %s274
        %s276 = sand.u32 %s144, 1
        %s277 = smul.addr %s276, 32
        %s278 = scalar_lea.vmem [#allocation7], %s277
        %p279 = pneg %p183
        %p280 = pneg %p180
        %s281 = sand.u32 %s170, 1
        %s282 = scalar_lea.sflag [#allocation9], %s281
        %s283 = sand.u32 %s170, 1
        %s284 = smul.addr %s283, 16
        %s285 = scalar_lea.vmem [#allocation8], %s284
        %p286 = scmp.lt.s32.totalorder %s26, 1
        %s287 = scalar_select %p286, %s26, 1
        %s288 = smul.addr %s287, 4
        %s289 = smul.addr %s288, 8
        %s290 = scalar_lea.vmem %s0, %s289
        %v292 = vld [vmem:[%s290] sm:$0xff]
        %v293 = vld [vmem:[%s290 + $0x8] sm:$0xff]
        %v294 = vld [vmem:[%s290 + $0x10] sm:$0xff]
        %v295 = vld [vmem:[%s290 + $0x18] sm:$0xff]
        %v296 = vmul.f32 %v292, 8.0
        %v297 = vmul.f32 %v293, 8.0
        %v298 = vmul.f32 %v294, 8.0
        %v299 = vmul.f32 %v295, 8.0
        %v300 = vfloor.f32 %v296
        %v301 = vfloor.f32 %v297
        %v302 = vfloor.f32 %v298
        %v303 = vfloor.f32 %v299
        %v304 = vcvt.f32.s32.to.zero.pseudo %v300
        %v305 = vcvt.f32.s32.to.zero.pseudo %v301
        %v306 = vcvt.f32.s32.to.zero.pseudo %v302
        %v307 = vcvt.f32.s32.to.zero.pseudo %v303
        %vm308 = vcmp.ne.s32.totalorder %v304, 0
        %vm309 = vcmp.ne.s32.totalorder %v305, 0
        %vm310 = vcmp.ne.s32.totalorder %v306, 0
        %vm311 = vcmp.ne.s32.totalorder %v307, 0
        %vm312 = vcmp.eq.s32.totalorder %v304, 1
        %vm313 = vcmp.eq.s32.totalorder %v305, 1
        %vm314 = vcmp.eq.s32.totalorder %v306, 1
        %vm315 = vcmp.eq.s32.totalorder %v307, 1
        %vm316 = vcmp.eq.s32.totalorder %v304, 2
        %vm317 = vcmp.eq.s32.totalorder %v305, 2
        %vm318 = vcmp.eq.s32.totalorder %v306, 2
        %vm319 = vcmp.eq.s32.totalorder %v307, 2
        %vm320 = vcmp.eq.s32.totalorder %v304, 3
        %vm321 = vcmp.eq.s32.totalorder %v305, 3
        %vm322 = vcmp.eq.s32.totalorder %v306, 3
        %vm323 = vcmp.eq.s32.totalorder %v307, 3
        %vm324 = vcmp.eq.s32.totalorder %v304, 4
        %vm325 = vcmp.eq.s32.totalorder %v305, 4
        %vm326 = vcmp.eq.s32.totalorder %v306, 4
        %vm327 = vcmp.eq.s32.totalorder %v307, 4
        %vm328 = vcmp.eq.s32.totalorder %v304, 5
        %vm329 = vcmp.eq.s32.totalorder %v305, 5
        %vm330 = vcmp.eq.s32.totalorder %v306, 5
        %vm331 = vcmp.eq.s32.totalorder %v307, 5
        %vm332 = vcmp.eq.s32.totalorder %v304, 6
        %vm333 = vcmp.eq.s32.totalorder %v305, 6
        %vm334 = vcmp.eq.s32.totalorder %v306, 6
        %vm335 = vcmp.eq.s32.totalorder %v307, 6
        %vm336 = vcmp.eq.s32.totalorder %v304, 7
        %vm337 = vcmp.eq.s32.totalorder %v305, 7
        %vm338 = vcmp.eq.s32.totalorder %v306, 7
        %vm339 = vcmp.eq.s32.totalorder %v307, 7
        %v340 = vsel %vm308, 1, 0
        %v341 = vsel %vm309, 1, 0
        %v342 = vsel %vm310, 1, 0
        %v343 = vsel %vm311, 1, 0
        %v344 = vcvt.s32.f32 %v340
        %v345 = vcvt.s32.f32 %v341
        %v346 = vcvt.s32.f32 %v342
        %v347 = vcvt.s32.f32 %v343
        %v348 = vpack.c.bf16 %v345, %v344
        %v349 = vpack.c.bf16 %v347, %v346
        %v350 = vsel %vm312, 1, 0
        %v351 = vsel %vm313, 1, 0
        %v352 = vsel %vm314, 1, 0
        %v353 = vsel %vm315, 1, 0
        %v354 = vcvt.s32.f32 %v350
        %v355 = vcvt.s32.f32 %v351
        %v356 = vcvt.s32.f32 %v352
        %v357 = vcvt.s32.f32 %v353
        %v358 = vpack.c.bf16 %v355, %v354
        %v359 = vpack.c.bf16 %v357, %v356
        %v360 = vsel %vm316, 1, 0
        %v361 = vsel %vm317, 1, 0
        %v362 = vsel %vm318, 1, 0
        %v363 = vsel %vm319, 1, 0
        %v364 = vcvt.s32.f32 %v360
        %v365 = vcvt.s32.f32 %v361
        %v366 = vcvt.s32.f32 %v362
        %v367 = vcvt.s32.f32 %v363
        %v368 = vpack.c.bf16 %v365, %v364
        %v369 = vpack.c.bf16 %v367, %v366
        %v370 = vsel %vm320, 1, 0
        %v371 = vsel %vm321, 1, 0
        %v372 = vsel %vm322, 1, 0
        %v373 = vsel %vm323, 1, 0
        %v374 = vcvt.s32.f32 %v370
        %v375 = vcvt.s32.f32 %v371
        %v376 = vcvt.s32.f32 %v372
        %v377 = vcvt.s32.f32 %v373
        %v378 = vpack.c.bf16 %v375, %v374
        %v379 = vpack.c.bf16 %v377, %v376
        %v380 = vsel %vm324, 1, 0
        %v381 = vsel %vm325, 1, 0
        %v382 = vsel %vm326, 1, 0
        %v383 = vsel %vm327, 1, 0
        %v384 = vcvt.s32.f32 %v380
        %v385 = vcvt.s32.f32 %v381
        %v386 = vcvt.s32.f32 %v382
        %v387 = vcvt.s32.f32 %v383
        %v388 = vpack.c.bf16 %v385, %v384
        %v389 = vpack.c.bf16 %v387, %v386
        %v390 = vsel %vm328, 1, 0
        %v391 = vsel %vm329, 1, 0
        %v392 = vsel %vm330, 1, 0
        %v393 = vsel %vm331, 1, 0
        %v394 = vcvt.s32.f32 %v390
        %v395 = vcvt.s32.f32 %v391
        %v396 = vcvt.s32.f32 %v392
        %v397 = vcvt.s32.f32 %v393
        %v398 = vpack.c.bf16 %v395, %v394
        %v399 = vpack.c.bf16 %v397, %v396
        %v400 = vsel %vm332, 1, 0
        %v401 = vsel %vm333, 1, 0
        %v402 = vsel %vm334, 1, 0
        %v403 = vsel %vm335, 1, 0
        %v404 = vcvt.s32.f32 %v400
        %v405 = vcvt.s32.f32 %v401
        %v406 = vcvt.s32.f32 %v402
        %v407 = vcvt.s32.f32 %v403
        %v408 = vpack.c.bf16 %v405, %v404
        %v409 = vpack.c.bf16 %v407, %v406
        %v410 = vsel %vm336, 1, 0
        %v411 = vsel %vm337, 1, 0
        %v412 = vsel %vm338, 1, 0
        %v413 = vsel %vm339, 1, 0
        %v414 = vcvt.s32.f32 %v410
        %v415 = vcvt.s32.f32 %v411
        %v416 = vcvt.s32.f32 %v412
        %v417 = vcvt.s32.f32 %v413
        %v418 = vpack.c.bf16 %v415, %v414
        %v419 = vpack.c.bf16 %v417, %v416
        %422 = vrot.lane.b32.xlu0 %v358, 32
        %v423 = vpop.permute.xlu0 %422
        %424 = vrot.lane.b32.xlu0 %v359, 32
        %v425 = vpop.permute.xlu0 %424
        %428 = vrot.lane.b32.xlu0 %v368, 64
        %v429 = vpop.permute.xlu0 %428
        %430 = vrot.lane.b32.xlu0 %v369, 64
        %v431 = vpop.permute.xlu0 %430
        %434 = vrot.lane.b32.xlu0 %v378, 96
        %v435 = vpop.permute.xlu0 %434
        %436 = vrot.lane.b32.xlu0 %v379, 96
        %v437 = vpop.permute.xlu0 %436
        %440 = vrot.lane.b32.xlu0 %v398, 32
        %v441 = vpop.permute.xlu0 %440
        %442 = vrot.lane.b32.xlu0 %v399, 32
        %v443 = vpop.permute.xlu0 %442
        %446 = vrot.lane.b32.xlu0 %v408, 64
        %v447 = vpop.permute.xlu0 %446
        %448 = vrot.lane.b32.xlu0 %v409, 64
        %v449 = vpop.permute.xlu0 %448
        %452 = vrot.lane.b32.xlu0 %v418, 96
        %v453 = vpop.permute.xlu0 %452
        %454 = vrot.lane.b32.xlu0 %v419, 96
        %v455 = vpop.permute.xlu0 %454
        %vm456 = vcmask 261120
        %v459 = vsel %vm456, %v348, %v423
        %v462 = vsel %vm456, %v349, %v425
        %vm463 = vcmask 523264
        %v465 = vsel %vm463, %v459, %v429
        %v467 = vsel %vm463, %v462, %v431
        %vm468 = vcmask 785408
        %v470 = vsel %vm468, %v465, %v435
        %v473 = vsel %vm468, %v467, %v437
        %v477 = vsel %vm456, %v388, %v441
        %v480 = vsel %vm456, %v389, %v443
        %v482 = vsel %vm463, %v477, %v447
        %v484 = vsel %vm463, %v480, %v449
        %v486 = vsel %vm468, %v482, %v453
        %v489 = vsel %vm468, %v484, %v455
        %v491 = vld [vmem:[%s1] sm:$0xf]
        %v492 = vld [vmem:[%s1 + $0x4] sm:$0xf]
        %v493 = vld [vmem:[%s1 + $0x8] sm:$0xf]
        %v494 = vld [vmem:[%s1 + $0xc] sm:$0xf]
        %v495 = vld [vmem:[%s1 + $0x10] sm:$0xf]
        %v496 = vld [vmem:[%s1 + $0x14] sm:$0xf]
        %v497 = vld [vmem:[%s1 + $0x18] sm:$0xf]
        %v498 = vld [vmem:[%s1 + $0x1c] sm:$0xf]
        %v499 = vld [vmem:[%s1 + $0x20] sm:$0xf]
        %v500 = vld [vmem:[%s1 + $0x24] sm:$0xf]
        %v501 = vld [vmem:[%s1 + $0x28] sm:$0xf]
        %v502 = vld [vmem:[%s1 + $0x2c] sm:$0xf]
        %v503 = vld [vmem:[%s1 + $0x30] sm:$0xf]
        %v504 = vld [vmem:[%s1 + $0x34] sm:$0xf]
        %v505 = vld [vmem:[%s1 + $0x38] sm:$0xf]
        %v506 = vld [vmem:[%s1 + $0x3c] sm:$0xf]
        %v523 = vunpack.c.l.b16 %v491
        %v524 = vunpack.c.l.b16 %v492
        %v525 = vunpack.c.l.b16 %v493
        %v526 = vunpack.c.l.b16 %v494
        %v527 = vunpack.c.l.b16 %v495
        %v528 = vunpack.c.l.b16 %v496
        %v529 = vunpack.c.l.b16 %v497
        %v530 = vunpack.c.l.b16 %v498
        %v531 = vunpack.c.l.b16 %v499
        %v532 = vunpack.c.l.b16 %v500
        %v533 = vunpack.c.l.b16 %v501
        %v534 = vunpack.c.l.b16 %v502
        %v535 = vunpack.c.l.b16 %v503
        %v536 = vunpack.c.l.b16 %v504
        %v537 = vunpack.c.l.b16 %v505
        %v538 = vunpack.c.l.b16 %v506
        %v539 = vpack.c.b16 %v524, %v523
        %v540 = vpack.c.b16 %v526, %v525
        %v541 = vpack.c.b16 %v528, %v527
        %v542 = vpack.c.b16 %v530, %v529
        %v543 = vpack.c.b16 %v532, %v531
        %v544 = vpack.c.b16 %v534, %v533
        %v545 = vpack.c.b16 %v536, %v535
        %v546 = vpack.c.b16 %v538, %v537
        %v548 = vsel %vm456, %v539, 0
        %v551 = vsel %vm456, %v540, 0
        %v554 = vsel %vm456, %v541, 0
        %v557 = vsel %vm456, %v542, 0
        %v560 = vsel %vm456, %v543, 0
        %v563 = vsel %vm456, %v544, 0
        %v566 = vsel %vm456, %v545, 0
        %v569 = vsel %vm456, %v546, 0
        %571 = vmatprep.subr.bf16.mxu0 %v486
        %572 = vmatpush1.bf16.msra.mxu0 %v470
        %573 = vmatprep.subr.bf16.mxu0 %v489
        %574 = vmatpush1.bf16.msra.mxu0 %v473
        %575 = vmatprep.subr.bf16.mxu0 0
        %576 = vmatpush1.bf16.msra.mxu0 0
        %577 = vmatprep.subr.bf16.mxu0 0
        %578 = vmatpush1.bf16.msra.mxu0 0
        %579 = vmatprep.subr.bf16.mxu0 0
        %580 = vmatpush1.bf16.msra.mxu0 0
        %581 = vmatprep.subr.bf16.mxu0 0
        %582 = vmatpush1.bf16.msra.mxu0 0
        %583 = vmatprep.subr.bf16.mxu0 0
        %584 = vmatpush1.bf16.msra.mxu0 0
        %585 = vmatprep.subr.bf16.mxu0 0
        %586 = vmatpush1.bf16.msra.mxu0 0
        %587 = vmatprep.subr.bf16.mxu0 0
        %588 = vmatpush1.bf16.msra.mxu0 0
        %589 = vmatprep.subr.bf16.mxu0 0
        %590 = vmatpush1.bf16.msra.mxu0 0
        %591 = vmatprep.subr.bf16.mxu0 0
        %592 = vmatpush1.bf16.msra.mxu0 0
        %593 = vmatprep.subr.bf16.mxu0 0
        %594 = vmatpush1.bf16.msra.mxu0 0
        %595 = vmatprep.subr.bf16.mxu0 0
        %596 = vmatpush1.bf16.msra.mxu0 0
        %597 = vmatprep.subr.bf16.mxu0 0
        %598 = vmatpush1.bf16.msra.mxu0 0
        %599 = vmatprep.subr.bf16.mxu0 0
        %600 = vmatpush1.bf16.msra.mxu0 0
        %601 = vmatprep.subr.bf16.mxu0 0
        %602 = vmatpush1.bf16.msra.mxu0 0
        %603 = vmatprep.mubr.bf16.mxu0 0
        %604 = vmatmul.mubr.bf16.gmra.mrb[0].mxu0 %v548
        %v605 = vpop.f32.mrb[0].mxu0
        %v606 = vadd.f32 0.0, %v605
        %v607 = vpop.f32.mrb[0].mxu0
        %v608 = vadd.f32 0.0, %v607
        %v609 = vpop.f32.mrb[0].mxu0
        %v610 = vadd.f32 0.0, %v609
        %v611 = vpop.f32.mrb[0].mxu0
        %v612 = vadd.f32 0.0, %v611
        %613 = vmatprep.mubr.bf16.mxu0 0
        %614 = vmatmul.mubr.bf16.gmra.mrb[0].mxu0 %v551
        %v615 = vpop.f32.mrb[0].mxu0
        %v616 = vadd.f32 0.0, %v615
        %v617 = vpop.f32.mrb[0].mxu0
        %v618 = vadd.f32 0.0, %v617
        %v619 = vpop.f32.mrb[0].mxu0
        %v620 = vadd.f32 0.0, %v619
        %v621 = vpop.f32.mrb[0].mxu0
        %v622 = vadd.f32 0.0, %v621
        %623 = vmatprep.mubr.bf16.mxu0 0
        %624 = vmatmul.mubr.bf16.gmra.mrb[0].mxu0 %v554
        %v625 = vpop.f32.mrb[0].mxu0
        %v626 = vadd.f32 0.0, %v625
        %v627 = vpop.f32.mrb[0].mxu0
        %v628 = vadd.f32 0.0, %v627
        %v629 = vpop.f32.mrb[0].mxu0
        %v630 = vadd.f32 0.0, %v629
        %v631 = vpop.f32.mrb[0].mxu0
        %v632 = vadd.f32 0.0, %v631
        %633 = vmatprep.mubr.bf16.mxu0 0
        %634 = vmatmul.mubr.bf16.gmra.mrb[0].mxu0 %v557
        %v635 = vpop.f32.mrb[0].mxu0
        %v636 = vadd.f32 0.0, %v635
        %v637 = vpop.f32.mrb[0].mxu0
        %v638 = vadd.f32 0.0, %v637
        %v639 = vpop.f32.mrb[0].mxu0
        %v640 = vadd.f32 0.0, %v639
        %v641 = vpop.f32.mrb[0].mxu0
        %v642 = vadd.f32 0.0, %v641
        %643 = vmatprep.mubr.bf16.mxu0 0
        %644 = vmatmul.mubr.bf16.gmra.mrb[0].mxu0 %v560
        %v645 = vpop.f32.mrb[0].mxu0
        %v646 = vadd.f32 0.0, %v645
        %v647 = vpop.f32.mrb[0].mxu0
        %v648 = vadd.f32 0.0, %v647
        %v649 = vpop.f32.mrb[0].mxu0
        %v650 = vadd.f32 0.0, %v649
        %v651 = vpop.f32.mrb[0].mxu0
        %v652 = vadd.f32 0.0, %v651
        %653 = vmatprep.mubr.bf16.mxu0 0
        %654 = vmatmul.mubr.bf16.gmra.mrb[0].mxu0 %v563
        %v655 = vpop.f32.mrb[0].mxu0
        %v656 = vadd.f32 0.0, %v655
        %v657 = vpop.f32.mrb[0].mxu0
        %v658 = vadd.f32 0.0, %v657
        %v659 = vpop.f32.mrb[0].mxu0
        %v660 = vadd.f32 0.0, %v659
        %v661 = vpop.f32.mrb[0].mxu0
        %v662 = vadd.f32 0.0, %v661
        %663 = vmatprep.mubr.bf16.mxu0 0
        %664 = vmatmul.mubr.bf16.gmra.mrb[0].mxu0 %v566
        %v665 = vpop.f32.mrb[0].mxu0
        %v666 = vadd.f32 0.0, %v665
        %v667 = vpop.f32.mrb[0].mxu0
        %v668 = vadd.f32 0.0, %v667
        %v669 = vpop.f32.mrb[0].mxu0
        %v670 = vadd.f32 0.0, %v669
        %v671 = vpop.f32.mrb[0].mxu0
        %v672 = vadd.f32 0.0, %v671
        %673 = vmatprep.mubr.bf16.mxu0 0
        %674 = vmatmul.mubr.bf16.gmra.mrb[0].mxu0 %v569
        %v675 = vpop.f32.mrb[0].mxu0
        %v676 = vadd.f32 0.0, %v675
        %v677 = vpop.f32.mrb[0].mxu0
        %v678 = vadd.f32 0.0, %v677
        %v679 = vpop.f32.mrb[0].mxu0
        %v680 = vadd.f32 0.0, %v679
        %v681 = vpop.f32.mrb[0].mxu0
        %v682 = vadd.f32 0.0, %v681
        %683 = vdwg.mxu0
        %v684 = vpack.c.bf16 %v610, %v606
        %v685 = vpack.c.bf16 %v612, %v608
        %v686 = vpack.c.bf16 %v620, %v616
        %v687 = vpack.c.bf16 %v622, %v618
        %v688 = vpack.c.bf16 %v630, %v626
        %v689 = vpack.c.bf16 %v632, %v628
        %v690 = vpack.c.bf16 %v640, %v636
        %v691 = vpack.c.bf16 %v642, %v638
        %v692 = vpack.c.bf16 %v650, %v646
        %v693 = vpack.c.bf16 %v652, %v648
        %v694 = vpack.c.bf16 %v660, %v656
        %v695 = vpack.c.bf16 %v662, %v658
        %v696 = vpack.c.bf16 %v670, %v666
        %v697 = vpack.c.bf16 %v672, %v668
        %v698 = vpack.c.bf16 %v680, %v676
        %v699 = vpack.c.bf16 %v682, %v678
        %v700 = vld [vmem:[#allocation2] sm:$0xff]
        %v701 = vld [vmem:[#allocation2 + $0x8] sm:$0xff]
        %v702 = vld [vmem:[#allocation2 + $0x10] sm:$0xff]
        %v703 = vld [vmem:[#allocation2 + $0x18] sm:$0xff]
        %v704 = vld [vmem:[#allocation2 + $0x20] sm:$0xff]
        %v705 = vld [vmem:[#allocation2 + $0x28] sm:$0xff]
        %v706 = vld [vmem:[#allocation2 + $0x30] sm:$0xff]
        %v707 = vld [vmem:[#allocation2 + $0x38] sm:$0xff]
        %v708 = vld [vmem:[#allocation2 + $0x40] sm:$0xff]
        %v709 = vld [vmem:[#allocation2 + $0x48] sm:$0xff]
        %v710 = vld [vmem:[#allocation2 + $0x50] sm:$0xff]
        %v711 = vld [vmem:[#allocation2 + $0x58] sm:$0xff]
        %v712 = vld [vmem:[#allocation2 + $0x60] sm:$0xff]
        %v713 = vld [vmem:[#allocation2 + $0x68] sm:$0xff]
        %v714 = vld [vmem:[#allocation2 + $0x70] sm:$0xff]
        %v715 = vld [vmem:[#allocation2 + $0x78] sm:$0xff]
        %v716 = vld [vmem:[#allocation2 + $0x80] sm:$0xff]
        %v717 = vld [vmem:[#allocation2 + $0x88] sm:$0xff]
        %v718 = vld [vmem:[#allocation2 + $0x90] sm:$0xff]
        %v719 = vld [vmem:[#allocation2 + $0x98] sm:$0xff]
        %v720 = vld [vmem:[#allocation2 + $0xa0] sm:$0xff]
        %v721 = vld [vmem:[#allocation2 + $0xa8] sm:$0xff]
        %v722 = vld [vmem:[#allocation2 + $0xb0] sm:$0xff]
        %v723 = vld [vmem:[#allocation2 + $0xb8] sm:$0xff]
        %v724 = vld [vmem:[#allocation2 + $0xc0] sm:$0xff]
        %v725 = vld [vmem:[#allocation2 + $0xc8] sm:$0xff]
        %v726 = vld [vmem:[#allocation2 + $0xd0] sm:$0xff]
        %v727 = vld [vmem:[#allocation2 + $0xd8] sm:$0xff]
        %v728 = vld [vmem:[#allocation2 + $0xe0] sm:$0xff]
        %v729 = vld [vmem:[#allocation2 + $0xe8] sm:$0xff]
        %v730 = vld [vmem:[#allocation2 + $0xf0] sm:$0xff]
        %v731 = vld [vmem:[#allocation2 + $0xf8] sm:$0xff]
        %v764 = vunpack.c.l.b16 %v700
        %v765 = vunpack.c.h.b16 %v700
        %v766 = vunpack.c.l.b16 %v701
        %v767 = vunpack.c.h.b16 %v701
        %v768 = vunpack.c.l.b16 %v702
        %v769 = vunpack.c.h.b16 %v702
        %v770 = vunpack.c.l.b16 %v703
        %v771 = vunpack.c.h.b16 %v703
        %v772 = vunpack.c.l.b16 %v704
        %v773 = vunpack.c.h.b16 %v704
        %v774 = vunpack.c.l.b16 %v705
        %v775 = vunpack.c.h.b16 %v705
        %v776 = vunpack.c.l.b16 %v706
        %v777 = vunpack.c.h.b16 %v706
        %v778 = vunpack.c.l.b16 %v707
        %v779 = vunpack.c.h.b16 %v707
        %v780 = vunpack.c.l.b16 %v708
        %v781 = vunpack.c.h.b16 %v708
        %v782 = vunpack.c.l.b16 %v709
        %v783 = vunpack.c.h.b16 %v709
        %v784 = vunpack.c.l.b16 %v710
        %v785 = vunpack.c.h.b16 %v710
        %v786 = vunpack.c.l.b16 %v711
        %v787 = vunpack.c.h.b16 %v711
        %v788 = vunpack.c.l.b16 %v712
        %v789 = vunpack.c.h.b16 %v712
        %v790 = vunpack.c.l.b16 %v713
        %v791 = vunpack.c.h.b16 %v713
        %v792 = vunpack.c.l.b16 %v714
        %v793 = vunpack.c.h.b16 %v714
        %v794 = vunpack.c.l.b16 %v715
        %v795 = vunpack.c.h.b16 %v715
        %v796 = vunpack.c.l.b16 %v716
        %v797 = vunpack.c.h.b16 %v716
        %v798 = vunpack.c.l.b16 %v717
        %v799 = vunpack.c.h.b16 %v717
        %v800 = vunpack.c.l.b16 %v718
        %v801 = vunpack.c.h.b16 %v718
        %v802 = vunpack.c.l.b16 %v719
        %v803 = vunpack.c.h.b16 %v719
        %v804 = vunpack.c.l.b16 %v720
        %v805 = vunpack.c.h.b16 %v720
        %v806 = vunpack.c.l.b16 %v721
        %v807 = vunpack.c.h.b16 %v721
        %v808 = vunpack.c.l.b16 %v722
        %v809 = vunpack.c.h.b16 %v722
        %v810 = vunpack.c.l.b16 %v723
        %v811 = vunpack.c.h.b16 %v723
        %v812 = vunpack.c.l.b16 %v724
        %v813 = vunpack.c.h.b16 %v724
        %v814 = vunpack.c.l.b16 %v725
        %v815 = vunpack.c.h.b16 %v725
        %v816 = vunpack.c.l.b16 %v726
        %v817 = vunpack.c.h.b16 %v726
        %v818 = vunpack.c.l.b16 %v727
        %v819 = vunpack.c.h.b16 %v727
        %v820 = vunpack.c.l.b16 %v728
        %v821 = vunpack.c.h.b16 %v728
        %v822 = vunpack.c.l.b16 %v729
        %v823 = vunpack.c.h.b16 %v729
        %v824 = vunpack.c.l.b16 %v730
        %v825 = vunpack.c.h.b16 %v730
        %v826 = vunpack.c.l.b16 %v731
        %v827 = vunpack.c.h.b16 %v731
        %v828 = vpack.c.b16 %v766, %v764
        %v829 = vpack.c.b16 %v767, %v765
        %v830 = vpack.c.b16 %v770, %v768
        %v831 = vpack.c.b16 %v771, %v769
        %v832 = vpack.c.b16 %v774, %v772
        %v833 = vpack.c.b16 %v775, %v773
        %v834 = vpack.c.b16 %v778, %v776
        %v835 = vpack.c.b16 %v779, %v777
        %v836 = vpack.c.b16 %v782, %v780
        %v837 = vpack.c.b16 %v783, %v781
        %v838 = vpack.c.b16 %v786, %v784
        %v839 = vpack.c.b16 %v787, %v785
        %v840 = vpack.c.b16 %v790, %v788
        %v841 = vpack.c.b16 %v791, %v789
        %v842 = vpack.c.b16 %v794, %v792
        %v843 = vpack.c.b16 %v795, %v793
        %v844 = vpack.c.b16 %v798, %v796
        %v845 = vpack.c.b16 %v799, %v797
        %v846 = vpack.c.b16 %v802, %v800
        %v847 = vpack.c.b16 %v803, %v801
        %v848 = vpack.c.b16 %v806, %v804
        %v849 = vpack.c.b16 %v807, %v805
        %v850 = vpack.c.b16 %v810, %v808
        %v851 = vpack.c.b16 %v811, %v809
        %v852 = vpack.c.b16 %v814, %v812
        %v853 = vpack.c.b16 %v815, %v813
        %v854 = vpack.c.b16 %v818, %v816
        %v855 = vpack.c.b16 %v819, %v817
        %v856 = vpack.c.b16 %v822, %v820
        %v857 = vpack.c.b16 %v823, %v821
        %v858 = vpack.c.b16 %v826, %v824
        %v859 = vpack.c.b16 %v827, %v825
        %892 = vmatprep.subr.bf16.mxu0 %v829
        %893 = vmatpush1.bf16.msra.mxu0 %v828
        %894 = vmatprep.subr.bf16.mxu0 %v831
        %895 = vmatpush1.bf16.msra.mxu0 %v830
        %896 = vmatprep.subr.bf16.mxu0 %v833
        %897 = vmatpush1.bf16.msra.mxu0 %v832
        %898 = vmatprep.subr.bf16.mxu0 %v835
        %899 = vmatpush1.bf16.msra.mxu0 %v834
        %900 = vmatprep.subr.bf16.mxu0 %v837
        %901 = vmatpush1.bf16.msra.mxu0 %v836
        %902 = vmatprep.subr.bf16.mxu0 %v839
        %903 = vmatpush1.bf16.msra.mxu0 %v838
        %904 = vmatprep.subr.bf16.mxu0 %v841
        %905 = vmatpush1.bf16.msra.mxu0 %v840
        %906 = vmatprep.subr.bf16.mxu0 %v843
        %907 = vmatpush1.bf16.msra.mxu0 %v842
        %908 = vmatprep.subr.bf16.mxu0 %v845
        %909 = vmatpush1.bf16.msra.mxu0 %v844
        %910 = vmatprep.subr.bf16.mxu0 %v847
        %911 = vmatpush1.bf16.msra.mxu0 %v846
        %912 = vmatprep.subr.bf16.mxu0 %v849
        %913 = vmatpush1.bf16.msra.mxu0 %v848
        %914 = vmatprep.subr.bf16.mxu0 %v851
        %915 = vmatpush1.bf16.msra.mxu0 %v850
        %916 = vmatprep.subr.bf16.mxu0 %v853
        %917 = vmatpush1.bf16.msra.mxu0 %v852
        %918 = vmatprep.subr.bf16.mxu0 %v855
        %919 = vmatpush1.bf16.msra.mxu0 %v854
        %920 = vmatprep.subr.bf16.mxu0 %v857
        %921 = vmatpush1.bf16.msra.mxu0 %v856
        %922 = vmatprep.subr.bf16.mxu0 %v859
        %923 = vmatpush1.bf16.msra.mxu0 %v858
        %924 = vmatprep.mubr.bf16.mxu0 %v685
        %925 = vmatmul.mubr.bf16.gmra.mrb[0].mxu0 %v684
        %v926 = vpop.f32.mrb[0].mxu0
        %v927 = vadd.f32 0.0, %v926
        %v928 = vpop.f32.mrb[0].mxu0
        %v929 = vadd.f32 0.0, %v928
        %v930 = vpop.f32.mrb[0].mxu0
        %v931 = vadd.f32 0.0, %v930
        %v932 = vpop.f32.mrb[0].mxu0
        %v933 = vadd.f32 0.0, %v932
        %934 = vmatprep.mubr.bf16.mxu0 %v687
        %935 = vmatmul.mubr.bf16.gmra.mrb[0].mxu0 %v686
        %v936 = vpop.f32.mrb[0].mxu0
        %v937 = vadd.f32 0.0, %v936
        %v938 = vpop.f32.mrb[0].mxu0
        %v939 = vadd.f32 0.0, %v938
        %v940 = vpop.f32.mrb[0].mxu0
        %v941 = vadd.f32 0.0, %v940
        %v942 = vpop.f32.mrb[0].mxu0
        %v943 = vadd.f32 0.0, %v942
        %944 = vdwg.mxu0
        %v945 = vmax.f32 %v927, 1.0
        %v946 = vmax.f32 %v929, 1.0
        %v947 = vmax.f32 %v931, 1.0
        %v948 = vmax.f32 %v933, 1.0
        %v949 = vmax.f32 %v937, 1.0
        %v950 = vmax.f32 %v939, 1.0
        %v951 = vmax.f32 %v941, 1.0
        %v952 = vmax.f32 %v943, 1.0
        %v953 = vrcp.pop %v945
        %v954 = vmul.f32 1.0, %v953
        %v955 = vrcp.pop %v947
        %v956 = vmul.f32 1.0, %v955
        %v957 = vrcp.pop %v949
        %v958 = vmul.f32 1.0, %v957
        %v959 = vrcp.pop %v951
        %v960 = vmul.f32 1.0, %v959
        %965 = vrot.lane.b32.xlu0 %v954, 32
        %v966 = vpop.permute.xlu0 %965
        %967 = vrot.lane.b32.xlu0 %v956, 32
        %v968 = vpop.permute.xlu0 %967
        %969 = vrot.lane.b32.xlu0 %v958, 32
        %v970 = vpop.permute.xlu0 %969
        %971 = vrot.lane.b32.xlu0 %v960, 32
        %v972 = vpop.permute.xlu0 %971
        %v977 = vmul.f32 %v945, %v966
        %v978 = vmul.f32 %v947, %v968
        %v979 = vmul.f32 %v949, %v970
        %v980 = vmul.f32 %v951, %v972
        %v981 = vlog2.pop %v977
        %v982 = vmul.f32 %v981, 0.6931472
        %v983 = vlog2.pop %v978
        %v984 = vmul.f32 %v983, 0.6931472
        %v985 = vlog2.pop %v979
        %v986 = vmul.f32 %v985, 0.6931472
        %v987 = vlog2.pop %v980
        %v988 = vmul.f32 %v987, 0.6931472
        %v989 = vmul.f32 %v977, %v982
        %v990 = vmul.f32 %v978, %v984
        %v991 = vmul.f32 %v979, %v986
        %v992 = vmul.f32 %v980, %v988
        %v993 = vsub.f32 0.0, %v989
        %v994 = vsub.f32 0.0, %v990
        %v995 = vsub.f32 0.0, %v991
        %v996 = vsub.f32 0.0, %v992
        %997 = vrot.lane.b32.xlu0 %v954, 64
        %v998 = vpop.permute.xlu0 %997
        %999 = vrot.lane.b32.xlu0 %v956, 64
        %v1000 = vpop.permute.xlu0 %999
        %1001 = vrot.lane.b32.xlu0 %v958, 64
        %v1002 = vpop.permute.xlu0 %1001
        %1003 = vrot.lane.b32.xlu0 %v960, 64
        %v1004 = vpop.permute.xlu0 %1003
        %v1009 = vmul.f32 %v945, %v998
        %v1010 = vmul.f32 %v947, %v1000
        %v1011 = vmul.f32 %v949, %v1002
        %v1012 = vmul.f32 %v951, %v1004
        %v1013 = vlog2.pop %v1009
        %v1014 = vmul.f32 %v1013, 0.6931472
        %v1015 = vlog2.pop %v1010
        %v1016 = vmul.f32 %v1015, 0.6931472
        %v1017 = vlog2.pop %v1011
        %v1018 = vmul.f32 %v1017, 0.6931472
        %v1019 = vlog2.pop %v1012
        %v1020 = vmul.f32 %v1019, 0.6931472
        %v1021 = vmul.f32 %v1009, %v1014
        %v1022 = vmul.f32 %v1010, %v1016
        %v1023 = vmul.f32 %v1011, %v1018
        %v1024 = vmul.f32 %v1012, %v1020
        %1029 = vrot.lane.b32.xlu0 %v1021, 96
        %v1030 = vpop.permute.xlu0 %1029
        %1031 = vrot.lane.b32.xlu0 %v1022, 96
        %v1032 = vpop.permute.xlu0 %1031
        %1033 = vrot.lane.b32.xlu0 %v1023, 96
        %v1034 = vpop.permute.xlu0 %1033
        %1035 = vrot.lane.b32.xlu0 %v1024, 96
        %v1036 = vpop.permute.xlu0 %1035
        %v1041 = vsub.f32 %v993, %v1030
        %v1042 = vsub.f32 %v994, %v1032
        %v1043 = vsub.f32 %v995, %v1034
        %v1044 = vsub.f32 %v996, %v1036
        %1045 = vrot.lane.b32.xlu0 %v954, 96
        %v1046 = vpop.permute.xlu0 %1045
        %1047 = vrot.lane.b32.xlu0 %v956, 96
        %v1048 = vpop.permute.xlu0 %1047
        %1049 = vrot.lane.b32.xlu0 %v958, 96
        %v1050 = vpop.permute.xlu0 %1049
        %1051 = vrot.lane.b32.xlu0 %v960, 96
        %v1052 = vpop.permute.xlu0 %1051
        %v1057 = vmul.f32 %v945, %v1046
        %v1058 = vmul.f32 %v947, %v1048
        %v1059 = vmul.f32 %v949, %v1050
        %v1060 = vmul.f32 %v951, %v1052
        %v1061 = vlog2.pop %v1057
        %v1062 = vmul.f32 %v1061, 0.6931472
        %v1063 = vlog2.pop %v1058
        %v1064 = vmul.f32 %v1063, 0.6931472
        %v1065 = vlog2.pop %v1059
        %v1066 = vmul.f32 %v1065, 0.6931472
        %v1067 = vlog2.pop %v1060
        %v1068 = vmul.f32 %v1067, 0.6931472
        %v1069 = vmul.f32 %v1057, %v1062
        %v1070 = vmul.f32 %v1058, %v1064
        %v1071 = vmul.f32 %v1059, %v1066
        %v1072 = vmul.f32 %v1060, %v1068
        %1077 = vrot.lane.b32.xlu0 %v1069, 64
        %v1078 = vpop.permute.xlu0 %1077
        %1079 = vrot.lane.b32.xlu0 %v1070, 64
        %v1080 = vpop.permute.xlu0 %1079
        %1081 = vrot.lane.b32.xlu0 %v1071, 64
        %v1082 = vpop.permute.xlu0 %1081
        %1083 = vrot.lane.b32.xlu0 %v1072, 64
        %v1084 = vpop.permute.xlu0 %1083
        %v1089 = vsub.f32 %v1041, %v1078
        %v1090 = vsub.f32 %v1042, %v1080
        %v1091 = vsub.f32 %v1043, %v1082
        %v1092 = vsub.f32 %v1044, %v1084
        %v1093 = vmul.f32 %v946, %v954
        %v1094 = vmul.f32 %v948, %v956
        %v1095 = vmul.f32 %v950, %v958
        %v1096 = vmul.f32 %v952, %v960
        %v1097 = vlog2.pop %v1093
        %v1098 = vmul.f32 %v1097, 0.6931472
        %v1099 = vlog2.pop %v1094
        %v1100 = vmul.f32 %v1099, 0.6931472
        %v1101 = vlog2.pop %v1095
        %v1102 = vmul.f32 %v1101, 0.6931472
        %v1103 = vlog2.pop %v1096
        %v1104 = vmul.f32 %v1103, 0.6931472
        %v1105 = vmul.f32 %v1093, %v1098
        %v1106 = vmul.f32 %v1094, %v1100
        %v1107 = vmul.f32 %v1095, %v1102
        %v1108 = vmul.f32 %v1096, %v1104
        %1113 = vrot.lane.b32.xlu0 %v1105, 32
        %v1114 = vpop.permute.xlu0 %1113
        %1115 = vrot.lane.b32.xlu0 %v1106, 32
        %v1116 = vpop.permute.xlu0 %1115
        %1117 = vrot.lane.b32.xlu0 %v1107, 32
        %v1118 = vpop.permute.xlu0 %1117
        %1119 = vrot.lane.b32.xlu0 %v1108, 32
        %v1120 = vpop.permute.xlu0 %1119
        %v1125 = vsub.f32 %v1089, %v1114
        %v1126 = vsub.f32 %v1090, %v1116
        %v1127 = vsub.f32 %v1091, %v1118
        %v1128 = vsub.f32 %v1092, %v1120
        %v1129 = vmul.f32 %v946, %v966
        %v1130 = vmul.f32 %v948, %v968
        %v1131 = vmul.f32 %v950, %v970
        %v1132 = vmul.f32 %v952, %v972
        %v1133 = vlog2.pop %v1129
        %v1134 = vmul.f32 %v1133, 0.6931472
        %v1135 = vlog2.pop %v1130
        %v1136 = vmul.f32 %v1135, 0.6931472
        %v1137 = vlog2.pop %v1131
        %v1138 = vmul.f32 %v1137, 0.6931472
        %v1139 = vlog2.pop %v1132
        %v1140 = vmul.f32 %v1139, 0.6931472
        %v1141 = vmul.f32 %v1129, %v1134
        %v1142 = vmul.f32 %v1130, %v1136
        %v1143 = vmul.f32 %v1131, %v1138
        %v1144 = vmul.f32 %v1132, %v1140
        %v1145 = vsub.f32 %v1125, %v1141
        %v1146 = vsub.f32 %v1126, %v1142
        %v1147 = vsub.f32 %v1127, %v1143
        %v1148 = vsub.f32 %v1128, %v1144
        %v1149 = vmul.f32 %v946, %v998
        %v1150 = vmul.f32 %v948, %v1000
        %v1151 = vmul.f32 %v950, %v1002
        %v1152 = vmul.f32 %v952, %v1004
        %v1153 = vlog2.pop %v1149
        %v1154 = vmul.f32 %v1153, 0.6931472
        %v1155 = vlog2.pop %v1150
        %v1156 = vmul.f32 %v1155, 0.6931472
        %v1157 = vlog2.pop %v1151
        %v1158 = vmul.f32 %v1157, 0.6931472
        %v1159 = vlog2.pop %v1152
        %v1160 = vmul.f32 %v1159, 0.6931472
        %v1161 = vmul.f32 %v1149, %v1154
        %v1162 = vmul.f32 %v1150, %v1156
        %v1163 = vmul.f32 %v1151, %v1158
        %v1164 = vmul.f32 %v1152, %v1160
        %1169 = vrot.lane.b32.xlu0 %v1161, 96
        %v1170 = vpop.permute.xlu0 %1169
        %1171 = vrot.lane.b32.xlu0 %v1162, 96
        %v1172 = vpop.permute.xlu0 %1171
        %1173 = vrot.lane.b32.xlu0 %v1163, 96
        %v1174 = vpop.permute.xlu0 %1173
        %1175 = vrot.lane.b32.xlu0 %v1164, 96
        %v1176 = vpop.permute.xlu0 %1175
        %v1181 = vsub.f32 %v1145, %v1170
        %v1182 = vsub.f32 %v1146, %v1172
        %v1183 = vsub.f32 %v1147, %v1174
        %v1184 = vsub.f32 %v1148, %v1176
        %v1185 = vmul.f32 %v946, %v1046
        %v1186 = vmul.f32 %v948, %v1048
        %v1187 = vmul.f32 %v950, %v1050
        %v1188 = vmul.f32 %v952, %v1052
        %v1189 = vlog2.pop %v1185
        %v1190 = vmul.f32 %v1189, 0.6931472
        %v1191 = vlog2.pop %v1186
        %v1192 = vmul.f32 %v1191, 0.6931472
        %v1193 = vlog2.pop %v1187
        %v1194 = vmul.f32 %v1193, 0.6931472
        %v1195 = vlog2.pop %v1188
        %v1196 = vmul.f32 %v1195, 0.6931472
        %v1197 = vmul.f32 %v1185, %v1190
        %v1198 = vmul.f32 %v1186, %v1192
        %v1199 = vmul.f32 %v1187, %v1194
        %v1200 = vmul.f32 %v1188, %v1196
        %1205 = vrot.lane.b32.xlu0 %v1197, 64
        %v1206 = vpop.permute.xlu0 %1205
        %1207 = vrot.lane.b32.xlu0 %v1198, 64
        %v1208 = vpop.permute.xlu0 %1207
        %1209 = vrot.lane.b32.xlu0 %v1199, 64
        %v1210 = vpop.permute.xlu0 %1209
        %1211 = vrot.lane.b32.xlu0 %v1200, 64
        %v1212 = vpop.permute.xlu0 %1211
        %v1217 = vsub.f32 %v1181, %v1206
        %v1218 = vsub.f32 %v1182, %v1208
        %v1219 = vsub.f32 %v1183, %v1210
        %v1220 = vsub.f32 %v1184, %v1212
        %s1221 = scalar_lea.vmem [#allocation2], 256
        %v1222 = vld [vmem:[%s1221] sm:$0xff]
        %v1223 = vld [vmem:[%s1221 + $0x8] sm:$0xff]
        %v1224 = vld [vmem:[%s1221 + $0x10] sm:$0xff]
        %v1225 = vld [vmem:[%s1221 + $0x18] sm:$0xff]
        %v1226 = vld [vmem:[%s1221 + $0x20] sm:$0xff]
        %v1227 = vld [vmem:[%s1221 + $0x28] sm:$0xff]
        %v1228 = vld [vmem:[%s1221 + $0x30] sm:$0xff]
        %v1229 = vld [vmem:[%s1221 + $0x38] sm:$0xff]
        %v1230 = vld [vmem:[%s1221 + $0x40] sm:$0xff]
        %v1231 = vld [vmem:[%s1221 + $0x48] sm:$0xff]
        %v1232 = vld [vmem:[%s1221 + $0x50] sm:$0xff]
        %v1233 = vld [vmem:[%s1221 + $0x58] sm:$0xff]
        %v1234 = vld [vmem:[%s1221 + $0x60] sm:$0xff]
        %v1235 = vld [vmem:[%s1221 + $0x68] sm:$0xff]
        %v1236 = vld [vmem:[%s1221 + $0x70] sm:$0xff]
        %v1237 = vld [vmem:[%s1221 + $0x78] sm:$0xff]
        %v1238 = vld [vmem:[%s1221 + $0x80] sm:$0xff]
        %v1239 = vld [vmem:[%s1221 + $0x88] sm:$0xff]
        %v1240 = vld [vmem:[%s1221 + $0x90] sm:$0xff]
        %v1241 = vld [vmem:[%s1221 + $0x98] sm:$0xff]
        %v1242 = vld [vmem:[%s1221 + $0xa0] sm:$0xff]
        %v1243 = vld [vmem:[%s1221 + $0xa8] sm:$0xff]
        %v1244 = vld [vmem:[%s1221 + $0xb0] sm:$0xff]
        %v1245 = vld [vmem:[%s1221 + $0xb8] sm:$0xff]
        %v1246 = vld [vmem:[%s1221 + $0xc0] sm:$0xff]
        %v1247 = vld [vmem:[%s1221 + $0xc8] sm:$0xff]
        %v1248 = vld [vmem:[%s1221 + $0xd0] sm:$0xff]
        %v1249 = vld [vmem:[%s1221 + $0xd8] sm:$0xff]
        %v1250 = vld [vmem:[%s1221 + $0xe0] sm:$0xff]
        %v1251 = vld [vmem:[%s1221 + $0xe8] sm:$0xff]
        %v1252 = vld [vmem:[%s1221 + $0xf0] sm:$0xff]
        %v1253 = vld [vmem:[%s1221 + $0xf8] sm:$0xff]
        %v1286 = vunpack.c.l.b16 %v1222
        %v1287 = vunpack.c.h.b16 %v1222
        %v1288 = vunpack.c.l.b16 %v1223
        %v1289 = vunpack.c.h.b16 %v1223
        %v1290 = vunpack.c.l.b16 %v1224
        %v1291 = vunpack.c.h.b16 %v1224
        %v1292 = vunpack.c.l.b16 %v1225
        %v1293 = vunpack.c.h.b16 %v1225
        %v1294 = vunpack.c.l.b16 %v1226
        %v1295 = vunpack.c.h.b16 %v1226
        %v1296 = vunpack.c.l.b16 %v1227
        %v1297 = vunpack.c.h.b16 %v1227
        %v1298 = vunpack.c.l.b16 %v1228
        %v1299 = vunpack.c.h.b16 %v1228
        %v1300 = vunpack.c.l.b16 %v1229
        %v1301 = vunpack.c.h.b16 %v1229
        %v1302 = vunpack.c.l.b16 %v1230
        %v1303 = vunpack.c.h.b16 %v1230
        %v1304 = vunpack.c.l.b16 %v1231
        %v1305 = vunpack.c.h.b16 %v1231
        %v1306 = vunpack.c.l.b16 %v1232
        %v1307 = vunpack.c.h.b16 %v1232
        %v1308 = vunpack.c.l.b16 %v1233
        %v1309 = vunpack.c.h.b16 %v1233
        %v1310 = vunpack.c.l.b16 %v1234
        %v1311 = vunpack.c.h.b16 %v1234
        %v1312 = vunpack.c.l.b16 %v1235
        %v1313 = vunpack.c.h.b16 %v1235
        %v1314 = vunpack.c.l.b16 %v1236
        %v1315 = vunpack.c.h.b16 %v1236
        %v1316 = vunpack.c.l.b16 %v1237
        %v1317 = vunpack.c.h.b16 %v1237
        %v1318 = vunpack.c.l.b16 %v1238
        %v1319 = vunpack.c.h.b16 %v1238
        %v1320 = vunpack.c.l.b16 %v1239
        %v1321 = vunpack.c.h.b16 %v1239
        %v1322 = vunpack.c.l.b16 %v1240
        %v1323 = vunpack.c.h.b16 %v1240
        %v1324 = vunpack.c.l.b16 %v1241
        %v1325 = vunpack.c.h.b16 %v1241
        %v1326 = vunpack.c.l.b16 %v1242
        %v1327 = vunpack.c.h.b16 %v1242
        %v1328 = vunpack.c.l.b16 %v1243
        %v1329 = vunpack.c.h.b16 %v1243
        %v1330 = vunpack.c.l.b16 %v1244
        %v1331 = vunpack.c.h.b16 %v1244
        %v1332 = vunpack.c.l.b16 %v1245
        %v1333 = vunpack.c.h.b16 %v1245
        %v1334 = vunpack.c.l.b16 %v1246
        %v1335 = vunpack.c.h.b16 %v1246
        %v1336 = vunpack.c.l.b16 %v1247
        %v1337 = vunpack.c.h.b16 %v1247
        %v1338 = vunpack.c.l.b16 %v1248
        %v1339 = vunpack.c.h.b16 %v1248
        %v1340 = vunpack.c.l.b16 %v1249
        %v1341 = vunpack.c.h.b16 %v1249
        %v1342 = vunpack.c.l.b16 %v1250
        %v1343 = vunpack.c.h.b16 %v1250
        %v1344 = vunpack.c.l.b16 %v1251
        %v1345 = vunpack.c.h.b16 %v1251
        %v1346 = vunpack.c.l.b16 %v1252
        %v1347 = vunpack.c.h.b16 %v1252
        %v1348 = vunpack.c.l.b16 %v1253
        %v1349 = vunpack.c.h.b16 %v1253
        %v1350 = vpack.c.b16 %v1288, %v1286
        %v1351 = vpack.c.b16 %v1289, %v1287
        %v1352 = vpack.c.b16 %v1292, %v1290
        %v1353 = vpack.c.b16 %v1293, %v1291
        %v1354 = vpack.c.b16 %v1296, %v1294
        %v1355 = vpack.c.b16 %v1297, %v1295
        %v1356 = vpack.c.b16 %v1300, %v1298
        %v1357 = vpack.c.b16 %v1301, %v1299
        %v1358 = vpack.c.b16 %v1304, %v1302
        %v1359 = vpack.c.b16 %v1305, %v1303
        %v1360 = vpack.c.b16 %v1308, %v1306
        %v1361 = vpack.c.b16 %v1309, %v1307
        %v1362 = vpack.c.b16 %v1312, %v1310
        %v1363 = vpack.c.b16 %v1313, %v1311
        %v1364 = vpack.c.b16 %v1316, %v1314
        %v1365 = vpack.c.b16 %v1317, %v1315
        %v1366 = vpack.c.b16 %v1320, %v1318
        %v1367 = vpack.c.b16 %v1321, %v1319
        %v1368 = vpack.c.b16 %v1324, %v1322
        %v1369 = vpack.c.b16 %v1325, %v1323
        %v1370 = vpack.c.b16 %v1328, %v1326
        %v1371 = vpack.c.b16 %v1329, %v1327
        %v1372 = vpack.c.b16 %v1332, %v1330
        %v1373 = vpack.c.b16 %v1333, %v1331
        %v1374 = vpack.c.b16 %v1336, %v1334
        %v1375 = vpack.c.b16 %v1337, %v1335
        %v1376 = vpack.c.b16 %v1340, %v1338
        %v1377 = vpack.c.b16 %v1341, %v1339
        %v1378 = vpack.c.b16 %v1344, %v1342
        %v1379 = vpack.c.b16 %v1345, %v1343
        %v1380 = vpack.c.b16 %v1348, %v1346
        %v1381 = vpack.c.b16 %v1349, %v1347
        %1414 = vmatprep.subr.bf16.mxu0 %v1351
        %1415 = vmatpush1.bf16.msra.mxu0 %v1350
        %1416 = vmatprep.subr.bf16.mxu0 %v1353
        %1417 = vmatpush1.bf16.msra.mxu0 %v1352
        %1418 = vmatprep.subr.bf16.mxu0 %v1355
        %1419 = vmatpush1.bf16.msra.mxu0 %v1354
        %1420 = vmatprep.subr.bf16.mxu0 %v1357
        %1421 = vmatpush1.bf16.msra.mxu0 %v1356
        %1422 = vmatprep.subr.bf16.mxu0 %v1359
        %1423 = vmatpush1.bf16.msra.mxu0 %v1358
        %1424 = vmatprep.subr.bf16.mxu0 %v1361
        %1425 = vmatpush1.bf16.msra.mxu0 %v1360
        %1426 = vmatprep.subr.bf16.mxu0 %v1363
        %1427 = vmatpush1.bf16.msra.mxu0 %v1362
        %1428 = vmatprep.subr.bf16.mxu0 %v1365
        %1429 = vmatpush1.bf16.msra.mxu0 %v1364
        %1430 = vmatprep.subr.bf16.mxu0 %v1367
        %1431 = vmatpush1.bf16.msra.mxu0 %v1366
        %1432 = vmatprep.subr.bf16.mxu0 %v1369
        %1433 = vmatpush1.bf16.msra.mxu0 %v1368
        %1434 = vmatprep.subr.bf16.mxu0 %v1371
        %1435 = vmatpush1.bf16.msra.mxu0 %v1370
        %1436 = vmatprep.subr.bf16.mxu0 %v1373
        %1437 = vmatpush1.bf16.msra.mxu0 %v1372
        %1438 = vmatprep.subr.bf16.mxu0 %v1375
        %1439 = vmatpush1.bf16.msra.mxu0 %v1374
        %1440 = vmatprep.subr.bf16.mxu0 %v1377
        %1441 = vmatpush1.bf16.msra.mxu0 %v1376
        %1442 = vmatprep.subr.bf16.mxu0 %v1379
        %1443 = vmatpush1.bf16.msra.mxu0 %v1378
        %1444 = vmatprep.subr.bf16.mxu0 %v1381
        %1445 = vmatpush1.bf16.msra.mxu0 %v1380
        %1446 = vmatprep.mubr.bf16.mxu0 %v689
        %1447 = vmatmul.mubr.bf16.gmra.mrb[0].mxu0 %v688
        %v1448 = vpop.f32.mrb[0].mxu0
        %v1449 = vadd.f32 0.0, %v1448
        %v1450 = vpop.f32.mrb[0].mxu0
        %v1451 = vadd.f32 0.0, %v1450
        %v1452 = vpop.f32.mrb[0].mxu0
        %v1453 = vadd.f32 0.0, %v1452
        %v1454 = vpop.f32.mrb[0].mxu0
        %v1455 = vadd.f32 0.0, %v1454
        %1456 = vmatprep.mubr.bf16.mxu0 %v691
        %1457 = vmatmul.mubr.bf16.gmra.mrb[0].mxu0 %v690
        %v1458 = vpop.f32.mrb[0].mxu0
        %v1459 = vadd.f32 0.0, %v1458
        %v1460 = vpop.f32.mrb[0].mxu0
        %v1461 = vadd.f32 0.0, %v1460
        %v1462 = vpop.f32.mrb[0].mxu0
        %v1463 = vadd.f32 0.0, %v1462
        %v1464 = vpop.f32.mrb[0].mxu0
        %v1465 = vadd.f32 0.0, %v1464
        %1466 = vdwg.mxu0
        %v1467 = vmax.f32 %v1449, 1.0
        %v1468 = vmax.f32 %v1451, 1.0
        %v1469 = vmax.f32 %v1453, 1.0
        %v1470 = vmax.f32 %v1455, 1.0
        %v1471 = vmax.f32 %v1459, 1.0
        %v1472 = vmax.f32 %v1461, 1.0
        %v1473 = vmax.f32 %v1463, 1.0
        %v1474 = vmax.f32 %v1465, 1.0
        %v1475 = vrcp.pop %v1467
        %v1476 = vmul.f32 1.0, %v1475
        %v1477 = vrcp.pop %v1469
        %v1478 = vmul.f32 1.0, %v1477
        %v1479 = vrcp.pop %v1471
        %v1480 = vmul.f32 1.0, %v1479
        %v1481 = vrcp.pop %v1473
        %v1482 = vmul.f32 1.0, %v1481
        %1487 = vrot.lane.b32.xlu0 %v1476, 32
        %v1488 = vpop.permute.xlu0 %1487
        %1489 = vrot.lane.b32.xlu0 %v1478, 32
        %v1490 = vpop.permute.xlu0 %1489
        %1491 = vrot.lane.b32.xlu0 %v1480, 32
        %v1492 = vpop.permute.xlu0 %1491
        %1493 = vrot.lane.b32.xlu0 %v1482, 32
        %v1494 = vpop.permute.xlu0 %1493
        %v1499 = vmul.f32 %v1467, %v1488
        %v1500 = vmul.f32 %v1469, %v1490
        %v1501 = vmul.f32 %v1471, %v1492
        %v1502 = vmul.f32 %v1473, %v1494
        %v1503 = vlog2.pop %v1499
        %v1504 = vmul.f32 %v1503, 0.6931472
        %v1505 = vlog2.pop %v1500
        %v1506 = vmul.f32 %v1505, 0.6931472
        %v1507 = vlog2.pop %v1501
        %v1508 = vmul.f32 %v1507, 0.6931472
        %v1509 = vlog2.pop %v1502
        %v1510 = vmul.f32 %v1509, 0.6931472
        %v1511 = vmul.f32 %v1499, %v1504
        %v1512 = vmul.f32 %v1500, %v1506
        %v1513 = vmul.f32 %v1501, %v1508
        %v1514 = vmul.f32 %v1502, %v1510
        %v1515 = vsub.f32 0.0, %v1511
        %v1516 = vsub.f32 0.0, %v1512
        %v1517 = vsub.f32 0.0, %v1513
        %v1518 = vsub.f32 0.0, %v1514
        %1519 = vrot.lane.b32.xlu0 %v1476, 64
        %v1520 = vpop.permute.xlu0 %1519
        %1521 = vrot.lane.b32.xlu0 %v1478, 64
        %v1522 = vpop.permute.xlu0 %1521
        %1523 = vrot.lane.b32.xlu0 %v1480, 64
        %v1524 = vpop.permute.xlu0 %1523
        %1525 = vrot.lane.b32.xlu0 %v1482, 64
        %v1526 = vpop.permute.xlu0 %1525
        %v1531 = vmul.f32 %v1467, %v1520
        %v1532 = vmul.f32 %v1469, %v1522
        %v1533 = vmul.f32 %v1471, %v1524
        %v1534 = vmul.f32 %v1473, %v1526
        %v1535 = vlog2.pop %v1531
        %v1536 = vmul.f32 %v1535, 0.6931472
        %v1537 = vlog2.pop %v1532
        %v1538 = vmul.f32 %v1537, 0.6931472
        %v1539 = vlog2.pop %v1533
        %v1540 = vmul.f32 %v1539, 0.6931472
        %v1541 = vlog2.pop %v1534
        %v1542 = vmul.f32 %v1541, 0.6931472
        %v1543 = vmul.f32 %v1531, %v1536
        %v1544 = vmul.f32 %v1532, %v1538
        %v1545 = vmul.f32 %v1533, %v1540
        %v1546 = vmul.f32 %v1534, %v1542
        %1551 = vrot.lane.b32.xlu0 %v1543, 96
        %v1552 = vpop.permute.xlu0 %1551
        %1553 = vrot.lane.b32.xlu0 %v1544, 96
        %v1554 = vpop.permute.xlu0 %1553
        %1555 = vrot.lane.b32.xlu0 %v1545, 96
        %v1556 = vpop.permute.xlu0 %1555
        %1557 = vrot.lane.b32.xlu0 %v1546, 96
        %v1558 = vpop.permute.xlu0 %1557
        %v1563 = vsub.f32 %v1515, %v1552
        %v1564 = vsub.f32 %v1516, %v1554
        %v1565 = vsub.f32 %v1517, %v1556
        %v1566 = vsub.f32 %v1518, %v1558
        %1567 = vrot.lane.b32.xlu0 %v1476, 96
        %v1568 = vpop.permute.xlu0 %1567
        %1569 = vrot.lane.b32.xlu0 %v1478, 96
        %v1570 = vpop.permute.xlu0 %1569
        %1571 = vrot.lane.b32.xlu0 %v1480, 96
        %v1572 = vpop.permute.xlu0 %1571
        %1573 = vrot.lane.b32.xlu0 %v1482, 96
        %v1574 = vpop.permute.xlu0 %1573
        %v1579 = vmul.f32 %v1467, %v1568
        %v1580 = vmul.f32 %v1469, %v1570
        %v1581 = vmul.f32 %v1471, %v1572
        %v1582 = vmul.f32 %v1473, %v1574
        %v1583 = vlog2.pop %v1579
        %v1584 = vmul.f32 %v1583, 0.6931472
        %v1585 = vlog2.pop %v1580
        %v1586 = vmul.f32 %v1585, 0.6931472
        %v1587 = vlog2.pop %v1581
        %v1588 = vmul.f32 %v1587, 0.6931472
        %v1589 = vlog2.pop %v1582
        %v1590 = vmul.f32 %v1589, 0.6931472
        %v1591 = vmul.f32 %v1579, %v1584
        %v1592 = vmul.f32 %v1580, %v1586
        %v1593 = vmul.f32 %v1581, %v1588
        %v1594 = vmul.f32 %v1582, %v1590
        %1599 = vrot.lane.b32.xlu0 %v1591, 64
        %v1600 = vpop.permute.xlu0 %1599
        %1601 = vrot.lane.b32.xlu0 %v1592, 64
        %v1602 = vpop.permute.xlu0 %1601
        %1603 = vrot.lane.b32.xlu0 %v1593, 64
        %v1604 = vpop.permute.xlu0 %1603
        %1605 = vrot.lane.b32.xlu0 %v1594, 64
        %v1606 = vpop.permute.xlu0 %1605
        %v1611 = vsub.f32 %v1563, %v1600
        %v1612 = vsub.f32 %v1564, %v1602
        %v1613 = vsub.f32 %v1565, %v1604
        %v1614 = vsub.f32 %v1566, %v1606
        %v1615 = vmul.f32 %v1468, %v1476
        %v1616 = vmul.f32 %v1470, %v1478
        %v1617 = vmul.f32 %v1472, %v1480
        %v1618 = vmul.f32 %v1474, %v1482
        %v1619 = vlog2.pop %v1615
        %v1620 = vmul.f32 %v1619, 0.6931472
        %v1621 = vlog2.pop %v1616
        %v1622 = vmul.f32 %v1621, 0.6931472
        %v1623 = vlog2.pop %v1617
        %v1624 = vmul.f32 %v1623, 0.6931472
        %v1625 = vlog2.pop %v1618
        %v1626 = vmul.f32 %v1625, 0.6931472
        %v1627 = vmul.f32 %v1615, %v1620
        %v1628 = vmul.f32 %v1616, %v1622
        %v1629 = vmul.f32 %v1617, %v1624
        %v1630 = vmul.f32 %v1618, %v1626
        %1635 = vrot.lane.b32.xlu0 %v1627, 32
        %v1636 = vpop.permute.xlu0 %1635
        %1637 = vrot.lane.b32.xlu0 %v1628, 32
        %v1638 = vpop.permute.xlu0 %1637
        %1639 = vrot.lane.b32.xlu0 %v1629, 32
        %v1640 = vpop.permute.xlu0 %1639
        %1641 = vrot.lane.b32.xlu0 %v1630, 32
        %v1642 = vpop.permute.xlu0 %1641
        %v1647 = vsub.f32 %v1611, %v1636
        %v1648 = vsub.f32 %v1612, %v1638
        %v1649 = vsub.f32 %v1613, %v1640
        %v1650 = vsub.f32 %v1614, %v1642
        %v1651 = vmul.f32 %v1468, %v1488
        %v1652 = vmul.f32 %v1470, %v1490
        %v1653 = vmul.f32 %v1472, %v1492
        %v1654 = vmul.f32 %v1474, %v1494
        %v1655 = vlog2.pop %v1651
        %v1656 = vmul.f32 %v1655, 0.6931472
        %v1657 = vlog2.pop %v1652
        %v1658 = vmul.f32 %v1657, 0.6931472
        %v1659 = vlog2.pop %v1653
        %v1660 = vmul.f32 %v1659, 0.6931472
        %v1661 = vlog2.pop %v1654
        %v1662 = vmul.f32 %v1661, 0.6931472
        %v1663 = vmul.f32 %v1651, %v1656
        %v1664 = vmul.f32 %v1652, %v1658
        %v1665 = vmul.f32 %v1653, %v1660
        %v1666 = vmul.f32 %v1654, %v1662
        %v1667 = vsub.f32 %v1647, %v1663
        %v1668 = vsub.f32 %v1648, %v1664
        %v1669 = vsub.f32 %v1649, %v1665
        %v1670 = vsub.f32 %v1650, %v1666
        %v1671 = vmul.f32 %v1468, %v1520
        %v1672 = vmul.f32 %v1470, %v1522
        %v1673 = vmul.f32 %v1472, %v1524
        %v1674 = vmul.f32 %v1474, %v1526
        %v1675 = vlog2.pop %v1671
        %v1676 = vmul.f32 %v1675, 0.6931472
        %v1677 = vlog2.pop %v1672
        %v1678 = vmul.f32 %v1677, 0.6931472
        %v1679 = vlog2.pop %v1673
        %v1680 = vmul.f32 %v1679, 0.6931472
        %v1681 = vlog2.pop %v1674
        %v1682 = vmul.f32 %v1681, 0.6931472
        %v1683 = vmul.f32 %v1671, %v1676
        %v1684 = vmul.f32 %v1672, %v1678
        %v1685 = vmul.f32 %v1673, %v1680
        %v1686 = vmul.f32 %v1674, %v1682
        %1691 = vrot.lane.b32.xlu0 %v1683, 96
        %v1692 = vpop.permute.xlu0 %1691
        %1693 = vrot.lane.b32.xlu0 %v1684, 96
        %v1694 = vpop.permute.xlu0 %1693
        %1695 = vrot.lane.b32.xlu0 %v1685, 96
        %v1696 = vpop.permute.xlu0 %1695
        %1697 = vrot.lane.b32.xlu0 %v1686, 96
        %v1698 = vpop.permute.xlu0 %1697
        %v1703 = vsub.f32 %v1667, %v1692
        %v1704 = vsub.f32 %v1668, %v1694
        %v1705 = vsub.f32 %v1669, %v1696
        %v1706 = vsub.f32 %v1670, %v1698
        %v1707 = vmul.f32 %v1468, %v1568
        %v1708 = vmul.f32 %v1470, %v1570
        %v1709 = vmul.f32 %v1472, %v1572
        %v1710 = vmul.f32 %v1474, %v1574
        %v1711 = vlog2.pop %v1707
        %v1712 = vmul.f32 %v1711, 0.6931472
        %v1713 = vlog2.pop %v1708
        %v1714 = vmul.f32 %v1713, 0.6931472
        %v1715 = vlog2.pop %v1709
        %v1716 = vmul.f32 %v1715, 0.6931472
        %v1717 = vlog2.pop %v1710
        %v1718 = vmul.f32 %v1717, 0.6931472
        %v1719 = vmul.f32 %v1707, %v1712
        %v1720 = vmul.f32 %v1708, %v1714
        %v1721 = vmul.f32 %v1709, %v1716
        %v1722 = vmul.f32 %v1710, %v1718
        %1727 = vrot.lane.b32.xlu0 %v1719, 64
        %v1728 = vpop.permute.xlu0 %1727
        %1729 = vrot.lane.b32.xlu0 %v1720, 64
        %v1730 = vpop.permute.xlu0 %1729
        %1731 = vrot.lane.b32.xlu0 %v1721, 64
        %v1732 = vpop.permute.xlu0 %1731
        %1733 = vrot.lane.b32.xlu0 %v1722, 64
        %v1734 = vpop.permute.xlu0 %1733
        %v1739 = vsub.f32 %v1703, %v1728
        %v1740 = vsub.f32 %v1704, %v1730
        %v1741 = vsub.f32 %v1705, %v1732
        %v1742 = vsub.f32 %v1706, %v1734
        %s1743 = scalar_lea.vmem [#allocation2], 512
        %v1744 = vld [vmem:[%s1743] sm:$0xff]
        %v1745 = vld [vmem:[%s1743 + $0x8] sm:$0xff]
        %v1746 = vld [vmem:[%s1743 + $0x10] sm:$0xff]
        %v1747 = vld [vmem:[%s1743 + $0x18] sm:$0xff]
        %v1748 = vld [vmem:[%s1743 + $0x20] sm:$0xff]
        %v1749 = vld [vmem:[%s1743 + $0x28] sm:$0xff]
        %v1750 = vld [vmem:[%s1743 + $0x30] sm:$0xff]
        %v1751 = vld [vmem:[%s1743 + $0x38] sm:$0xff]
        %v1752 = vld [vmem:[%s1743 + $0x40] sm:$0xff]
        %v1753 = vld [vmem:[%s1743 + $0x48] sm:$0xff]
        %v1754 = vld [vmem:[%s1743 + $0x50] sm:$0xff]
        %v1755 = vld [vmem:[%s1743 + $0x58] sm:$0xff]
        %v1756 = vld [vmem:[%s1743 + $0x60] sm:$0xff]
        %v1757 = vld [vmem:[%s1743 + $0x68] sm:$0xff]
        %v1758 = vld [vmem:[%s1743 + $0x70] sm:$0xff]
        %v1759 = vld [vmem:[%s1743 + $0x78] sm:$0xff]
        %v1760 = vld [vmem:[%s1743 + $0x80] sm:$0xff]
        %v1761 = vld [vmem:[%s1743 + $0x88] sm:$0xff]
        %v1762 = vld [vmem:[%s1743 + $0x90] sm:$0xff]
        %v1763 = vld [vmem:[%s1743 + $0x98] sm:$0xff]
        %v1764 = vld [vmem:[%s1743 + $0xa0] sm:$0xff]
        %v1765 = vld [vmem:[%s1743 + $0xa8] sm:$0xff]
        %v1766 = vld [vmem:[%s1743 + $0xb0] sm:$0xff]
        %v1767 = vld [vmem:[%s1743 + $0xb8] sm:$0xff]
        %v1768 = vld [vmem:[%s1743 + $0xc0] sm:$0xff]
        %v1769 = vld [vmem:[%s1743 + $0xc8] sm:$0xff]
        %v1770 = vld [vmem:[%s1743 + $0xd0] sm:$0xff]
        %v1771 = vld [vmem:[%s1743 + $0xd8] sm:$0xff]
        %v1772 = vld [vmem:[%s1743 + $0xe0] sm:$0xff]
        %v1773 = vld [vmem:[%s1743 + $0xe8] sm:$0xff]
        %v1774 = vld [vmem:[%s1743 + $0xf0] sm:$0xff]
        %v1775 = vld [vmem:[%s1743 + $0xf8] sm:$0xff]
        %v1808 = vunpack.c.l.b16 %v1744
        %v1809 = vunpack.c.h.b16 %v1744
        %v1810 = vunpack.c.l.b16 %v1745
        %v1811 = vunpack.c.h.b16 %v1745
        %v1812 = vunpack.c.l.b16 %v1746
        %v1813 = vunpack.c.h.b16 %v1746
        %v1814 = vunpack.c.l.b16 %v1747
        %v1815 = vunpack.c.h.b16 %v1747
        %v1816 = vunpack.c.l.b16 %v1748
        %v1817 = vunpack.c.h.b16 %v1748
        %v1818 = vunpack.c.l.b16 %v1749
        %v1819 = vunpack.c.h.b16 %v1749
        %v1820 = vunpack.c.l.b16 %v1750
        %v1821 = vunpack.c.h.b16 %v1750
        %v1822 = vunpack.c.l.b16 %v1751
        %v1823 = vunpack.c.h.b16 %v1751
        %v1824 = vunpack.c.l.b16 %v1752
        %v1825 = vunpack.c.h.b16 %v1752
        %v1826 = vunpack.c.l.b16 %v1753
        %v1827 = vunpack.c.h.b16 %v1753
        %v1828 = vunpack.c.l.b16 %v1754
        %v1829 = vunpack.c.h.b16 %v1754
        %v1830 = vunpack.c.l.b16 %v1755
        %v1831 = vunpack.c.h.b16 %v1755
        %v1832 = vunpack.c.l.b16 %v1756
        %v1833 = vunpack.c.h.b16 %v1756
        %v1834 = vunpack.c.l.b16 %v1757
        %v1835 = vunpack.c.h.b16 %v1757
        %v1836 = vunpack.c.l.b16 %v1758
        %v1837 = vunpack.c.h.b16 %v1758
        %v1838 = vunpack.c.l.b16 %v1759
        %v1839 = vunpack.c.h.b16 %v1759
        %v1840 = vunpack.c.l.b16 %v1760
        %v1841 = vunpack.c.h.b16 %v1760
        %v1842 = vunpack.c.l.b16 %v1761
        %v1843 = vunpack.c.h.b16 %v1761
        %v1844 = vunpack.c.l.b16 %v1762
        %v1845 = vunpack.c.h.b16 %v1762
        %v1846 = vunpack.c.l.b16 %v1763
        %v1847 = vunpack.c.h.b16 %v1763
        %v1848 = vunpack.c.l.b16 %v1764
        %v1849 = vunpack.c.h.b16 %v1764
        %v1850 = vunpack.c.l.b16 %v1765
        %v1851 = vunpack.c.h.b16 %v1765
        %v1852 = vunpack.c.l.b16 %v1766
        %v1853 = vunpack.c.h.b16 %v1766
        %v1854 = vunpack.c.l.b16 %v1767
        %v1855 = vunpack.c.h.b16 %v1767
        %v1856 = vunpack.c.l.b16 %v1768
        %v1857 = vunpack.c.h.b16 %v1768
        %v1858 = vunpack.c.l.b16 %v1769
        %v1859 = vunpack.c.h.b16 %v1769
        %v1860 = vunpack.c.l.b16 %v1770
        %v1861 = vunpack.c.h.b16 %v1770
        %v1862 = vunpack.c.l.b16 %v1771
        %v1863 = vunpack.c.h.b16 %v1771
        %v1864 = vunpack.c.l.b16 %v1772
        %v1865 = vunpack.c.h.b16 %v1772
        %v1866 = vunpack.c.l.b16 %v1773
        %v1867 = vunpack.c.h.b16 %v1773
        %v1868 = vunpack.c.l.b16 %v1774
        %v1869 = vunpack.c.h.b16 %v1774
        %v1870 = vunpack.c.l.b16 %v1775
        %v1871 = vunpack.c.h.b16 %v1775
        %v1872 = vpack.c.b16 %v1810, %v1808
        %v1873 = vpack.c.b16 %v1811, %v1809
        %v1874 = vpack.c.b16 %v1814, %v1812
        %v1875 = vpack.c.b16 %v1815, %v1813
        %v1876 = vpack.c.b16 %v1818, %v1816
        %v1877 = vpack.c.b16 %v1819, %v1817
        %v1878 = vpack.c.b16 %v1822, %v1820
        %v1879 = vpack.c.b16 %v1823, %v1821
        %v1880 = vpack.c.b16 %v1826, %v1824
        %v1881 = vpack.c.b16 %v1827, %v1825
        %v1882 = vpack.c.b16 %v1830, %v1828
        %v1883 = vpack.c.b16 %v1831, %v1829
        %v1884 = vpack.c.b16 %v1834, %v1832
        %v1885 = vpack.c.b16 %v1835, %v1833
        %v1886 = vpack.c.b16 %v1838, %v1836
        %v1887 = vpack.c.b16 %v1839, %v1837
        %v1888 = vpack.c.b16 %v1842, %v1840
        %v1889 = vpack.c.b16 %v1843, %v1841
        %v1890 = vpack.c.b16 %v1846, %v1844
        %v1891 = vpack.c.b16 %v1847, %v1845
        %v1892 = vpack.c.b16 %v1850, %v1848
        %v1893 = vpack.c.b16 %v1851, %v1849
        %v1894 = vpack.c.b16 %v1854, %v1852
        %v1895 = vpack.c.b16 %v1855, %v1853
        %v1896 = vpack.c.b16 %v1858, %v1856
        %v1897 = vpack.c.b16 %v1859, %v1857
        %v1898 = vpack.c.b16 %v1862, %v1860
        %v1899 = vpack.c.b16 %v1863, %v1861
        %v1900 = vpack.c.b16 %v1866, %v1864
        %v1901 = vpack.c.b16 %v1867, %v1865
        %v1902 = vpack.c.b16 %v1870, %v1868
        %v1903 = vpack.c.b16 %v1871, %v1869
        %1936 = vmatprep.subr.bf16.mxu0 %v1873
        %1937 = vmatpush1.bf16.msra.mxu0 %v1872
        %1938 = vmatprep.subr.bf16.mxu0 %v1875
        %1939 = vmatpush1.bf16.msra.mxu0 %v1874
        %1940 = vmatprep.subr.bf16.mxu0 %v1877
        %1941 = vmatpush1.bf16.msra.mxu0 %v1876
        %1942 = vmatprep.subr.bf16.mxu0 %v1879
        %1943 = vmatpush1.bf16.msra.mxu0 %v1878
        %1944 = vmatprep.subr.bf16.mxu0 %v1881
        %1945 = vmatpush1.bf16.msra.mxu0 %v1880
        %1946 = vmatprep.subr.bf16.mxu0 %v1883
        %1947 = vmatpush1.bf16.msra.mxu0 %v1882
        %1948 = vmatprep.subr.bf16.mxu0 %v1885
        %1949 = vmatpush1.bf16.msra.mxu0 %v1884
        %1950 = vmatprep.subr.bf16.mxu0 %v1887
        %1951 = vmatpush1.bf16.msra.mxu0 %v1886
        %1952 = vmatprep.subr.bf16.mxu0 %v1889
        %1953 = vmatpush1.bf16.msra.mxu0 %v1888
        %1954 = vmatprep.subr.bf16.mxu0 %v1891
        %1955 = vmatpush1.bf16.msra.mxu0 %v1890
        %1956 = vmatprep.subr.bf16.mxu0 %v1893
        %1957 = vmatpush1.bf16.msra.mxu0 %v1892
        %1958 = vmatprep.subr.bf16.mxu0 %v1895
        %1959 = vmatpush1.bf16.msra.mxu0 %v1894
        %1960 = vmatprep.subr.bf16.mxu0 %v1897
        %1961 = vmatpush1.bf16.msra.mxu0 %v1896
        %1962 = vmatprep.subr.bf16.mxu0 %v1899
        %1963 = vmatpush1.bf16.msra.mxu0 %v1898
        %1964 = vmatprep.subr.bf16.mxu0 %v1901
        %1965 = vmatpush1.bf16.msra.mxu0 %v1900
        %1966 = vmatprep.subr.bf16.mxu0 %v1903
        %1967 = vmatpush1.bf16.msra.mxu0 %v1902
        %1968 = vmatprep.mubr.bf16.mxu0 %v693
        %1969 = vmatmul.mubr.bf16.gmra.mrb[0].mxu0 %v692
        %v1970 = vpop.f32.mrb[0].mxu0
        %v1971 = vadd.f32 0.0, %v1970
        %v1972 = vpop.f32.mrb[0].mxu0
        %v1973 = vadd.f32 0.0, %v1972
        %v1974 = vpop.f32.mrb[0].mxu0
        %v1975 = vadd.f32 0.0, %v1974
        %v1976 = vpop.f32.mrb[0].mxu0
        %v1977 = vadd.f32 0.0, %v1976
        %1978 = vmatprep.mubr.bf16.mxu0 %v695
        %1979 = vmatmul.mubr.bf16.gmra.mrb[0].mxu0 %v694
        %v1980 = vpop.f32.mrb[0].mxu0
        %v1981 = vadd.f32 0.0, %v1980
        %v1982 = vpop.f32.mrb[0].mxu0
        %v1983 = vadd.f32 0.0, %v1982
        %v1984 = vpop.f32.mrb[0].mxu0
        %v1985 = vadd.f32 0.0, %v1984
        %v1986 = vpop.f32.mrb[0].mxu0
        %v1987 = vadd.f32 0.0, %v1986
        %1988 = vdwg.mxu0
        %v1989 = vmax.f32 %v1971, 1.0
        %v1990 = vmax.f32 %v1973, 1.0
        %v1991 = vmax.f32 %v1975, 1.0
        %v1992 = vmax.f32 %v1977, 1.0
        %v1993 = vmax.f32 %v1981, 1.0
        %v1994 = vmax.f32 %v1983, 1.0
        %v1995 = vmax.f32 %v1985, 1.0
        %v1996 = vmax.f32 %v1987, 1.0
        %v1997 = vrcp.pop %v1989
        %v1998 = vmul.f32 1.0, %v1997
        %v1999 = vrcp.pop %v1991
        %v2000 = vmul.f32 1.0, %v1999
        %v2001 = vrcp.pop %v1993
        %v2002 = vmul.f32 1.0, %v2001
        %v2003 = vrcp.pop %v1995
        %v2004 = vmul.f32 1.0, %v2003
        %2009 = vrot.lane.b32.xlu0 %v1998, 32
        %v2010 = vpop.permute.xlu0 %2009
        %2011 = vrot.lane.b32.xlu0 %v2000, 32
        %v2012 = vpop.permute.xlu0 %2011
        %2013 = vrot.lane.b32.xlu0 %v2002, 32
        %v2014 = vpop.permute.xlu0 %2013
        %2015 = vrot.lane.b32.xlu0 %v2004, 32
        %v2016 = vpop.permute.xlu0 %2015
        %v2021 = vmul.f32 %v1989, %v2010
        %v2022 = vmul.f32 %v1991, %v2012
        %v2023 = vmul.f32 %v1993, %v2014
        %v2024 = vmul.f32 %v1995, %v2016
        %v2025 = vlog2.pop %v2021
        %v2026 = vmul.f32 %v2025, 0.6931472
        %v2027 = vlog2.pop %v2022
        %v2028 = vmul.f32 %v2027, 0.6931472
        %v2029 = vlog2.pop %v2023
        %v2030 = vmul.f32 %v2029, 0.6931472
        %v2031 = vlog2.pop %v2024
        %v2032 = vmul.f32 %v2031, 0.6931472
        %v2033 = vmul.f32 %v2021, %v2026
        %v2034 = vmul.f32 %v2022, %v2028
        %v2035 = vmul.f32 %v2023, %v2030
        %v2036 = vmul.f32 %v2024, %v2032
        %v2037 = vsub.f32 0.0, %v2033
        %v2038 = vsub.f32 0.0, %v2034
        %v2039 = vsub.f32 0.0, %v2035
        %v2040 = vsub.f32 0.0, %v2036
        %2041 = vrot.lane.b32.xlu0 %v1998, 64
        %v2042 = vpop.permute.xlu0 %2041
        %2043 = vrot.lane.b32.xlu0 %v2000, 64
        %v2044 = vpop.permute.xlu0 %2043
        %2045 = vrot.lane.b32.xlu0 %v2002, 64
        %v2046 = vpop.permute.xlu0 %2045
        %2047 = vrot.lane.b32.xlu0 %v2004, 64
        %v2048 = vpop.permute.xlu0 %2047
        %v2053 = vmul.f32 %v1989, %v2042
        %v2054 = vmul.f32 %v1991, %v2044
        %v2055 = vmul.f32 %v1993, %v2046
        %v2056 = vmul.f32 %v1995, %v2048
        %v2057 = vlog2.pop %v2053
        %v2058 = vmul.f32 %v2057, 0.6931472
        %v2059 = vlog2.pop %v2054
        %v2060 = vmul.f32 %v2059, 0.6931472
        %v2061 = vlog2.pop %v2055
        %v2062 = vmul.f32 %v2061, 0.6931472
        %v2063 = vlog2.pop %v2056
        %v2064 = vmul.f32 %v2063, 0.6931472
        %v2065 = vmul.f32 %v2053, %v2058
        %v2066 = vmul.f32 %v2054, %v2060
        %v2067 = vmul.f32 %v2055, %v2062
        %v2068 = vmul.f32 %v2056, %v2064
        %2073 = vrot.lane.b32.xlu0 %v2065, 96
        %v2074 = vpop.permute.xlu0 %2073
        %2075 = vrot.lane.b32.xlu0 %v2066, 96
        %v2076 = vpop.permute.xlu0 %2075
        %2077 = vrot.lane.b32.xlu0 %v2067, 96
        %v2078 = vpop.permute.xlu0 %2077
        %2079 = vrot.lane.b32.xlu0 %v2068, 96
        %v2080 = vpop.permute.xlu0 %2079
        %v2085 = vsub.f32 %v2037, %v2074
        %v2086 = vsub.f32 %v2038, %v2076
        %v2087 = vsub.f32 %v2039, %v2078
        %v2088 = vsub.f32 %v2040, %v2080
        %2089 = vrot.lane.b32.xlu0 %v1998, 96
        %v2090 = vpop.permute.xlu0 %2089
        %2091 = vrot.lane.b32.xlu0 %v2000, 96
        %v2092 = vpop.permute.xlu0 %2091
        %2093 = vrot.lane.b32.xlu0 %v2002, 96
        %v2094 = vpop.permute.xlu0 %2093
        %2095 = vrot.lane.b32.xlu0 %v2004, 96
        %v2096 = vpop.permute.xlu0 %2095
        %v2101 = vmul.f32 %v1989, %v2090
        %v2102 = vmul.f32 %v1991, %v2092
        %v2103 = vmul.f32 %v1993, %v2094
        %v2104 = vmul.f32 %v1995, %v2096
        %v2105 = vlog2.pop %v2101
        %v2106 = vmul.f32 %v2105, 0.6931472
        %v2107 = vlog2.pop %v2102
        %v2108 = vmul.f32 %v2107, 0.6931472
        %v2109 = vlog2.pop %v2103
        %v2110 = vmul.f32 %v2109, 0.6931472
        %v2111 = vlog2.pop %v2104
        %v2112 = vmul.f32 %v2111, 0.6931472
        %v2113 = vmul.f32 %v2101, %v2106
        %v2114 = vmul.f32 %v2102, %v2108
        %v2115 = vmul.f32 %v2103, %v2110
        %v2116 = vmul.f32 %v2104, %v2112
        %2121 = vrot.lane.b32.xlu0 %v2113, 64
        %v2122 = vpop.permute.xlu0 %2121
        %2123 = vrot.lane.b32.xlu0 %v2114, 64
        %v2124 = vpop.permute.xlu0 %2123
        %2125 = vrot.lane.b32.xlu0 %v2115, 64
        %v2126 = vpop.permute.xlu0 %2125
        %2127 = vrot.lane.b32.xlu0 %v2116, 64
        %v2128 = vpop.permute.xlu0 %2127
        %v2133 = vsub.f32 %v2085, %v2122
        %v2134 = vsub.f32 %v2086, %v2124
        %v2135 = vsub.f32 %v2087, %v2126
        %v2136 = vsub.f32 %v2088, %v2128
        %v2137 = vmul.f32 %v1990, %v1998
        %v2138 = vmul.f32 %v1992, %v2000
        %v2139 = vmul.f32 %v1994, %v2002
        %v2140 = vmul.f32 %v1996, %v2004
        %v2141 = vlog2.pop %v2137
        %v2142 = vmul.f32 %v2141, 0.6931472
        %v2143 = vlog2.pop %v2138
        %v2144 = vmul.f32 %v2143, 0.6931472
        %v2145 = vlog2.pop %v2139
        %v2146 = vmul.f32 %v2145, 0.6931472
        %v2147 = vlog2.pop %v2140
        %v2148 = vmul.f32 %v2147, 0.6931472
        %v2149 = vmul.f32 %v2137, %v2142
        %v2150 = vmul.f32 %v2138, %v2144
        %v2151 = vmul.f32 %v2139, %v2146
        %v2152 = vmul.f32 %v2140, %v2148
        %2157 = vrot.lane.b32.xlu0 %v2149, 32
        %v2158 = vpop.permute.xlu0 %2157
        %2159 = vrot.lane.b32.xlu0 %v2150, 32
        %v2160 = vpop.permute.xlu0 %2159
        %2161 = vrot.lane.b32.xlu0 %v2151, 32
        %v2162 = vpop.permute.xlu0 %2161
        %2163 = vrot.lane.b32.xlu0 %v2152, 32
        %v2164 = vpop.permute.xlu0 %2163
        %v2169 = vsub.f32 %v2133, %v2158
        %v2170 = vsub.f32 %v2134, %v2160
        %v2171 = vsub.f32 %v2135, %v2162
        %v2172 = vsub.f32 %v2136, %v2164
        %v2173 = vmul.f32 %v1990, %v2010
        %v2174 = vmul.f32 %v1992, %v2012
        %v2175 = vmul.f32 %v1994, %v2014
        %v2176 = vmul.f32 %v1996, %v2016
        %v2177 = vlog2.pop %v2173
        %v2178 = vmul.f32 %v2177, 0.6931472
        %v2179 = vlog2.pop %v2174
        %v2180 = vmul.f32 %v2179, 0.6931472
        %v2181 = vlog2.pop %v2175
        %v2182 = vmul.f32 %v2181, 0.6931472
        %v2183 = vlog2.pop %v2176
        %v2184 = vmul.f32 %v2183, 0.6931472
        %v2185 = vmul.f32 %v2173, %v2178
        %v2186 = vmul.f32 %v2174, %v2180
        %v2187 = vmul.f32 %v2175, %v2182
        %v2188 = vmul.f32 %v2176, %v2184
        %v2189 = vsub.f32 %v2169, %v2185
        %v2190 = vsub.f32 %v2170, %v2186
        %v2191 = vsub.f32 %v2171, %v2187
        %v2192 = vsub.f32 %v2172, %v2188
        %v2193 = vmul.f32 %v1990, %v2042
        %v2194 = vmul.f32 %v1992, %v2044
        %v2195 = vmul.f32 %v1994, %v2046
        %v2196 = vmul.f32 %v1996, %v2048
        %v2197 = vlog2.pop %v2193
        %v2198 = vmul.f32 %v2197, 0.6931472
        %v2199 = vlog2.pop %v2194
        %v2200 = vmul.f32 %v2199, 0.6931472
        %v2201 = vlog2.pop %v2195
        %v2202 = vmul.f32 %v2201, 0.6931472
        %v2203 = vlog2.pop %v2196
        %v2204 = vmul.f32 %v2203, 0.6931472
        %v2205 = vmul.f32 %v2193, %v2198
        %v2206 = vmul.f32 %v2194, %v2200
        %v2207 = vmul.f32 %v2195, %v2202
        %v2208 = vmul.f32 %v2196, %v2204
        %2213 = vrot.lane.b32.xlu0 %v2205, 96
        %v2214 = vpop.permute.xlu0 %2213
        %2215 = vrot.lane.b32.xlu0 %v2206, 96
        %v2216 = vpop.permute.xlu0 %2215
        %2217 = vrot.lane.b32.xlu0 %v2207, 96
        %v2218 = vpop.permute.xlu0 %2217
        %2219 = vrot.lane.b32.xlu0 %v2208, 96
        %v2220 = vpop.permute.xlu0 %2219
        %v2225 = vsub.f32 %v2189, %v2214
        %v2226 = vsub.f32 %v2190, %v2216
        %v2227 = vsub.f32 %v2191, %v2218
        %v2228 = vsub.f32 %v2192, %v2220
        %v2229 = vmul.f32 %v1990, %v2090
        %v2230 = vmul.f32 %v1992, %v2092
        %v2231 = vmul.f32 %v1994, %v2094
        %v2232 = vmul.f32 %v1996, %v2096
        %v2233 = vlog2.pop %v2229
        %v2234 = vmul.f32 %v2233, 0.6931472
        %v2235 = vlog2.pop %v2230
        %v2236 = vmul.f32 %v2235, 0.6931472
        %v2237 = vlog2.pop %v2231
        %v2238 = vmul.f32 %v2237, 0.6931472
        %v2239 = vlog2.pop %v2232
        %v2240 = vmul.f32 %v2239, 0.6931472
        %v2241 = vmul.f32 %v2229, %v2234
        %v2242 = vmul.f32 %v2230, %v2236
        %v2243 = vmul.f32 %v2231, %v2238
        %v2244 = vmul.f32 %v2232, %v2240
        %2249 = vrot.lane.b32.xlu0 %v2241, 64
        %v2250 = vpop.permute.xlu0 %2249
        %2251 = vrot.lane.b32.xlu0 %v2242, 64
        %v2252 = vpop.permute.xlu0 %2251
        %2253 = vrot.lane.b32.xlu0 %v2243, 64
        %v2254 = vpop.permute.xlu0 %2253
        %2255 = vrot.lane.b32.xlu0 %v2244, 64
        %v2256 = vpop.permute.xlu0 %2255
        %v2261 = vsub.f32 %v2225, %v2250
        %v2262 = vsub.f32 %v2226, %v2252
        %v2263 = vsub.f32 %v2227, %v2254
        %v2264 = vsub.f32 %v2228, %v2256
        %s2265 = scalar_lea.vmem [#allocation2], 768
        %v2266 = vld [vmem:[%s2265] sm:$0xff]
        %v2267 = vld [vmem:[%s2265 + $0x8] sm:$0xff]
        %v2268 = vld [vmem:[%s2265 + $0x10] sm:$0xff]
        %v2269 = vld [vmem:[%s2265 + $0x18] sm:$0xff]
        %v2270 = vld [vmem:[%s2265 + $0x20] sm:$0xff]
        %v2271 = vld [vmem:[%s2265 + $0x28] sm:$0xff]
        %v2272 = vld [vmem:[%s2265 + $0x30] sm:$0xff]
        %v2273 = vld [vmem:[%s2265 + $0x38] sm:$0xff]
        %v2274 = vld [vmem:[%s2265 + $0x40] sm:$0xff]
        %v2275 = vld [vmem:[%s2265 + $0x48] sm:$0xff]
        %v2276 = vld [vmem:[%s2265 + $0x50] sm:$0xff]
        %v2277 = vld [vmem:[%s2265 + $0x58] sm:$0xff]
        %v2278 = vld [vmem:[%s2265 + $0x60] sm:$0xff]
        %v2279 = vld [vmem:[%s2265 + $0x68] sm:$0xff]
        %v2280 = vld [vmem:[%s2265 + $0x70] sm:$0xff]
        %v2281 = vld [vmem:[%s2265 + $0x78] sm:$0xff]
        %v2282 = vld [vmem:[%s2265 + $0x80] sm:$0xff]
        %v2283 = vld [vmem:[%s2265 + $0x88] sm:$0xff]
        %v2284 = vld [vmem:[%s2265 + $0x90] sm:$0xff]
        %v2285 = vld [vmem:[%s2265 + $0x98] sm:$0xff]
        %v2286 = vld [vmem:[%s2265 + $0xa0] sm:$0xff]
        %v2287 = vld [vmem:[%s2265 + $0xa8] sm:$0xff]
        %v2288 = vld [vmem:[%s2265 + $0xb0] sm:$0xff]
        %v2289 = vld [vmem:[%s2265 + $0xb8] sm:$0xff]
        %v2290 = vld [vmem:[%s2265 + $0xc0] sm:$0xff]
        %v2291 = vld [vmem:[%s2265 + $0xc8] sm:$0xff]
        %v2292 = vld [vmem:[%s2265 + $0xd0] sm:$0xff]
        %v2293 = vld [vmem:[%s2265 + $0xd8] sm:$0xff]
        %v2294 = vld [vmem:[%s2265 + $0xe0] sm:$0xff]
        %v2295 = vld [vmem:[%s2265 + $0xe8] sm:$0xff]
        %v2296 = vld [vmem:[%s2265 + $0xf0] sm:$0xff]
        %v2297 = vld [vmem:[%s2265 + $0xf8] sm:$0xff]
        %v2330 = vunpack.c.l.b16 %v2266
        %v2331 = vunpack.c.h.b16 %v2266
        %v2332 = vunpack.c.l.b16 %v2267
        %v2333 = vunpack.c.h.b16 %v2267
        %v2334 = vunpack.c.l.b16 %v2268
        %v2335 = vunpack.c.h.b16 %v2268
        %v2336 = vunpack.c.l.b16 %v2269
        %v2337 = vunpack.c.h.b16 %v2269
        %v2338 = vunpack.c.l.b16 %v2270
        %v2339 = vunpack.c.h.b16 %v2270
        %v2340 = vunpack.c.l.b16 %v2271
        %v2341 = vunpack.c.h.b16 %v2271
        %v2342 = vunpack.c.l.b16 %v2272
        %v2343 = vunpack.c.h.b16 %v2272
        %v2344 = vunpack.c.l.b16 %v2273
        %v2345 = vunpack.c.h.b16 %v2273
        %v2346 = vunpack.c.l.b16 %v2274
        %v2347 = vunpack.c.h.b16 %v2274
        %v2348 = vunpack.c.l.b16 %v2275
        %v2349 = vunpack.c.h.b16 %v2275
        %v2350 = vunpack.c.l.b16 %v2276
        %v2351 = vunpack.c.h.b16 %v2276
        %v2352 = vunpack.c.l.b16 %v2277
        %v2353 = vunpack.c.h.b16 %v2277
        %v2354 = vunpack.c.l.b16 %v2278
        %v2355 = vunpack.c.h.b16 %v2278
        %v2356 = vunpack.c.l.b16 %v2279
        %v2357 = vunpack.c.h.b16 %v2279
        %v2358 = vunpack.c.l.b16 %v2280
        %v2359 = vunpack.c.h.b16 %v2280
        %v2360 = vunpack.c.l.b16 %v2281
        %v2361 = vunpack.c.h.b16 %v2281
        %v2362 = vunpack.c.l.b16 %v2282
        %v2363 = vunpack.c.h.b16 %v2282
        %v2364 = vunpack.c.l.b16 %v2283
        %v2365 = vunpack.c.h.b16 %v2283
        %v2366 = vunpack.c.l.b16 %v2284
        %v2367 = vunpack.c.h.b16 %v2284
        %v2368 = vunpack.c.l.b16 %v2285
        %v2369 = vunpack.c.h.b16 %v2285
        %v2370 = vunpack.c.l.b16 %v2286
        %v2371 = vunpack.c.h.b16 %v2286
        %v2372 = vunpack.c.l.b16 %v2287
        %v2373 = vunpack.c.h.b16 %v2287
        %v2374 = vunpack.c.l.b16 %v2288
        %v2375 = vunpack.c.h.b16 %v2288
        %v2376 = vunpack.c.l.b16 %v2289
        %v2377 = vunpack.c.h.b16 %v2289
        %v2378 = vunpack.c.l.b16 %v2290
        %v2379 = vunpack.c.h.b16 %v2290
        %v2380 = vunpack.c.l.b16 %v2291
        %v2381 = vunpack.c.h.b16 %v2291
        %v2382 = vunpack.c.l.b16 %v2292
        %v2383 = vunpack.c.h.b16 %v2292
        %v2384 = vunpack.c.l.b16 %v2293
        %v2385 = vunpack.c.h.b16 %v2293
        %v2386 = vunpack.c.l.b16 %v2294
        %v2387 = vunpack.c.h.b16 %v2294
        %v2388 = vunpack.c.l.b16 %v2295
        %v2389 = vunpack.c.h.b16 %v2295
        %v2390 = vunpack.c.l.b16 %v2296
        %v2391 = vunpack.c.h.b16 %v2296
        %v2392 = vunpack.c.l.b16 %v2297
        %v2393 = vunpack.c.h.b16 %v2297
        %v2394 = vpack.c.b16 %v2332, %v2330
        %v2395 = vpack.c.b16 %v2333, %v2331
        %v2396 = vpack.c.b16 %v2336, %v2334
        %v2397 = vpack.c.b16 %v2337, %v2335
        %v2398 = vpack.c.b16 %v2340, %v2338
        %v2399 = vpack.c.b16 %v2341, %v2339
        %v2400 = vpack.c.b16 %v2344, %v2342
        %v2401 = vpack.c.b16 %v2345, %v2343
        %v2402 = vpack.c.b16 %v2348, %v2346
        %v2403 = vpack.c.b16 %v2349, %v2347
        %v2404 = vpack.c.b16 %v2352, %v2350
        %v2405 = vpack.c.b16 %v2353, %v2351
        %v2406 = vpack.c.b16 %v2356, %v2354
        %v2407 = vpack.c.b16 %v2357, %v2355
        %v2408 = vpack.c.b16 %v2360, %v2358
        %v2409 = vpack.c.b16 %v2361, %v2359
        %v2410 = vpack.c.b16 %v2364, %v2362
        %v2411 = vpack.c.b16 %v2365, %v2363
        %v2412 = vpack.c.b16 %v2368, %v2366
        %v2413 = vpack.c.b16 %v2369, %v2367
        %v2414 = vpack.c.b16 %v2372, %v2370
        %v2415 = vpack.c.b16 %v2373, %v2371
        %v2416 = vpack.c.b16 %v2376, %v2374
        %v2417 = vpack.c.b16 %v2377, %v2375
        %v2418 = vpack.c.b16 %v2380, %v2378
        %v2419 = vpack.c.b16 %v2381, %v2379
        %v2420 = vpack.c.b16 %v2384, %v2382
        %v2421 = vpack.c.b16 %v2385, %v2383
        %v2422 = vpack.c.b16 %v2388, %v2386
        %v2423 = vpack.c.b16 %v2389, %v2387
        %v2424 = vpack.c.b16 %v2392, %v2390
        %v2425 = vpack.c.b16 %v2393, %v2391
        %2458 = vmatprep.subr.bf16.mxu0 %v2395
        %2459 = vmatpush1.bf16.msra.mxu0 %v2394
        %2460 = vmatprep.subr.bf16.mxu0 %v2397
        %2461 = vmatpush1.bf16.msra.mxu0 %v2396
        %2462 = vmatprep.subr.bf16.mxu0 %v2399
        %2463 = vmatpush1.bf16.msra.mxu0 %v2398
        %2464 = vmatprep.subr.bf16.mxu0 %v2401
        %2465 = vmatpush1.bf16.msra.mxu0 %v2400
        %2466 = vmatprep.subr.bf16.mxu0 %v2403
        %2467 = vmatpush1.bf16.msra.mxu0 %v2402
        %2468 = vmatprep.subr.bf16.mxu0 %v2405
        %2469 = vmatpush1.bf16.msra.mxu0 %v2404
        %2470 = vmatprep.subr.bf16.mxu0 %v2407
        %2471 = vmatpush1.bf16.msra.mxu0 %v2406
        %2472 = vmatprep.subr.bf16.mxu0 %v2409
        %2473 = vmatpush1.bf16.msra.mxu0 %v2408
        %2474 = vmatprep.subr.bf16.mxu0 %v2411
        %2475 = vmatpush1.bf16.msra.mxu0 %v2410
        %2476 = vmatprep.subr.bf16.mxu0 %v2413
        %2477 = vmatpush1.bf16.msra.mxu0 %v2412
        %2478 = vmatprep.subr.bf16.mxu0 %v2415
        %2479 = vmatpush1.bf16.msra.mxu0 %v2414
        %2480 = vmatprep.subr.bf16.mxu0 %v2417
        %2481 = vmatpush1.bf16.msra.mxu0 %v2416
        %2482 = vmatprep.subr.bf16.mxu0 %v2419
        %2483 = vmatpush1.bf16.msra.mxu0 %v2418
        %2484 = vmatprep.subr.bf16.mxu0 %v2421
        %2485 = vmatpush1.bf16.msra.mxu0 %v2420
        %2486 = vmatprep.subr.bf16.mxu0 %v2423
        %2487 = vmatpush1.bf16.msra.mxu0 %v2422
        %2488 = vmatprep.subr.bf16.mxu0 %v2425
        %2489 = vmatpush1.bf16.msra.mxu0 %v2424
        %2490 = vmatprep.mubr.bf16.mxu0 %v697
        %2491 = vmatmul.mubr.bf16.gmra.mrb[0].mxu0 %v696
        %v2492 = vpop.f32.mrb[0].mxu0
        %v2493 = vadd.f32 0.0, %v2492
        %v2494 = vpop.f32.mrb[0].mxu0
        %v2495 = vadd.f32 0.0, %v2494
        %v2496 = vpop.f32.mrb[0].mxu0
        %v2497 = vadd.f32 0.0, %v2496
        %v2498 = vpop.f32.mrb[0].mxu0
        %v2499 = vadd.f32 0.0, %v2498
        %2500 = vmatprep.mubr.bf16.mxu0 %v699
        %2501 = vmatmul.mubr.bf16.gmra.mrb[0].mxu0 %v698
        %v2502 = vpop.f32.mrb[0].mxu0
        %v2503 = vadd.f32 0.0, %v2502
        %v2504 = vpop.f32.mrb[0].mxu0
        %v2505 = vadd.f32 0.0, %v2504
        %v2506 = vpop.f32.mrb[0].mxu0
        %v2507 = vadd.f32 0.0, %v2506
        %v2508 = vpop.f32.mrb[0].mxu0
        %v2509 = vadd.f32 0.0, %v2508
        %2510 = vdwg.mxu0
        %v2511 = vmax.f32 %v2493, 1.0
        %v2512 = vmax.f32 %v2495, 1.0
        %v2513 = vmax.f32 %v2497, 1.0
        %v2514 = vmax.f32 %v2499, 1.0
        %v2515 = vmax.f32 %v2503, 1.0
        %v2516 = vmax.f32 %v2505, 1.0
        %v2517 = vmax.f32 %v2507, 1.0
        %v2518 = vmax.f32 %v2509, 1.0
        %v2519 = vrcp.pop %v2511
        %v2520 = vmul.f32 1.0, %v2519
        %v2521 = vrcp.pop %v2513
        %v2522 = vmul.f32 1.0, %v2521
        %v2523 = vrcp.pop %v2515
        %v2524 = vmul.f32 1.0, %v2523
        %v2525 = vrcp.pop %v2517
        %v2526 = vmul.f32 1.0, %v2525
        %2531 = vrot.lane.b32.xlu0 %v2520, 32
        %v2532 = vpop.permute.xlu0 %2531
        %2533 = vrot.lane.b32.xlu0 %v2522, 32
        %v2534 = vpop.permute.xlu0 %2533
        %2535 = vrot.lane.b32.xlu0 %v2524, 32
        %v2536 = vpop.permute.xlu0 %2535
        %2537 = vrot.lane.b32.xlu0 %v2526, 32
        %v2538 = vpop.permute.xlu0 %2537
        %v2543 = vmul.f32 %v2511, %v2532
        %v2544 = vmul.f32 %v2513, %v2534
        %v2545 = vmul.f32 %v2515, %v2536
        %v2546 = vmul.f32 %v2517, %v2538
        %v2547 = vlog2.pop %v2543
        %v2548 = vmul.f32 %v2547, 0.6931472
        %v2549 = vlog2.pop %v2544
        %v2550 = vmul.f32 %v2549, 0.6931472
        %v2551 = vlog2.pop %v2545
        %v2552 = vmul.f32 %v2551, 0.6931472
        %v2553 = vlog2.pop %v2546
        %v2554 = vmul.f32 %v2553, 0.6931472
        %v2555 = vmul.f32 %v2543, %v2548
        %v2556 = vmul.f32 %v2544, %v2550
        %v2557 = vmul.f32 %v2545, %v2552
        %v2558 = vmul.f32 %v2546, %v2554
        %v2559 = vsub.f32 0.0, %v2555
        %v2560 = vsub.f32 0.0, %v2556
        %v2561 = vsub.f32 0.0, %v2557
        %v2562 = vsub.f32 0.0, %v2558
        %2563 = vrot.lane.b32.xlu0 %v2520, 64
        %v2564 = vpop.permute.xlu0 %2563
        %2565 = vrot.lane.b32.xlu0 %v2522, 64
        %v2566 = vpop.permute.xlu0 %2565
        %2567 = vrot.lane.b32.xlu0 %v2524, 64
        %v2568 = vpop.permute.xlu0 %2567
        %2569 = vrot.lane.b32.xlu0 %v2526, 64
        %v2570 = vpop.permute.xlu0 %2569
        %v2575 = vmul.f32 %v2511, %v2564
        %v2576 = vmul.f32 %v2513, %v2566
        %v2577 = vmul.f32 %v2515, %v2568
        %v2578 = vmul.f32 %v2517, %v2570
        %v2579 = vlog2.pop %v2575
        %v2580 = vmul.f32 %v2579, 0.6931472
        %v2581 = vlog2.pop %v2576
        %v2582 = vmul.f32 %v2581, 0.6931472
        %v2583 = vlog2.pop %v2577
        %v2584 = vmul.f32 %v2583, 0.6931472
        %v2585 = vlog2.pop %v2578
        %v2586 = vmul.f32 %v2585, 0.6931472
        %v2587 = vmul.f32 %v2575, %v2580
        %v2588 = vmul.f32 %v2576, %v2582
        %v2589 = vmul.f32 %v2577, %v2584
        %v2590 = vmul.f32 %v2578, %v2586
        %2595 = vrot.lane.b32.xlu0 %v2587, 96
        %v2596 = vpop.permute.xlu0 %2595
        %2597 = vrot.lane.b32.xlu0 %v2588, 96
        %v2598 = vpop.permute.xlu0 %2597
        %2599 = vrot.lane.b32.xlu0 %v2589, 96
        %v2600 = vpop.permute.xlu0 %2599
        %2601 = vrot.lane.b32.xlu0 %v2590, 96
        %v2602 = vpop.permute.xlu0 %2601
        %v2607 = vsub.f32 %v2559, %v2596
        %v2608 = vsub.f32 %v2560, %v2598
        %v2609 = vsub.f32 %v2561, %v2600
        %v2610 = vsub.f32 %v2562, %v2602
        %2611 = vrot.lane.b32.xlu0 %v2520, 96
        %v2612 = vpop.permute.xlu0 %2611
        %2613 = vrot.lane.b32.xlu0 %v2522, 96
        %v2614 = vpop.permute.xlu0 %2613
        %2615 = vrot.lane.b32.xlu0 %v2524, 96
        %v2616 = vpop.permute.xlu0 %2615
        %2617 = vrot.lane.b32.xlu0 %v2526, 96
        %v2618 = vpop.permute.xlu0 %2617
        %v2623 = vmul.f32 %v2511, %v2612
        %v2624 = vmul.f32 %v2513, %v2614
        %v2625 = vmul.f32 %v2515, %v2616
        %v2626 = vmul.f32 %v2517, %v2618
        %v2627 = vlog2.pop %v2623
        %v2628 = vmul.f32 %v2627, 0.6931472
        %v2629 = vlog2.pop %v2624
        %v2630 = vmul.f32 %v2629, 0.6931472
        %v2631 = vlog2.pop %v2625
        %v2632 = vmul.f32 %v2631, 0.6931472
        %v2633 = vlog2.pop %v2626
        %v2634 = vmul.f32 %v2633, 0.6931472
        %v2635 = vmul.f32 %v2623, %v2628
        %v2636 = vmul.f32 %v2624, %v2630
        %v2637 = vmul.f32 %v2625, %v2632
        %v2638 = vmul.f32 %v2626, %v2634
        %2643 = vrot.lane.b32.xlu0 %v2635, 64
        %v2644 = vpop.permute.xlu0 %2643
        %2645 = vrot.lane.b32.xlu0 %v2636, 64
        %v2646 = vpop.permute.xlu0 %2645
        %2647 = vrot.lane.b32.xlu0 %v2637, 64
        %v2648 = vpop.permute.xlu0 %2647
        %2649 = vrot.lane.b32.xlu0 %v2638, 64
        %v2650 = vpop.permute.xlu0 %2649
        %v2655 = vsub.f32 %v2607, %v2644
        %v2656 = vsub.f32 %v2608, %v2646
        %v2657 = vsub.f32 %v2609, %v2648
        %v2658 = vsub.f32 %v2610, %v2650
        %v2659 = vmul.f32 %v2512, %v2520
        %v2660 = vmul.f32 %v2514, %v2522
        %v2661 = vmul.f32 %v2516, %v2524
        %v2662 = vmul.f32 %v2518, %v2526
        %v2663 = vlog2.pop %v2659
        %v2664 = vmul.f32 %v2663, 0.6931472
        %v2665 = vlog2.pop %v2660
        %v2666 = vmul.f32 %v2665, 0.6931472
        %v2667 = vlog2.pop %v2661
        %v2668 = vmul.f32 %v2667, 0.6931472
        %v2669 = vlog2.pop %v2662
        %v2670 = vmul.f32 %v2669, 0.6931472
        %v2671 = vmul.f32 %v2659, %v2664
        %v2672 = vmul.f32 %v2660, %v2666
        %v2673 = vmul.f32 %v2661, %v2668
        %v2674 = vmul.f32 %v2662, %v2670
        %2679 = vrot.lane.b32.xlu0 %v2671, 32
        %v2680 = vpop.permute.xlu0 %2679
        %2681 = vrot.lane.b32.xlu0 %v2672, 32
        %v2682 = vpop.permute.xlu0 %2681
        %2683 = vrot.lane.b32.xlu0 %v2673, 32
        %v2684 = vpop.permute.xlu0 %2683
        %2685 = vrot.lane.b32.xlu0 %v2674, 32
        %v2686 = vpop.permute.xlu0 %2685
        %v2691 = vsub.f32 %v2655, %v2680
        %v2692 = vsub.f32 %v2656, %v2682
        %v2693 = vsub.f32 %v2657, %v2684
        %v2694 = vsub.f32 %v2658, %v2686
        %v2695 = vmul.f32 %v2512, %v2532
        %v2696 = vmul.f32 %v2514, %v2534
        %v2697 = vmul.f32 %v2516, %v2536
        %v2698 = vmul.f32 %v2518, %v2538
        %v2699 = vlog2.pop %v2695
        %v2700 = vmul.f32 %v2699, 0.6931472
        %v2701 = vlog2.pop %v2696
        %v2702 = vmul.f32 %v2701, 0.6931472
        %v2703 = vlog2.pop %v2697
        %v2704 = vmul.f32 %v2703, 0.6931472
        %v2705 = vlog2.pop %v2698
        %v2706 = vmul.f32 %v2705, 0.6931472
        %v2707 = vmul.f32 %v2695, %v2700
        %v2708 = vmul.f32 %v2696, %v2702
        %v2709 = vmul.f32 %v2697, %v2704
        %v2710 = vmul.f32 %v2698, %v2706
        %v2711 = vsub.f32 %v2691, %v2707
        %v2712 = vsub.f32 %v2692, %v2708
        %v2713 = vsub.f32 %v2693, %v2709
        %v2714 = vsub.f32 %v2694, %v2710
        %v2715 = vmul.f32 %v2512, %v2564
        %v2716 = vmul.f32 %v2514, %v2566
        %v2717 = vmul.f32 %v2516, %v2568
        %v2718 = vmul.f32 %v2518, %v2570
        %v2719 = vlog2.pop %v2715
        %v2720 = vmul.f32 %v2719, 0.6931472
        %v2721 = vlog2.pop %v2716
        %v2722 = vmul.f32 %v2721, 0.6931472
        %v2723 = vlog2.pop %v2717
        %v2724 = vmul.f32 %v2723, 0.6931472
        %v2725 = vlog2.pop %v2718
        %v2726 = vmul.f32 %v2725, 0.6931472
        %v2727 = vmul.f32 %v2715, %v2720
        %v2728 = vmul.f32 %v2716, %v2722
        %v2729 = vmul.f32 %v2717, %v2724
        %v2730 = vmul.f32 %v2718, %v2726
        %2735 = vrot.lane.b32.xlu0 %v2727, 96
        %v2736 = vpop.permute.xlu0 %2735
        %2737 = vrot.lane.b32.xlu0 %v2728, 96
        %v2738 = vpop.permute.xlu0 %2737
        %2739 = vrot.lane.b32.xlu0 %v2729, 96
        %v2740 = vpop.permute.xlu0 %2739
        %2741 = vrot.lane.b32.xlu0 %v2730, 96
        %v2742 = vpop.permute.xlu0 %2741
        %v2747 = vsub.f32 %v2711, %v2736
        %v2748 = vsub.f32 %v2712, %v2738
        %v2749 = vsub.f32 %v2713, %v2740
        %v2750 = vsub.f32 %v2714, %v2742
        %v2751 = vmul.f32 %v2512, %v2612
        %v2752 = vmul.f32 %v2514, %v2614
        %v2753 = vmul.f32 %v2516, %v2616
        %v2754 = vmul.f32 %v2518, %v2618
        %v2755 = vlog2.pop %v2751
        %v2756 = vmul.f32 %v2755, 0.6931472
        %v2757 = vlog2.pop %v2752
        %v2758 = vmul.f32 %v2757, 0.6931472
        %v2759 = vlog2.pop %v2753
        %v2760 = vmul.f32 %v2759, 0.6931472
        %v2761 = vlog2.pop %v2754
        %v2762 = vmul.f32 %v2761, 0.6931472
        %v2763 = vmul.f32 %v2751, %v2756
        %v2764 = vmul.f32 %v2752, %v2758
        %v2765 = vmul.f32 %v2753, %v2760
        %v2766 = vmul.f32 %v2754, %v2762
        %2771 = vrot.lane.b32.xlu0 %v2763, 64
        %v2772 = vpop.permute.xlu0 %2771
        %2773 = vrot.lane.b32.xlu0 %v2764, 64
        %v2774 = vpop.permute.xlu0 %2773
        %2775 = vrot.lane.b32.xlu0 %v2765, 64
        %v2776 = vpop.permute.xlu0 %2775
        %2777 = vrot.lane.b32.xlu0 %v2766, 64
        %v2778 = vpop.permute.xlu0 %2777
        %v2783 = vsub.f32 %v2747, %v2772
        %v2784 = vsub.f32 %v2748, %v2774
        %v2785 = vsub.f32 %v2749, %v2776
        %v2786 = vsub.f32 %v2750, %v2778
        %2791 = vrot.lane.b32.xlu0 %v1217, 96
        %v2792 = vpop.permute.xlu0 %2791
        %2793 = vrot.lane.b32.xlu0 %v1218, 96
        %v2794 = vpop.permute.xlu0 %2793
        %2795 = vrot.lane.b32.xlu0 %v1219, 96
        %v2796 = vpop.permute.xlu0 %2795
        %2797 = vrot.lane.b32.xlu0 %v1220, 96
        %v2798 = vpop.permute.xlu0 %2797
        %2807 = vrot.lane.b32.xlu0 %v2261, 32
        %v2808 = vpop.permute.xlu0 %2807
        %2809 = vrot.lane.b32.xlu0 %v2262, 32
        %v2810 = vpop.permute.xlu0 %2809
        %2811 = vrot.lane.b32.xlu0 %v2263, 32
        %v2812 = vpop.permute.xlu0 %2811
        %2813 = vrot.lane.b32.xlu0 %v2264, 32
        %v2814 = vpop.permute.xlu0 %2813
        %2823 = vrot.lane.b32.xlu0 %v2783, 64
        %v2824 = vpop.permute.xlu0 %2823
        %2825 = vrot.lane.b32.xlu0 %v2784, 64
        %v2826 = vpop.permute.xlu0 %2825
        %2827 = vrot.lane.b32.xlu0 %v2785, 64
        %v2828 = vpop.permute.xlu0 %2827
        %2829 = vrot.lane.b32.xlu0 %v2786, 64
        %v2830 = vpop.permute.xlu0 %2829
        %v2835 = vsel %vm456, %v2792, %v1739
        %v2836 = vsel %vm456, %v2794, %v1740
        %v2837 = vsel %vm456, %v2796, %v1741
        %v2838 = vsel %vm456, %v2798, %v1742
        %v2839 = vsel %vm463, %v2835, %v2808
        %v2840 = vsel %vm463, %v2836, %v2810
        %v2841 = vsel %vm463, %v2837, %v2812
        %v2842 = vsel %vm463, %v2838, %v2814
        %v2843 = vsel %vm468, %v2839, %v2824
        %v2844 = vsel %vm468, %v2840, %v2826
        %v2845 = vsel %vm468, %v2841, %v2828
        %v2846 = vsel %vm468, %v2842, %v2830
        %2847 = vst [vmem:[%s278] sm:$0xff] %v2843
        %2848 = vst [vmem:[%s278 + $0x8] sm:$0xff] %v2844
        %2849 = vst [vmem:[%s278 + $0x10] sm:$0xff] %v2845
        %2850 = vst [vmem:[%s278 + $0x18] sm:$0xff] %v2846
        %v2851 = vld [vmem:[%s3] sm:$0xf]
        %v2852 = vld [vmem:[%s3 + $0x4] sm:$0xf]
        %v2853 = vld [vmem:[%s3 + $0x8] sm:$0xf]
        %v2854 = vld [vmem:[%s3 + $0xc] sm:$0xf]
        %v2855 = vld [vmem:[%s3 + $0x10] sm:$0xf]
        %v2856 = vld [vmem:[%s3 + $0x14] sm:$0xf]
        %v2857 = vld [vmem:[%s3 + $0x18] sm:$0xf]
        %v2858 = vld [vmem:[%s3 + $0x1c] sm:$0xf]
        %v2867 = vunpack.c.l.b16 %v2851
        %v2868 = vunpack.c.l.b16 %v2852
        %v2869 = vunpack.c.l.b16 %v2853
        %v2870 = vunpack.c.l.b16 %v2854
        %v2871 = vunpack.c.l.b16 %v2855
        %v2872 = vunpack.c.l.b16 %v2856
        %v2873 = vunpack.c.l.b16 %v2857
        %v2874 = vunpack.c.l.b16 %v2858
        %v2875 = vpack.c.b16 %v2868, %v2867
        %v2876 = vpack.c.b16 %v2870, %v2869
        %v2877 = vpack.c.b16 %v2872, %v2871
        %v2878 = vpack.c.b16 %v2874, %v2873
        %v2880 = vsel %vm456, %v2875, 0
        %v2883 = vsel %vm456, %v2876, 0
        %v2886 = vsel %vm456, %v2877, 0
        %v2889 = vsel %vm456, %v2878, 0
        %2891 = vmatprep.subr.bf16.mxu0 %v486
        %2892 = vmatpush1.bf16.msra.mxu0 %v470
        %2893 = vmatprep.subr.bf16.mxu0 %v489
        %2894 = vmatpush1.bf16.msra.mxu0 %v473
        %2895 = vmatprep.subr.bf16.mxu0 0
        %2896 = vmatpush1.bf16.msra.mxu0 0
        %2897 = vmatprep.subr.bf16.mxu0 0
        %2898 = vmatpush1.bf16.msra.mxu0 0
        %2899 = vmatprep.subr.bf16.mxu0 0
        %2900 = vmatpush1.bf16.msra.mxu0 0
        %2901 = vmatprep.subr.bf16.mxu0 0
        %2902 = vmatpush1.bf16.msra.mxu0 0
        %2903 = vmatprep.subr.bf16.mxu0 0
        %2904 = vmatpush1.bf16.msra.mxu0 0
        %2905 = vmatprep.subr.bf16.mxu0 0
        %2906 = vmatpush1.bf16.msra.mxu0 0
        %2907 = vmatprep.subr.bf16.mxu0 0
        %2908 = vmatpush1.bf16.msra.mxu0 0
        %2909 = vmatprep.subr.bf16.mxu0 0
        %2910 = vmatpush1.bf16.msra.mxu0 0
        %2911 = vmatprep.subr.bf16.mxu0 0
        %2912 = vmatpush1.bf16.msra.mxu0 0
        %2913 = vmatprep.subr.bf16.mxu0 0
        %2914 = vmatpush1.bf16.msra.mxu0 0
        %2915 = vmatprep.subr.bf16.mxu0 0
        %2916 = vmatpush1.bf16.msra.mxu0 0
        %2917 = vmatprep.subr.bf16.mxu0 0
        %2918 = vmatpush1.bf16.msra.mxu0 0
        %2919 = vmatprep.subr.bf16.mxu0 0
        %2920 = vmatpush1.bf16.msra.mxu0 0
        %2921 = vmatprep.subr.bf16.mxu0 0
        %2922 = vmatpush1.bf16.msra.mxu0 0
        %2923 = vmatprep.mubr.bf16.mxu0 0
        %2924 = vmatmul.mubr.bf16.gmra.mrb[0].mxu0 %v2880
        %v2925 = vpop.f32.mrb[0].mxu0
        %v2926 = vadd.f32 0.0, %v2925
        %v2927 = vpop.f32.mrb[0].mxu0
        %v2928 = vadd.f32 0.0, %v2927
        %v2929 = vpop.f32.mrb[0].mxu0
        %v2930 = vadd.f32 0.0, %v2929
        %v2931 = vpop.f32.mrb[0].mxu0
        %v2932 = vadd.f32 0.0, %v2931
        %2933 = vmatprep.mubr.bf16.mxu0 0
        %2934 = vmatmul.mubr.bf16.gmra.mrb[0].mxu0 %v2883
        %v2935 = vpop.f32.mrb[0].mxu0
        %v2936 = vadd.f32 0.0, %v2935
        %v2937 = vpop.f32.mrb[0].mxu0
        %v2938 = vadd.f32 0.0, %v2937
        %v2939 = vpop.f32.mrb[0].mxu0
        %v2940 = vadd.f32 0.0, %v2939
        %v2941 = vpop.f32.mrb[0].mxu0
        %v2942 = vadd.f32 0.0, %v2941
        %2943 = vmatprep.mubr.bf16.mxu0 0
        %2944 = vmatmul.mubr.bf16.gmra.mrb[0].mxu0 %v2886
        %v2945 = vpop.f32.mrb[0].mxu0
        %v2946 = vadd.f32 0.0, %v2945
        %v2947 = vpop.f32.mrb[0].mxu0
        %v2948 = vadd.f32 0.0, %v2947
        %v2949 = vpop.f32.mrb[0].mxu0
        %v2950 = vadd.f32 0.0, %v2949
        %v2951 = vpop.f32.mrb[0].mxu0
        %v2952 = vadd.f32 0.0, %v2951
        %2953 = vmatprep.mubr.bf16.mxu0 0
        %2954 = vmatmul.mubr.bf16.gmra.mrb[0].mxu0 %v2889
        %v2955 = vpop.f32.mrb[0].mxu0
        %v2956 = vadd.f32 0.0, %v2955
        %v2957 = vpop.f32.mrb[0].mxu0
        %v2958 = vadd.f32 0.0, %v2957
        %v2959 = vpop.f32.mrb[0].mxu0
        %v2960 = vadd.f32 0.0, %v2959
        %v2961 = vpop.f32.mrb[0].mxu0
        %v2962 = vadd.f32 0.0, %v2961
        %2963 = vdwg.mxu0
        %v2964 = vpack.c.bf16 %v2930, %v2926
        %v2965 = vpack.c.bf16 %v2932, %v2928
        %v2966 = vpack.c.bf16 %v2940, %v2936
        %v2967 = vpack.c.bf16 %v2942, %v2938
        %v2968 = vpack.c.bf16 %v2950, %v2946
        %v2969 = vpack.c.bf16 %v2952, %v2948
        %v2970 = vpack.c.bf16 %v2960, %v2956
        %v2971 = vpack.c.bf16 %v2962, %v2958
        %v2972 = vld [vmem:[#allocation5] sm:$0xf]
        %v2973 = vld [vmem:[#allocation5 + $0x4] sm:$0xf]
        %v2974 = vld [vmem:[#allocation5 + $0x8] sm:$0xf]
        %v2975 = vld [vmem:[#allocation5 + $0xc] sm:$0xf]
        %v2976 = vld [vmem:[#allocation5 + $0x10] sm:$0xf]
        %v2977 = vld [vmem:[#allocation5 + $0x14] sm:$0xf]
        %v2978 = vld [vmem:[#allocation5 + $0x18] sm:$0xf]
        %v2979 = vld [vmem:[#allocation5 + $0x1c] sm:$0xf]
        %v2980 = vld [vmem:[#allocation5 + $0x20] sm:$0xf]
        %v2981 = vld [vmem:[#allocation5 + $0x24] sm:$0xf]
        %v2982 = vld [vmem:[#allocation5 + $0x28] sm:$0xf]
        %v2983 = vld [vmem:[#allocation5 + $0x2c] sm:$0xf]
        %v2984 = vld [vmem:[#allocation5 + $0x30] sm:$0xf]
        %v2985 = vld [vmem:[#allocation5 + $0x34] sm:$0xf]
        %v2986 = vld [vmem:[#allocation5 + $0x38] sm:$0xf]
        %v2987 = vld [vmem:[#allocation5 + $0x3c] sm:$0xf]
        %v2988 = vld [vmem:[#allocation5 + $0x40] sm:$0xf]
        %v2989 = vld [vmem:[#allocation5 + $0x44] sm:$0xf]
        %v2990 = vld [vmem:[#allocation5 + $0x48] sm:$0xf]
        %v2991 = vld [vmem:[#allocation5 + $0x4c] sm:$0xf]
        %v2992 = vld [vmem:[#allocation5 + $0x50] sm:$0xf]
        %v2993 = vld [vmem:[#allocation5 + $0x54] sm:$0xf]
        %v2994 = vld [vmem:[#allocation5 + $0x58] sm:$0xf]
        %v2995 = vld [vmem:[#allocation5 + $0x5c] sm:$0xf]
        %v2996 = vld [vmem:[#allocation5 + $0x60] sm:$0xf]
        %v2997 = vld [vmem:[#allocation5 + $0x64] sm:$0xf]
        %v2998 = vld [vmem:[#allocation5 + $0x68] sm:$0xf]
        %v2999 = vld [vmem:[#allocation5 + $0x6c] sm:$0xf]
        %v3000 = vld [vmem:[#allocation5 + $0x70] sm:$0xf]
        %v3001 = vld [vmem:[#allocation5 + $0x74] sm:$0xf]
        %v3002 = vld [vmem:[#allocation5 + $0x78] sm:$0xf]
        %v3003 = vld [vmem:[#allocation5 + $0x7c] sm:$0xf]
        %v3036 = vunpack.c.l.b16 %v2972
        %v3037 = vunpack.c.l.b16 %v2973
        %v3038 = vunpack.c.l.b16 %v2974
        %v3039 = vunpack.c.l.b16 %v2975
        %v3040 = vunpack.c.l.b16 %v2976
        %v3041 = vunpack.c.l.b16 %v2977
        %v3042 = vunpack.c.l.b16 %v2978
        %v3043 = vunpack.c.l.b16 %v2979
        %v3044 = vunpack.c.l.b16 %v2980
        %v3045 = vunpack.c.l.b16 %v2981
        %v3046 = vunpack.c.l.b16 %v2982
        %v3047 = vunpack.c.l.b16 %v2983
        %v3048 = vunpack.c.l.b16 %v2984
        %v3049 = vunpack.c.l.b16 %v2985
        %v3050 = vunpack.c.l.b16 %v2986
        %v3051 = vunpack.c.l.b16 %v2987
        %v3052 = vunpack.c.l.b16 %v2988
        %v3053 = vunpack.c.l.b16 %v2989
        %v3054 = vunpack.c.l.b16 %v2990
        %v3055 = vunpack.c.l.b16 %v2991
        %v3056 = vunpack.c.l.b16 %v2992
        %v3057 = vunpack.c.l.b16 %v2993
        %v3058 = vunpack.c.l.b16 %v2994
        %v3059 = vunpack.c.l.b16 %v2995
        %v3060 = vunpack.c.l.b16 %v2996
        %v3061 = vunpack.c.l.b16 %v2997
        %v3062 = vunpack.c.l.b16 %v2998
        %v3063 = vunpack.c.l.b16 %v2999
        %v3064 = vunpack.c.l.b16 %v3000
        %v3065 = vunpack.c.l.b16 %v3001
        %v3066 = vunpack.c.l.b16 %v3002
        %v3067 = vunpack.c.l.b16 %v3003
        %v3068 = vpack.c.b16 %v3037, %v3036
        %v3069 = vpack.c.b16 %v3039, %v3038
        %v3070 = vpack.c.b16 %v3041, %v3040
        %v3071 = vpack.c.b16 %v3043, %v3042
        %v3072 = vpack.c.b16 %v3045, %v3044
        %v3073 = vpack.c.b16 %v3047, %v3046
        %v3074 = vpack.c.b16 %v3049, %v3048
        %v3075 = vpack.c.b16 %v3051, %v3050
        %v3076 = vpack.c.b16 %v3053, %v3052
        %v3077 = vpack.c.b16 %v3055, %v3054
        %v3078 = vpack.c.b16 %v3057, %v3056
        %v3079 = vpack.c.b16 %v3059, %v3058
        %v3080 = vpack.c.b16 %v3061, %v3060
        %v3081 = vpack.c.b16 %v3063, %v3062
        %v3082 = vpack.c.b16 %v3065, %v3064
        %v3083 = vpack.c.b16 %v3067, %v3066
        %3100 = vmatprep.subr.bf16.mxu0 0
        %3101 = vmatpush1.bf16.msra.mxu0 %v3068
        %3102 = vmatprep.subr.bf16.mxu0 0
        %3103 = vmatpush1.bf16.msra.mxu0 %v3069
        %3104 = vmatprep.subr.bf16.mxu0 0
        %3105 = vmatpush1.bf16.msra.mxu0 %v3070
        %3106 = vmatprep.subr.bf16.mxu0 0
        %3107 = vmatpush1.bf16.msra.mxu0 %v3071
        %3108 = vmatprep.subr.bf16.mxu0 0
        %3109 = vmatpush1.bf16.msra.mxu0 %v3072
        %3110 = vmatprep.subr.bf16.mxu0 0
        %3111 = vmatpush1.bf16.msra.mxu0 %v3073
        %3112 = vmatprep.subr.bf16.mxu0 0
        %3113 = vmatpush1.bf16.msra.mxu0 %v3074
        %3114 = vmatprep.subr.bf16.mxu0 0
        %3115 = vmatpush1.bf16.msra.mxu0 %v3075
        %3116 = vmatprep.subr.bf16.mxu0 0
        %3117 = vmatpush1.bf16.msra.mxu0 %v3076
        %3118 = vmatprep.subr.bf16.mxu0 0
        %3119 = vmatpush1.bf16.msra.mxu0 %v3077
        %3120 = vmatprep.subr.bf16.mxu0 0
        %3121 = vmatpush1.bf16.msra.mxu0 %v3078
        %3122 = vmatprep.subr.bf16.mxu0 0
        %3123 = vmatpush1.bf16.msra.mxu0 %v3079
        %3124 = vmatprep.subr.bf16.mxu0 0
        %3125 = vmatpush1.bf16.msra.mxu0 %v3080
        %3126 = vmatprep.subr.bf16.mxu0 0
        %3127 = vmatpush1.bf16.msra.mxu0 %v3081
        %3128 = vmatprep.subr.bf16.mxu0 0
        %3129 = vmatpush1.bf16.msra.mxu0 %v3082
        %3130 = vmatprep.subr.bf16.mxu0 0
        %3131 = vmatpush1.bf16.msra.mxu0 %v3083
        %3132 = vmatprep.mubr.bf16.mxu0 %v2965
        %3133 = vmatmul.mubr.bf16.gmra.mrb[0].mxu0 %v2964
        %v3134 = vpop.f32.mrb[0].mxu0
        %v3135 = vadd.f32 0.0, %v3134
        %v3136 = vpop.f32.mrb[0].mxu0
        %v3137 = vpop.f32.mrb[0].mxu0
        %v3138 = vadd.f32 0.0, %v3137
        %v3139 = vpop.f32.mrb[0].mxu0
        %3140 = vdwg.mxu0
        %v3141 = vmax.f32 %v3135, 1.0
        %v3142 = vmax.f32 %v3138, 1.0
        %v3143 = vrcp.pop %v3141
        %v3144 = vmul.f32 1.0, %v3143
        %v3145 = vrcp.pop %v3142
        %v3146 = vmul.f32 1.0, %v3145
        %3149 = vrot.lane.b32.xlu0 %v3144, 16
        %v3150 = vpop.permute.xlu0 %3149
        %3151 = vrot.lane.b32.xlu0 %v3146, 16
        %v3152 = vpop.permute.xlu0 %3151
        %v3155 = vmul.f32 %v3141, %v3150
        %v3156 = vmul.f32 %v3142, %v3152
        %v3157 = vlog2.pop %v3155
        %v3158 = vmul.f32 %v3157, 0.6931472
        %v3159 = vlog2.pop %v3156
        %v3160 = vmul.f32 %v3159, 0.6931472
        %v3161 = vmul.f32 %v3155, %v3158
        %v3162 = vmul.f32 %v3156, %v3160
        %v3163 = vsub.f32 0.0, %v3161
        %v3164 = vsub.f32 0.0, %v3162
        %3165 = vrot.lane.b32.xlu0 %v3144, 32
        %v3166 = vpop.permute.xlu0 %3165
        %3167 = vrot.lane.b32.xlu0 %v3146, 32
        %v3168 = vpop.permute.xlu0 %3167
        %v3171 = vmul.f32 %v3141, %v3166
        %v3172 = vmul.f32 %v3142, %v3168
        %v3173 = vlog2.pop %v3171
        %v3174 = vmul.f32 %v3173, 0.6931472
        %v3175 = vlog2.pop %v3172
        %v3176 = vmul.f32 %v3175, 0.6931472
        %v3177 = vmul.f32 %v3171, %v3174
        %v3178 = vmul.f32 %v3172, %v3176
        %3181 = vrot.lane.b32.xlu0 %v3177, 112
        %v3182 = vpop.permute.xlu0 %3181
        %3183 = vrot.lane.b32.xlu0 %v3178, 112
        %v3184 = vpop.permute.xlu0 %3183
        %v3187 = vsub.f32 %v3163, %v3182
        %v3188 = vsub.f32 %v3164, %v3184
        %3189 = vrot.lane.b32.xlu0 %v3144, 48
        %v3190 = vpop.permute.xlu0 %3189
        %3191 = vrot.lane.b32.xlu0 %v3146, 48
        %v3192 = vpop.permute.xlu0 %3191
        %v3195 = vmul.f32 %v3141, %v3190
        %v3196 = vmul.f32 %v3142, %v3192
        %v3197 = vlog2.pop %v3195
        %v3198 = vmul.f32 %v3197, 0.6931472
        %v3199 = vlog2.pop %v3196
        %v3200 = vmul.f32 %v3199, 0.6931472
        %v3201 = vmul.f32 %v3195, %v3198
        %v3202 = vmul.f32 %v3196, %v3200
        %3205 = vrot.lane.b32.xlu0 %v3201, 96
        %v3206 = vpop.permute.xlu0 %3205
        %3207 = vrot.lane.b32.xlu0 %v3202, 96
        %v3208 = vpop.permute.xlu0 %3207
        %v3211 = vsub.f32 %v3187, %v3206
        %v3212 = vsub.f32 %v3188, %v3208
        %3213 = vrot.lane.b32.xlu0 %v3144, 64
        %v3214 = vpop.permute.xlu0 %3213
        %3215 = vrot.lane.b32.xlu0 %v3146, 64
        %v3216 = vpop.permute.xlu0 %3215
        %v3219 = vmul.f32 %v3141, %v3214
        %v3220 = vmul.f32 %v3142, %v3216
        %v3221 = vlog2.pop %v3219
        %v3222 = vmul.f32 %v3221, 0.6931472
        %v3223 = vlog2.pop %v3220
        %v3224 = vmul.f32 %v3223, 0.6931472
        %v3225 = vmul.f32 %v3219, %v3222
        %v3226 = vmul.f32 %v3220, %v3224
        %3229 = vrot.lane.b32.xlu0 %v3225, 80
        %v3230 = vpop.permute.xlu0 %3229
        %3231 = vrot.lane.b32.xlu0 %v3226, 80
        %v3232 = vpop.permute.xlu0 %3231
        %v3235 = vsub.f32 %v3211, %v3230
        %v3236 = vsub.f32 %v3212, %v3232
        %3237 = vrot.lane.b32.xlu0 %v3144, 80
        %v3238 = vpop.permute.xlu0 %3237
        %3239 = vrot.lane.b32.xlu0 %v3146, 80
        %v3240 = vpop.permute.xlu0 %3239
        %v3243 = vmul.f32 %v3141, %v3238
        %v3244 = vmul.f32 %v3142, %v3240
        %v3245 = vlog2.pop %v3243
        %v3246 = vmul.f32 %v3245, 0.6931472
        %v3247 = vlog2.pop %v3244
        %v3248 = vmul.f32 %v3247, 0.6931472
        %v3249 = vmul.f32 %v3243, %v3246
        %v3250 = vmul.f32 %v3244, %v3248
        %3253 = vrot.lane.b32.xlu0 %v3249, 64
        %v3254 = vpop.permute.xlu0 %3253
        %3255 = vrot.lane.b32.xlu0 %v3250, 64
        %v3256 = vpop.permute.xlu0 %3255
        %v3259 = vsub.f32 %v3235, %v3254
        %v3260 = vsub.f32 %v3236, %v3256
        %3261 = vrot.lane.b32.xlu0 %v3144, 96
        %v3262 = vpop.permute.xlu0 %3261
        %3263 = vrot.lane.b32.xlu0 %v3146, 96
        %v3264 = vpop.permute.xlu0 %3263
        %v3267 = vmul.f32 %v3141, %v3262
        %v3268 = vmul.f32 %v3142, %v3264
        %v3269 = vlog2.pop %v3267
        %v3270 = vmul.f32 %v3269, 0.6931472
        %v3271 = vlog2.pop %v3268
        %v3272 = vmul.f32 %v3271, 0.6931472
        %v3273 = vmul.f32 %v3267, %v3270
        %v3274 = vmul.f32 %v3268, %v3272
        %3277 = vrot.lane.b32.xlu0 %v3273, 48
        %v3278 = vpop.permute.xlu0 %3277
        %3279 = vrot.lane.b32.xlu0 %v3274, 48
        %v3280 = vpop.permute.xlu0 %3279
        %v3283 = vsub.f32 %v3259, %v3278
        %v3284 = vsub.f32 %v3260, %v3280
        %3285 = vrot.lane.b32.xlu0 %v3144, 112
        %v3286 = vpop.permute.xlu0 %3285
        %3287 = vrot.lane.b32.xlu0 %v3146, 112
        %v3288 = vpop.permute.xlu0 %3287
        %v3291 = vmul.f32 %v3141, %v3286
        %v3292 = vmul.f32 %v3142, %v3288
        %v3293 = vlog2.pop %v3291
        %v3294 = vmul.f32 %v3293, 0.6931472
        %v3295 = vlog2.pop %v3292
        %v3296 = vmul.f32 %v3295, 0.6931472
        %v3297 = vmul.f32 %v3291, %v3294
        %v3298 = vmul.f32 %v3292, %v3296
        %3301 = vrot.lane.b32.xlu0 %v3297, 32
        %v3302 = vpop.permute.xlu0 %3301
        %3303 = vrot.lane.b32.xlu0 %v3298, 32
        %v3304 = vpop.permute.xlu0 %3303
        %v3307 = vsub.f32 %v3283, %v3302
        %v3308 = vsub.f32 %v3284, %v3304
        %s3309 = scalar_lea.vmem [#allocation5], 128
        %v3310 = vld [vmem:[%s3309] sm:$0xf]
        %v3311 = vld [vmem:[%s3309 + $0x4] sm:$0xf]
        %v3312 = vld [vmem:[%s3309 + $0x8] sm:$0xf]
        %v3313 = vld [vmem:[%s3309 + $0xc] sm:$0xf]
        %v3314 = vld [vmem:[%s3309 + $0x10] sm:$0xf]
        %v3315 = vld [vmem:[%s3309 + $0x14] sm:$0xf]
        %v3316 = vld [vmem:[%s3309 + $0x18] sm:$0xf]
        %v3317 = vld [vmem:[%s3309 + $0x1c] sm:$0xf]
        %v3318 = vld [vmem:[%s3309 + $0x20] sm:$0xf]
        %v3319 = vld [vmem:[%s3309 + $0x24] sm:$0xf]
        %v3320 = vld [vmem:[%s3309 + $0x28] sm:$0xf]
        %v3321 = vld [vmem:[%s3309 + $0x2c] sm:$0xf]
        %v3322 = vld [vmem:[%s3309 + $0x30] sm:$0xf]
        %v3323 = vld [vmem:[%s3309 + $0x34] sm:$0xf]
        %v3324 = vld [vmem:[%s3309 + $0x38] sm:$0xf]
        %v3325 = vld [vmem:[%s3309 + $0x3c] sm:$0xf]
        %v3326 = vld [vmem:[%s3309 + $0x40] sm:$0xf]
        %v3327 = vld [vmem:[%s3309 + $0x44] sm:$0xf]
        %v3328 = vld [vmem:[%s3309 + $0x48] sm:$0xf]
        %v3329 = vld [vmem:[%s3309 + $0x4c] sm:$0xf]
        %v3330 = vld [vmem:[%s3309 + $0x50] sm:$0xf]
        %v3331 = vld [vmem:[%s3309 + $0x54] sm:$0xf]
        %v3332 = vld [vmem:[%s3309 + $0x58] sm:$0xf]
        %v3333 = vld [vmem:[%s3309 + $0x5c] sm:$0xf]
        %v3334 = vld [vmem:[%s3309 + $0x60] sm:$0xf]
        %v3335 = vld [vmem:[%s3309 + $0x64] sm:$0xf]
        %v3336 = vld [vmem:[%s3309 + $0x68] sm:$0xf]
        %v3337 = vld [vmem:[%s3309 + $0x6c] sm:$0xf]
        %v3338 = vld [vmem:[%s3309 + $0x70] sm:$0xf]
        %v3339 = vld [vmem:[%s3309 + $0x74] sm:$0xf]
        %v3340 = vld [vmem:[%s3309 + $0x78] sm:$0xf]
        %v3341 = vld [vmem:[%s3309 + $0x7c] sm:$0xf]
        %v3374 = vunpack.c.l.b16 %v3310
        %v3375 = vunpack.c.l.b16 %v3311
        %v3376 = vunpack.c.l.b16 %v3312
        %v3377 = vunpack.c.l.b16 %v3313
        %v3378 = vunpack.c.l.b16 %v3314
        %v3379 = vunpack.c.l.b16 %v3315
        %v3380 = vunpack.c.l.b16 %v3316
        %v3381 = vunpack.c.l.b16 %v3317
        %v3382 = vunpack.c.l.b16 %v3318
        %v3383 = vunpack.c.l.b16 %v3319
        %v3384 = vunpack.c.l.b16 %v3320
        %v3385 = vunpack.c.l.b16 %v3321
        %v3386 = vunpack.c.l.b16 %v3322
        %v3387 = vunpack.c.l.b16 %v3323
        %v3388 = vunpack.c.l.b16 %v3324
        %v3389 = vunpack.c.l.b16 %v3325
        %v3390 = vunpack.c.l.b16 %v3326
        %v3391 = vunpack.c.l.b16 %v3327
        %v3392 = vunpack.c.l.b16 %v3328
        %v3393 = vunpack.c.l.b16 %v3329
        %v3394 = vunpack.c.l.b16 %v3330
        %v3395 = vunpack.c.l.b16 %v3331
        %v3396 = vunpack.c.l.b16 %v3332
        %v3397 = vunpack.c.l.b16 %v3333
        %v3398 = vunpack.c.l.b16 %v3334
        %v3399 = vunpack.c.l.b16 %v3335
        %v3400 = vunpack.c.l.b16 %v3336
        %v3401 = vunpack.c.l.b16 %v3337
        %v3402 = vunpack.c.l.b16 %v3338
        %v3403 = vunpack.c.l.b16 %v3339
        %v3404 = vunpack.c.l.b16 %v3340
        %v3405 = vunpack.c.l.b16 %v3341
        %v3406 = vpack.c.b16 %v3375, %v3374
        %v3407 = vpack.c.b16 %v3377, %v3376
        %v3408 = vpack.c.b16 %v3379, %v3378
        %v3409 = vpack.c.b16 %v3381, %v3380
        %v3410 = vpack.c.b16 %v3383, %v3382
        %v3411 = vpack.c.b16 %v3385, %v3384
        %v3412 = vpack.c.b16 %v3387, %v3386
        %v3413 = vpack.c.b16 %v3389, %v3388
        %v3414 = vpack.c.b16 %v3391, %v3390
        %v3415 = vpack.c.b16 %v3393, %v3392
        %v3416 = vpack.c.b16 %v3395, %v3394
        %v3417 = vpack.c.b16 %v3397, %v3396
        %v3418 = vpack.c.b16 %v3399, %v3398
        %v3419 = vpack.c.b16 %v3401, %v3400
        %v3420 = vpack.c.b16 %v3403, %v3402
        %v3421 = vpack.c.b16 %v3405, %v3404
        %3438 = vmatprep.subr.bf16.mxu0 0
        %3439 = vmatpush1.bf16.msra.mxu0 %v3406
        %3440 = vmatprep.subr.bf16.mxu0 0
        %3441 = vmatpush1.bf16.msra.mxu0 %v3407
        %3442 = vmatprep.subr.bf16.mxu0 0
        %3443 = vmatpush1.bf16.msra.mxu0 %v3408
        %3444 = vmatprep.subr.bf16.mxu0 0
        %3445 = vmatpush1.bf16.msra.mxu0 %v3409
        %3446 = vmatprep.subr.bf16.mxu0 0
        %3447 = vmatpush1.bf16.msra.mxu0 %v3410
        %3448 = vmatprep.subr.bf16.mxu0 0
        %3449 = vmatpush1.bf16.msra.mxu0 %v3411
        %3450 = vmatprep.subr.bf16.mxu0 0
        %3451 = vmatpush1.bf16.msra.mxu0 %v3412
        %3452 = vmatprep.subr.bf16.mxu0 0
        %3453 = vmatpush1.bf16.msra.mxu0 %v3413
        %3454 = vmatprep.subr.bf16.mxu0 0
        %3455 = vmatpush1.bf16.msra.mxu0 %v3414
        %3456 = vmatprep.subr.bf16.mxu0 0
        %3457 = vmatpush1.bf16.msra.mxu0 %v3415
        %3458 = vmatprep.subr.bf16.mxu0 0
        %3459 = vmatpush1.bf16.msra.mxu0 %v3416
        %3460 = vmatprep.subr.bf16.mxu0 0
        %3461 = vmatpush1.bf16.msra.mxu0 %v3417
        %3462 = vmatprep.subr.bf16.mxu0 0
        %3463 = vmatpush1.bf16.msra.mxu0 %v3418
        %3464 = vmatprep.subr.bf16.mxu0 0
        %3465 = vmatpush1.bf16.msra.mxu0 %v3419
        %3466 = vmatprep.subr.bf16.mxu0 0
        %3467 = vmatpush1.bf16.msra.mxu0 %v3420
        %3468 = vmatprep.subr.bf16.mxu0 0
        %3469 = vmatpush1.bf16.msra.mxu0 %v3421
        %3470 = vmatprep.mubr.bf16.mxu0 %v2967
        %3471 = vmatmul.mubr.bf16.gmra.mrb[0].mxu0 %v2966
        %v3472 = vpop.f32.mrb[0].mxu0
        %v3473 = vadd.f32 0.0, %v3472
        %v3474 = vpop.f32.mrb[0].mxu0
        %v3475 = vpop.f32.mrb[0].mxu0
        %v3476 = vadd.f32 0.0, %v3475
        %v3477 = vpop.f32.mrb[0].mxu0
        %3478 = vdwg.mxu0
        %v3479 = vmax.f32 %v3473, 1.0
        %v3480 = vmax.f32 %v3476, 1.0
        %v3481 = vrcp.pop %v3479
        %v3482 = vmul.f32 1.0, %v3481
        %v3483 = vrcp.pop %v3480
        %v3484 = vmul.f32 1.0, %v3483
        %3487 = vrot.lane.b32.xlu0 %v3482, 16
        %v3488 = vpop.permute.xlu0 %3487
        %3489 = vrot.lane.b32.xlu0 %v3484, 16
        %v3490 = vpop.permute.xlu0 %3489
        %v3493 = vmul.f32 %v3479, %v3488
        %v3494 = vmul.f32 %v3480, %v3490
        %v3495 = vlog2.pop %v3493
        %v3496 = vmul.f32 %v3495, 0.6931472
        %v3497 = vlog2.pop %v3494
        %v3498 = vmul.f32 %v3497, 0.6931472
        %v3499 = vmul.f32 %v3493, %v3496
        %v3500 = vmul.f32 %v3494, %v3498
        %v3501 = vsub.f32 0.0, %v3499
        %v3502 = vsub.f32 0.0, %v3500
        %3503 = vrot.lane.b32.xlu0 %v3482, 32
        %v3504 = vpop.permute.xlu0 %3503
        %3505 = vrot.lane.b32.xlu0 %v3484, 32
        %v3506 = vpop.permute.xlu0 %3505
        %v3509 = vmul.f32 %v3479, %v3504
        %v3510 = vmul.f32 %v3480, %v3506
        %v3511 = vlog2.pop %v3509
        %v3512 = vmul.f32 %v3511, 0.6931472
        %v3513 = vlog2.pop %v3510
        %v3514 = vmul.f32 %v3513, 0.6931472
        %v3515 = vmul.f32 %v3509, %v3512
        %v3516 = vmul.f32 %v3510, %v3514
        %3519 = vrot.lane.b32.xlu0 %v3515, 112
        %v3520 = vpop.permute.xlu0 %3519
        %3521 = vrot.lane.b32.xlu0 %v3516, 112
        %v3522 = vpop.permute.xlu0 %3521
        %v3525 = vsub.f32 %v3501, %v3520
        %v3526 = vsub.f32 %v3502, %v3522
        %3527 = vrot.lane.b32.xlu0 %v3482, 48
        %v3528 = vpop.permute.xlu0 %3527
        %3529 = vrot.lane.b32.xlu0 %v3484, 48
        %v3530 = vpop.permute.xlu0 %3529
        %v3533 = vmul.f32 %v3479, %v3528
        %v3534 = vmul.f32 %v3480, %v3530
        %v3535 = vlog2.pop %v3533
        %v3536 = vmul.f32 %v3535, 0.6931472
        %v3537 = vlog2.pop %v3534
        %v3538 = vmul.f32 %v3537, 0.6931472
        %v3539 = vmul.f32 %v3533, %v3536
        %v3540 = vmul.f32 %v3534, %v3538
        %3543 = vrot.lane.b32.xlu0 %v3539, 96
        %v3544 = vpop.permute.xlu0 %3543
        %3545 = vrot.lane.b32.xlu0 %v3540, 96
        %v3546 = vpop.permute.xlu0 %3545
        %v3549 = vsub.f32 %v3525, %v3544
        %v3550 = vsub.f32 %v3526, %v3546
        %3551 = vrot.lane.b32.xlu0 %v3482, 64
        %v3552 = vpop.permute.xlu0 %3551
        %3553 = vrot.lane.b32.xlu0 %v3484, 64
        %v3554 = vpop.permute.xlu0 %3553
        %v3557 = vmul.f32 %v3479, %v3552
        %v3558 = vmul.f32 %v3480, %v3554
        %v3559 = vlog2.pop %v3557
        %v3560 = vmul.f32 %v3559, 0.6931472
        %v3561 = vlog2.pop %v3558
        %v3562 = vmul.f32 %v3561, 0.6931472
        %v3563 = vmul.f32 %v3557, %v3560
        %v3564 = vmul.f32 %v3558, %v3562
        %3567 = vrot.lane.b32.xlu0 %v3563, 80
        %v3568 = vpop.permute.xlu0 %3567
        %3569 = vrot.lane.b32.xlu0 %v3564, 80
        %v3570 = vpop.permute.xlu0 %3569
        %v3573 = vsub.f32 %v3549, %v3568
        %v3574 = vsub.f32 %v3550, %v3570
        %3575 = vrot.lane.b32.xlu0 %v3482, 80
        %v3576 = vpop.permute.xlu0 %3575
        %3577 = vrot.lane.b32.xlu0 %v3484, 80
        %v3578 = vpop.permute.xlu0 %3577
        %v3581 = vmul.f32 %v3479, %v3576
        %v3582 = vmul.f32 %v3480, %v3578
        %v3583 = vlog2.pop %v3581
        %v3584 = vmul.f32 %v3583, 0.6931472
        %v3585 = vlog2.pop %v3582
        %v3586 = vmul.f32 %v3585, 0.6931472
        %v3587 = vmul.f32 %v3581, %v3584
        %v3588 = vmul.f32 %v3582, %v3586
        %3591 = vrot.lane.b32.xlu0 %v3587, 64
        %v3592 = vpop.permute.xlu0 %3591
        %3593 = vrot.lane.b32.xlu0 %v3588, 64
        %v3594 = vpop.permute.xlu0 %3593
        %v3597 = vsub.f32 %v3573, %v3592
        %v3598 = vsub.f32 %v3574, %v3594
        %3599 = vrot.lane.b32.xlu0 %v3482, 96
        %v3600 = vpop.permute.xlu0 %3599
        %3601 = vrot.lane.b32.xlu0 %v3484, 96
        %v3602 = vpop.permute.xlu0 %3601
        %v3605 = vmul.f32 %v3479, %v3600
        %v3606 = vmul.f32 %v3480, %v3602
        %v3607 = vlog2.pop %v3605
        %v3608 = vmul.f32 %v3607, 0.6931472
        %v3609 = vlog2.pop %v3606
        %v3610 = vmul.f32 %v3609, 0.6931472
        %v3611 = vmul.f32 %v3605, %v3608
        %v3612 = vmul.f32 %v3606, %v3610
        %3615 = vrot.lane.b32.xlu0 %v3611, 48
        %v3616 = vpop.permute.xlu0 %3615
        %3617 = vrot.lane.b32.xlu0 %v3612, 48
        %v3618 = vpop.permute.xlu0 %3617
        %v3621 = vsub.f32 %v3597, %v3616
        %v3622 = vsub.f32 %v3598, %v3618
        %3623 = vrot.lane.b32.xlu0 %v3482, 112
        %v3624 = vpop.permute.xlu0 %3623
        %3625 = vrot.lane.b32.xlu0 %v3484, 112
        %v3626 = vpop.permute.xlu0 %3625
        %v3629 = vmul.f32 %v3479, %v3624
        %v3630 = vmul.f32 %v3480, %v3626
        %v3631 = vlog2.pop %v3629
        %v3632 = vmul.f32 %v3631, 0.6931472
        %v3633 = vlog2.pop %v3630
        %v3634 = vmul.f32 %v3633, 0.6931472
        %v3635 = vmul.f32 %v3629, %v3632
        %v3636 = vmul.f32 %v3630, %v3634
        %3639 = vrot.lane.b32.xlu0 %v3635, 32
        %v3640 = vpop.permute.xlu0 %3639
        %3641 = vrot.lane.b32.xlu0 %v3636, 32
        %v3642 = vpop.permute.xlu0 %3641
        %v3645 = vsub.f32 %v3621, %v3640
        %v3646 = vsub.f32 %v3622, %v3642
        %s3647 = scalar_lea.vmem [#allocation5], 256
        %v3648 = vld [vmem:[%s3647] sm:$0xf]
        %v3649 = vld [vmem:[%s3647 + $0x4] sm:$0xf]
        %v3650 = vld [vmem:[%s3647 + $0x8] sm:$0xf]
        %v3651 = vld [vmem:[%s3647 + $0xc] sm:$0xf]
        %v3652 = vld [vmem:[%s3647 + $0x10] sm:$0xf]
        %v3653 = vld [vmem:[%s3647 + $0x14] sm:$0xf]
        %v3654 = vld [vmem:[%s3647 + $0x18] sm:$0xf]
        %v3655 = vld [vmem:[%s3647 + $0x1c] sm:$0xf]
        %v3656 = vld [vmem:[%s3647 + $0x20] sm:$0xf]
        %v3657 = vld [vmem:[%s3647 + $0x24] sm:$0xf]
        %v3658 = vld [vmem:[%s3647 + $0x28] sm:$0xf]
        %v3659 = vld [vmem:[%s3647 + $0x2c] sm:$0xf]
        %v3660 = vld [vmem:[%s3647 + $0x30] sm:$0xf]
        %v3661 = vld [vmem:[%s3647 + $0x34] sm:$0xf]
        %v3662 = vld [vmem:[%s3647 + $0x38] sm:$0xf]
        %v3663 = vld [vmem:[%s3647 + $0x3c] sm:$0xf]
        %v3664 = vld [vmem:[%s3647 + $0x40] sm:$0xf]
        %v3665 = vld [vmem:[%s3647 + $0x44] sm:$0xf]
        %v3666 = vld [vmem:[%s3647 + $0x48] sm:$0xf]
        %v3667 = vld [vmem:[%s3647 + $0x4c] sm:$0xf]
        %v3668 = vld [vmem:[%s3647 + $0x50] sm:$0xf]
        %v3669 = vld [vmem:[%s3647 + $0x54] sm:$0xf]
        %v3670 = vld [vmem:[%s3647 + $0x58] sm:$0xf]
        %v3671 = vld [vmem:[%s3647 + $0x5c] sm:$0xf]
        %v3672 = vld [vmem:[%s3647 + $0x60] sm:$0xf]
        %v3673 = vld [vmem:[%s3647 + $0x64] sm:$0xf]
        %v3674 = vld [vmem:[%s3647 + $0x68] sm:$0xf]
        %v3675 = vld [vmem:[%s3647 + $0x6c] sm:$0xf]
        %v3676 = vld [vmem:[%s3647 + $0x70] sm:$0xf]
        %v3677 = vld [vmem:[%s3647 + $0x74] sm:$0xf]
        %v3678 = vld [vmem:[%s3647 + $0x78] sm:$0xf]
        %v3679 = vld [vmem:[%s3647 + $0x7c] sm:$0xf]
        %v3712 = vunpack.c.l.b16 %v3648
        %v3713 = vunpack.c.l.b16 %v3649
        %v3714 = vunpack.c.l.b16 %v3650
        %v3715 = vunpack.c.l.b16 %v3651
        %v3716 = vunpack.c.l.b16 %v3652
        %v3717 = vunpack.c.l.b16 %v3653
        %v3718 = vunpack.c.l.b16 %v3654
        %v3719 = vunpack.c.l.b16 %v3655
        %v3720 = vunpack.c.l.b16 %v3656
        %v3721 = vunpack.c.l.b16 %v3657
        %v3722 = vunpack.c.l.b16 %v3658
        %v3723 = vunpack.c.l.b16 %v3659
        %v3724 = vunpack.c.l.b16 %v3660
        %v3725 = vunpack.c.l.b16 %v3661
        %v3726 = vunpack.c.l.b16 %v3662
        %v3727 = vunpack.c.l.b16 %v3663
        %v3728 = vunpack.c.l.b16 %v3664
        %v3729 = vunpack.c.l.b16 %v3665
        %v3730 = vunpack.c.l.b16 %v3666
        %v3731 = vunpack.c.l.b16 %v3667
        %v3732 = vunpack.c.l.b16 %v3668
        %v3733 = vunpack.c.l.b16 %v3669
        %v3734 = vunpack.c.l.b16 %v3670
        %v3735 = vunpack.c.l.b16 %v3671
        %v3736 = vunpack.c.l.b16 %v3672
        %v3737 = vunpack.c.l.b16 %v3673
        %v3738 = vunpack.c.l.b16 %v3674
        %v3739 = vunpack.c.l.b16 %v3675
        %v3740 = vunpack.c.l.b16 %v3676
        %v3741 = vunpack.c.l.b16 %v3677
        %v3742 = vunpack.c.l.b16 %v3678
        %v3743 = vunpack.c.l.b16 %v3679
        %v3744 = vpack.c.b16 %v3713, %v3712
        %v3745 = vpack.c.b16 %v3715, %v3714
        %v3746 = vpack.c.b16 %v3717, %v3716
        %v3747 = vpack.c.b16 %v3719, %v3718
        %v3748 = vpack.c.b16 %v3721, %v3720
        %v3749 = vpack.c.b16 %v3723, %v3722
        %v3750 = vpack.c.b16 %v3725, %v3724
        %v3751 = vpack.c.b16 %v3727, %v3726
        %v3752 = vpack.c.b16 %v3729, %v3728
        %v3753 = vpack.c.b16 %v3731, %v3730
        %v3754 = vpack.c.b16 %v3733, %v3732
        %v3755 = vpack.c.b16 %v3735, %v3734
        %v3756 = vpack.c.b16 %v3737, %v3736
        %v3757 = vpack.c.b16 %v3739, %v3738
        %v3758 = vpack.c.b16 %v3741, %v3740
        %v3759 = vpack.c.b16 %v3743, %v3742
        %3776 = vmatprep.subr.bf16.mxu0 0
        %3777 = vmatpush1.bf16.msra.mxu0 %v3744
        %3778 = vmatprep.subr.bf16.mxu0 0
        %3779 = vmatpush1.bf16.msra.mxu0 %v3745
        %3780 = vmatprep.subr.bf16.mxu0 0
        %3781 = vmatpush1.bf16.msra.mxu0 %v3746
        %3782 = vmatprep.subr.bf16.mxu0 0
        %3783 = vmatpush1.bf16.msra.mxu0 %v3747
        %3784 = vmatprep.subr.bf16.mxu0 0
        %3785 = vmatpush1.bf16.msra.mxu0 %v3748
        %3786 = vmatprep.subr.bf16.mxu0 0
        %3787 = vmatpush1.bf16.msra.mxu0 %v3749
        %3788 = vmatprep.subr.bf16.mxu0 0
        %3789 = vmatpush1.bf16.msra.mxu0 %v3750
        %3790 = vmatprep.subr.bf16.mxu0 0
        %3791 = vmatpush1.bf16.msra.mxu0 %v3751
        %3792 = vmatprep.subr.bf16.mxu0 0
        %3793 = vmatpush1.bf16.msra.mxu0 %v3752
        %3794 = vmatprep.subr.bf16.mxu0 0
        %3795 = vmatpush1.bf16.msra.mxu0 %v3753
        %3796 = vmatprep.subr.bf16.mxu0 0
        %3797 = vmatpush1.bf16.msra.mxu0 %v3754
        %3798 = vmatprep.subr.bf16.mxu0 0
        %3799 = vmatpush1.bf16.msra.mxu0 %v3755
        %3800 = vmatprep.subr.bf16.mxu0 0
        %3801 = vmatpush1.bf16.msra.mxu0 %v3756
        %3802 = vmatprep.subr.bf16.mxu0 0
        %3803 = vmatpush1.bf16.msra.mxu0 %v3757
        %3804 = vmatprep.subr.bf16.mxu0 0
        %3805 = vmatpush1.bf16.msra.mxu0 %v3758
        %3806 = vmatprep.subr.bf16.mxu0 0
        %3807 = vmatpush1.bf16.msra.mxu0 %v3759
        %3808 = vmatprep.mubr.bf16.mxu0 %v2969
        %3809 = vmatmul.mubr.bf16.gmra.mrb[0].mxu0 %v2968
        %v3810 = vpop.f32.mrb[0].mxu0
        %v3811 = vadd.f32 0.0, %v3810
        %v3812 = vpop.f32.mrb[0].mxu0
        %v3813 = vpop.f32.mrb[0].mxu0
        %v3814 = vadd.f32 0.0, %v3813
        %v3815 = vpop.f32.mrb[0].mxu0
        %3816 = vdwg.mxu0
        %v3817 = vmax.f32 %v3811, 1.0
        %v3818 = vmax.f32 %v3814, 1.0
        %v3819 = vrcp.pop %v3817
        %v3820 = vmul.f32 1.0, %v3819
        %v3821 = vrcp.pop %v3818
        %v3822 = vmul.f32 1.0, %v3821
        %3825 = vrot.lane.b32.xlu0 %v3820, 16
        %v3826 = vpop.permute.xlu0 %3825
        %3827 = vrot.lane.b32.xlu0 %v3822, 16
        %v3828 = vpop.permute.xlu0 %3827
        %v3831 = vmul.f32 %v3817, %v3826
        %v3832 = vmul.f32 %v3818, %v3828
        %v3833 = vlog2.pop %v3831
        %v3834 = vmul.f32 %v3833, 0.6931472
        %v3835 = vlog2.pop %v3832
        %v3836 = vmul.f32 %v3835, 0.6931472
        %v3837 = vmul.f32 %v3831, %v3834
        %v3838 = vmul.f32 %v3832, %v3836
        %v3839 = vsub.f32 0.0, %v3837
        %v3840 = vsub.f32 0.0, %v3838
        %3841 = vrot.lane.b32.xlu0 %v3820, 32
        %v3842 = vpop.permute.xlu0 %3841
        %3843 = vrot.lane.b32.xlu0 %v3822, 32
        %v3844 = vpop.permute.xlu0 %3843
        %v3847 = vmul.f32 %v3817, %v3842
        %v3848 = vmul.f32 %v3818, %v3844
        %v3849 = vlog2.pop %v3847
        %v3850 = vmul.f32 %v3849, 0.6931472
        %v3851 = vlog2.pop %v3848
        %v3852 = vmul.f32 %v3851, 0.6931472
        %v3853 = vmul.f32 %v3847, %v3850
        %v3854 = vmul.f32 %v3848, %v3852
        %3857 = vrot.lane.b32.xlu0 %v3853, 112
        %v3858 = vpop.permute.xlu0 %3857
        %3859 = vrot.lane.b32.xlu0 %v3854, 112
        %v3860 = vpop.permute.xlu0 %3859
        %v3863 = vsub.f32 %v3839, %v3858
        %v3864 = vsub.f32 %v3840, %v3860
        %3865 = vrot.lane.b32.xlu0 %v3820, 48
        %v3866 = vpop.permute.xlu0 %3865
        %3867 = vrot.lane.b32.xlu0 %v3822, 48
        %v3868 = vpop.permute.xlu0 %3867
        %v3871 = vmul.f32 %v3817, %v3866
        %v3872 = vmul.f32 %v3818, %v3868
        %v3873 = vlog2.pop %v3871
        %v3874 = vmul.f32 %v3873, 0.6931472
        %v3875 = vlog2.pop %v3872
        %v3876 = vmul.f32 %v3875, 0.6931472
        %v3877 = vmul.f32 %v3871, %v3874
        %v3878 = vmul.f32 %v3872, %v3876
        %3881 = vrot.lane.b32.xlu0 %v3877, 96
        %v3882 = vpop.permute.xlu0 %3881
        %3883 = vrot.lane.b32.xlu0 %v3878, 96
        %v3884 = vpop.permute.xlu0 %3883
        %v3887 = vsub.f32 %v3863, %v3882
        %v3888 = vsub.f32 %v3864, %v3884
        %3889 = vrot.lane.b32.xlu0 %v3820, 64
        %v3890 = vpop.permute.xlu0 %3889
        %3891 = vrot.lane.b32.xlu0 %v3822, 64
        %v3892 = vpop.permute.xlu0 %3891
        %v3895 = vmul.f32 %v3817, %v3890
        %v3896 = vmul.f32 %v3818, %v3892
        %v3897 = vlog2.pop %v3895
        %v3898 = vmul.f32 %v3897, 0.6931472
        %v3899 = vlog2.pop %v3896
        %v3900 = vmul.f32 %v3899, 0.6931472
        %v3901 = vmul.f32 %v3895, %v3898
        %v3902 = vmul.f32 %v3896, %v3900
        %3905 = vrot.lane.b32.xlu0 %v3901, 80
        %v3906 = vpop.permute.xlu0 %3905
        %3907 = vrot.lane.b32.xlu0 %v3902, 80
        %v3908 = vpop.permute.xlu0 %3907
        %v3911 = vsub.f32 %v3887, %v3906
        %v3912 = vsub.f32 %v3888, %v3908
        %3913 = vrot.lane.b32.xlu0 %v3820, 80
        %v3914 = vpop.permute.xlu0 %3913
        %3915 = vrot.lane.b32.xlu0 %v3822, 80
        %v3916 = vpop.permute.xlu0 %3915
        %v3919 = vmul.f32 %v3817, %v3914
        %v3920 = vmul.f32 %v3818, %v3916
        %v3921 = vlog2.pop %v3919
        %v3922 = vmul.f32 %v3921, 0.6931472
        %v3923 = vlog2.pop %v3920
        %v3924 = vmul.f32 %v3923, 0.6931472
        %v3925 = vmul.f32 %v3919, %v3922
        %v3926 = vmul.f32 %v3920, %v3924
        %3929 = vrot.lane.b32.xlu0 %v3925, 64
        %v3930 = vpop.permute.xlu0 %3929
        %3931 = vrot.lane.b32.xlu0 %v3926, 64
        %v3932 = vpop.permute.xlu0 %3931
        %v3935 = vsub.f32 %v3911, %v3930
        %v3936 = vsub.f32 %v3912, %v3932
        %3937 = vrot.lane.b32.xlu0 %v3820, 96
        %v3938 = vpop.permute.xlu0 %3937
        %3939 = vrot.lane.b32.xlu0 %v3822, 96
        %v3940 = vpop.permute.xlu0 %3939
        %v3943 = vmul.f32 %v3817, %v3938
        %v3944 = vmul.f32 %v3818, %v3940
        %v3945 = vlog2.pop %v3943
        %v3946 = vmul.f32 %v3945, 0.6931472
        %v3947 = vlog2.pop %v3944
        %v3948 = vmul.f32 %v3947, 0.6931472
        %v3949 = vmul.f32 %v3943, %v3946
        %v3950 = vmul.f32 %v3944, %v3948
        %3953 = vrot.lane.b32.xlu0 %v3949, 48
        %v3954 = vpop.permute.xlu0 %3953
        %3955 = vrot.lane.b32.xlu0 %v3950, 48
        %v3956 = vpop.permute.xlu0 %3955
        %v3959 = vsub.f32 %v3935, %v3954
        %v3960 = vsub.f32 %v3936, %v3956
        %3961 = vrot.lane.b32.xlu0 %v3820, 112
        %v3962 = vpop.permute.xlu0 %3961
        %3963 = vrot.lane.b32.xlu0 %v3822, 112
        %v3964 = vpop.permute.xlu0 %3963
        %v3967 = vmul.f32 %v3817, %v3962
        %v3968 = vmul.f32 %v3818, %v3964
        %v3969 = vlog2.pop %v3967
        %v3970 = vmul.f32 %v3969, 0.6931472
        %v3971 = vlog2.pop %v3968
        %v3972 = vmul.f32 %v3971, 0.6931472
        %v3973 = vmul.f32 %v3967, %v3970
        %v3974 = vmul.f32 %v3968, %v3972
        %3977 = vrot.lane.b32.xlu0 %v3973, 32
        %v3978 = vpop.permute.xlu0 %3977
        %3979 = vrot.lane.b32.xlu0 %v3974, 32
        %v3980 = vpop.permute.xlu0 %3979
        %v3983 = vsub.f32 %v3959, %v3978
        %v3984 = vsub.f32 %v3960, %v3980
        %s3985 = scalar_lea.vmem [#allocation5], 384
        %v3986 = vld [vmem:[%s3985] sm:$0xf]
        %v3987 = vld [vmem:[%s3985 + $0x4] sm:$0xf]
        %v3988 = vld [vmem:[%s3985 + $0x8] sm:$0xf]
        %v3989 = vld [vmem:[%s3985 + $0xc] sm:$0xf]
        %v3990 = vld [vmem:[%s3985 + $0x10] sm:$0xf]
        %v3991 = vld [vmem:[%s3985 + $0x14] sm:$0xf]
        %v3992 = vld [vmem:[%s3985 + $0x18] sm:$0xf]
        %v3993 = vld [vmem:[%s3985 + $0x1c] sm:$0xf]
        %v3994 = vld [vmem:[%s3985 + $0x20] sm:$0xf]
        %v3995 = vld [vmem:[%s3985 + $0x24] sm:$0xf]
        %v3996 = vld [vmem:[%s3985 + $0x28] sm:$0xf]
        %v3997 = vld [vmem:[%s3985 + $0x2c] sm:$0xf]
        %v3998 = vld [vmem:[%s3985 + $0x30] sm:$0xf]
        %v3999 = vld [vmem:[%s3985 + $0x34] sm:$0xf]
        %v4000 = vld [vmem:[%s3985 + $0x38] sm:$0xf]
        %v4001 = vld [vmem:[%s3985 + $0x3c] sm:$0xf]
        %v4002 = vld [vmem:[%s3985 + $0x40] sm:$0xf]
        %v4003 = vld [vmem:[%s3985 + $0x44] sm:$0xf]
        %v4004 = vld [vmem:[%s3985 + $0x48] sm:$0xf]
        %v4005 = vld [vmem:[%s3985 + $0x4c] sm:$0xf]
        %v4006 = vld [vmem:[%s3985 + $0x50] sm:$0xf]
        %v4007 = vld [vmem:[%s3985 + $0x54] sm:$0xf]
        %v4008 = vld [vmem:[%s3985 + $0x58] sm:$0xf]
        %v4009 = vld [vmem:[%s3985 + $0x5c] sm:$0xf]
        %v4010 = vld [vmem:[%s3985 + $0x60] sm:$0xf]
        %v4011 = vld [vmem:[%s3985 + $0x64] sm:$0xf]
        %v4012 = vld [vmem:[%s3985 + $0x68] sm:$0xf]
        %v4013 = vld [vmem:[%s3985 + $0x6c] sm:$0xf]
        %v4014 = vld [vmem:[%s3985 + $0x70] sm:$0xf]
        %v4015 = vld [vmem:[%s3985 + $0x74] sm:$0xf]
        %v4016 = vld [vmem:[%s3985 + $0x78] sm:$0xf]
        %v4017 = vld [vmem:[%s3985 + $0x7c] sm:$0xf]
        %v4050 = vunpack.c.l.b16 %v3986
        %v4051 = vunpack.c.l.b16 %v3987
        %v4052 = vunpack.c.l.b16 %v3988
        %v4053 = vunpack.c.l.b16 %v3989
        %v4054 = vunpack.c.l.b16 %v3990
        %v4055 = vunpack.c.l.b16 %v3991
        %v4056 = vunpack.c.l.b16 %v3992
        %v4057 = vunpack.c.l.b16 %v3993
        %v4058 = vunpack.c.l.b16 %v3994
        %v4059 = vunpack.c.l.b16 %v3995
        %v4060 = vunpack.c.l.b16 %v3996
        %v4061 = vunpack.c.l.b16 %v3997
        %v4062 = vunpack.c.l.b16 %v3998
        %v4063 = vunpack.c.l.b16 %v3999
        %v4064 = vunpack.c.l.b16 %v4000
        %v4065 = vunpack.c.l.b16 %v4001
        %v4066 = vunpack.c.l.b16 %v4002
        %v4067 = vunpack.c.l.b16 %v4003
        %v4068 = vunpack.c.l.b16 %v4004
        %v4069 = vunpack.c.l.b16 %v4005
        %v4070 = vunpack.c.l.b16 %v4006
        %v4071 = vunpack.c.l.b16 %v4007
        %v4072 = vunpack.c.l.b16 %v4008
        %v4073 = vunpack.c.l.b16 %v4009
        %v4074 = vunpack.c.l.b16 %v4010
        %v4075 = vunpack.c.l.b16 %v4011
        %v4076 = vunpack.c.l.b16 %v4012
        %v4077 = vunpack.c.l.b16 %v4013
        %v4078 = vunpack.c.l.b16 %v4014
        %v4079 = vunpack.c.l.b16 %v4015
        %v4080 = vunpack.c.l.b16 %v4016
        %v4081 = vunpack.c.l.b16 %v4017
        %v4082 = vpack.c.b16 %v4051, %v4050
        %v4083 = vpack.c.b16 %v4053, %v4052
        %v4084 = vpack.c.b16 %v4055, %v4054
        %v4085 = vpack.c.b16 %v4057, %v4056
        %v4086 = vpack.c.b16 %v4059, %v4058
        %v4087 = vpack.c.b16 %v4061, %v4060
        %v4088 = vpack.c.b16 %v4063, %v4062
        %v4089 = vpack.c.b16 %v4065, %v4064
        %v4090 = vpack.c.b16 %v4067, %v4066
        %v4091 = vpack.c.b16 %v4069, %v4068
        %v4092 = vpack.c.b16 %v4071, %v4070
        %v4093 = vpack.c.b16 %v4073, %v4072
        %v4094 = vpack.c.b16 %v4075, %v4074
        %v4095 = vpack.c.b16 %v4077, %v4076
        %v4096 = vpack.c.b16 %v4079, %v4078
        %v4097 = vpack.c.b16 %v4081, %v4080
        %4114 = vmatprep.subr.bf16.mxu0 0
        %4115 = vmatpush1.bf16.msra.mxu0 %v4082
        %4116 = vmatprep.subr.bf16.mxu0 0
        %4117 = vmatpush1.bf16.msra.mxu0 %v4083
        %4118 = vmatprep.subr.bf16.mxu0 0
        %4119 = vmatpush1.bf16.msra.mxu0 %v4084
        %4120 = vmatprep.subr.bf16.mxu0 0
        %4121 = vmatpush1.bf16.msra.mxu0 %v4085
        %4122 = vmatprep.subr.bf16.mxu0 0
        %4123 = vmatpush1.bf16.msra.mxu0 %v4086
        %4124 = vmatprep.subr.bf16.mxu0 0
        %4125 = vmatpush1.bf16.msra.mxu0 %v4087
        %4126 = vmatprep.subr.bf16.mxu0 0
        %4127 = vmatpush1.bf16.msra.mxu0 %v4088
        %4128 = vmatprep.subr.bf16.mxu0 0
        %4129 = vmatpush1.bf16.msra.mxu0 %v4089
        %4130 = vmatprep.subr.bf16.mxu0 0
        %4131 = vmatpush1.bf16.msra.mxu0 %v4090
        %4132 = vmatprep.subr.bf16.mxu0 0
        %4133 = vmatpush1.bf16.msra.mxu0 %v4091
        %4134 = vmatprep.subr.bf16.mxu0 0
        %4135 = vmatpush1.bf16.msra.mxu0 %v4092
        %4136 = vmatprep.subr.bf16.mxu0 0
        %4137 = vmatpush1.bf16.msra.mxu0 %v4093
        %4138 = vmatprep.subr.bf16.mxu0 0
        %4139 = vmatpush1.bf16.msra.mxu0 %v4094
        %4140 = vmatprep.subr.bf16.mxu0 0
        %4141 = vmatpush1.bf16.msra.mxu0 %v4095
        %4142 = vmatprep.subr.bf16.mxu0 0
        %4143 = vmatpush1.bf16.msra.mxu0 %v4096
        %4144 = vmatprep.subr.bf16.mxu0 0
        %4145 = vmatpush1.bf16.msra.mxu0 %v4097
        %4146 = vmatprep.mubr.bf16.mxu0 %v2971
        %4147 = vmatmul.mubr.bf16.gmra.mrb[0].mxu0 %v2970
        %v4148 = vpop.f32.mrb[0].mxu0
        %v4149 = vadd.f32 0.0, %v4148
        %v4150 = vpop.f32.mrb[0].mxu0
        %v4151 = vpop.f32.mrb[0].mxu0
        %v4152 = vadd.f32 0.0, %v4151
        %v4153 = vpop.f32.mrb[0].mxu0
        %4154 = vdwg.mxu0
        %v4155 = vmax.f32 %v4149, 1.0
        %v4156 = vmax.f32 %v4152, 1.0
        %v4157 = vrcp.pop %v4155
        %v4158 = vmul.f32 1.0, %v4157
        %v4159 = vrcp.pop %v4156
        %v4160 = vmul.f32 1.0, %v4159
        %4163 = vrot.lane.b32.xlu0 %v4158, 16
        %v4164 = vpop.permute.xlu0 %4163
        %4165 = vrot.lane.b32.xlu0 %v4160, 16
        %v4166 = vpop.permute.xlu0 %4165
        %v4169 = vmul.f32 %v4155, %v4164
        %v4170 = vmul.f32 %v4156, %v4166
        %v4171 = vlog2.pop %v4169
        %v4172 = vmul.f32 %v4171, 0.6931472
        %v4173 = vlog2.pop %v4170
        %v4174 = vmul.f32 %v4173, 0.6931472
        %v4175 = vmul.f32 %v4169, %v4172
        %v4176 = vmul.f32 %v4170, %v4174
        %v4177 = vsub.f32 0.0, %v4175
        %v4178 = vsub.f32 0.0, %v4176
        %4179 = vrot.lane.b32.xlu0 %v4158, 32
        %v4180 = vpop.permute.xlu0 %4179
        %4181 = vrot.lane.b32.xlu0 %v4160, 32
        %v4182 = vpop.permute.xlu0 %4181
        %v4185 = vmul.f32 %v4155, %v4180
        %v4186 = vmul.f32 %v4156, %v4182
        %v4187 = vlog2.pop %v4185
        %v4188 = vmul.f32 %v4187, 0.6931472
        %v4189 = vlog2.pop %v4186
        %v4190 = vmul.f32 %v4189, 0.6931472
        %v4191 = vmul.f32 %v4185, %v4188
        %v4192 = vmul.f32 %v4186, %v4190
        %4195 = vrot.lane.b32.xlu0 %v4191, 112
        %v4196 = vpop.permute.xlu0 %4195
        %4197 = vrot.lane.b32.xlu0 %v4192, 112
        %v4198 = vpop.permute.xlu0 %4197
        %v4201 = vsub.f32 %v4177, %v4196
        %v4202 = vsub.f32 %v4178, %v4198
        %4203 = vrot.lane.b32.xlu0 %v4158, 48
        %v4204 = vpop.permute.xlu0 %4203
        %4205 = vrot.lane.b32.xlu0 %v4160, 48
        %v4206 = vpop.permute.xlu0 %4205
        %v4209 = vmul.f32 %v4155, %v4204
        %v4210 = vmul.f32 %v4156, %v4206
        %v4211 = vlog2.pop %v4209
        %v4212 = vmul.f32 %v4211, 0.6931472
        %v4213 = vlog2.pop %v4210
        %v4214 = vmul.f32 %v4213, 0.6931472
        %v4215 = vmul.f32 %v4209, %v4212
        %v4216 = vmul.f32 %v4210, %v4214
        %4219 = vrot.lane.b32.xlu0 %v4215, 96
        %v4220 = vpop.permute.xlu0 %4219
        %4221 = vrot.lane.b32.xlu0 %v4216, 96
        %v4222 = vpop.permute.xlu0 %4221
        %v4225 = vsub.f32 %v4201, %v4220
        %v4226 = vsub.f32 %v4202, %v4222
        %4227 = vrot.lane.b32.xlu0 %v4158, 64
        %v4228 = vpop.permute.xlu0 %4227
        %4229 = vrot.lane.b32.xlu0 %v4160, 64
        %v4230 = vpop.permute.xlu0 %4229
        %v4233 = vmul.f32 %v4155, %v4228
        %v4234 = vmul.f32 %v4156, %v4230
        %v4235 = vlog2.pop %v4233
        %v4236 = vmul.f32 %v4235, 0.6931472
        %v4237 = vlog2.pop %v4234
        %v4238 = vmul.f32 %v4237, 0.6931472
        %v4239 = vmul.f32 %v4233, %v4236
        %v4240 = vmul.f32 %v4234, %v4238
        %4243 = vrot.lane.b32.xlu0 %v4239, 80
        %v4244 = vpop.permute.xlu0 %4243
        %4245 = vrot.lane.b32.xlu0 %v4240, 80
        %v4246 = vpop.permute.xlu0 %4245
        %v4249 = vsub.f32 %v4225, %v4244
        %v4250 = vsub.f32 %v4226, %v4246
        %4251 = vrot.lane.b32.xlu0 %v4158, 80
        %v4252 = vpop.permute.xlu0 %4251
        %4253 = vrot.lane.b32.xlu0 %v4160, 80
        %v4254 = vpop.permute.xlu0 %4253
        %v4257 = vmul.f32 %v4155, %v4252
        %v4258 = vmul.f32 %v4156, %v4254
        %v4259 = vlog2.pop %v4257
        %v4260 = vmul.f32 %v4259, 0.6931472
        %v4261 = vlog2.pop %v4258
        %v4262 = vmul.f32 %v4261, 0.6931472
        %v4263 = vmul.f32 %v4257, %v4260
        %v4264 = vmul.f32 %v4258, %v4262
        %4267 = vrot.lane.b32.xlu0 %v4263, 64
        %v4268 = vpop.permute.xlu0 %4267
        %4269 = vrot.lane.b32.xlu0 %v4264, 64
        %v4270 = vpop.permute.xlu0 %4269
        %v4273 = vsub.f32 %v4249, %v4268
        %v4274 = vsub.f32 %v4250, %v4270
        %4275 = vrot.lane.b32.xlu0 %v4158, 96
        %v4276 = vpop.permute.xlu0 %4275
        %4277 = vrot.lane.b32.xlu0 %v4160, 96
        %v4278 = vpop.permute.xlu0 %4277
        %v4281 = vmul.f32 %v4155, %v4276
        %v4282 = vmul.f32 %v4156, %v4278
        %v4283 = vlog2.pop %v4281
        %v4284 = vmul.f32 %v4283, 0.6931472
        %v4285 = vlog2.pop %v4282
        %v4286 = vmul.f32 %v4285, 0.6931472
        %v4287 = vmul.f32 %v4281, %v4284
        %v4288 = vmul.f32 %v4282, %v4286
        %4291 = vrot.lane.b32.xlu0 %v4287, 48
        %v4292 = vpop.permute.xlu0 %4291
        %4293 = vrot.lane.b32.xlu0 %v4288, 48
        %v4294 = vpop.permute.xlu0 %4293
        %v4297 = vsub.f32 %v4273, %v4292
        %v4298 = vsub.f32 %v4274, %v4294
        %4299 = vrot.lane.b32.xlu0 %v4158, 112
        %v4300 = vpop.permute.xlu0 %4299
        %4301 = vrot.lane.b32.xlu0 %v4160, 112
        %v4302 = vpop.permute.xlu0 %4301
        %v4305 = vmul.f32 %v4155, %v4300
        %v4306 = vmul.f32 %v4156, %v4302
        %v4307 = vlog2.pop %v4305
        %v4308 = vmul.f32 %v4307, 0.6931472
        %v4309 = vlog2.pop %v4306
        %v4310 = vmul.f32 %v4309, 0.6931472
        %v4311 = vmul.f32 %v4305, %v4308
        %v4312 = vmul.f32 %v4306, %v4310
        %4315 = vrot.lane.b32.xlu0 %v4311, 32
        %v4316 = vpop.permute.xlu0 %4315
        %4317 = vrot.lane.b32.xlu0 %v4312, 32
        %v4318 = vpop.permute.xlu0 %4317
        %v4321 = vsub.f32 %v4297, %v4316
        %v4322 = vsub.f32 %v4298, %v4318
        %4325 = vrot.lane.b32.xlu0 %v3307, 112
        %v4326 = vpop.permute.xlu0 %4325
        %4327 = vrot.lane.b32.xlu0 %v3308, 112
        %v4328 = vpop.permute.xlu0 %4327
        %4333 = vrot.lane.b32.xlu0 %v3983, 16
        %v4334 = vpop.permute.xlu0 %4333
        %4335 = vrot.lane.b32.xlu0 %v3984, 16
        %v4336 = vpop.permute.xlu0 %4335
        %4341 = vrot.lane.b32.xlu0 %v4321, 32
        %v4342 = vpop.permute.xlu0 %4341
        %4343 = vrot.lane.b32.xlu0 %v4322, 32
        %v4344 = vpop.permute.xlu0 %4343
        %vm4347 = vcmask 130048
        %v4348 = vsel %vm4347, %v4326, %v3645
        %v4349 = vsel %vm4347, %v4328, %v3646
        %v4350 = vsel %vm456, %v4348, %v4334
        %v4351 = vsel %vm456, %v4349, %v4336
        %vm4352 = vcmask 392192
        %v4353 = vsel %vm4352, %v4350, %v4342
        %v4354 = vsel %vm4352, %v4351, %v4344
        %4355 = vst.msk [vmem:[%s285] sm:$0xff] %vm463, %v4353
        %4356 = vst.msk [vmem:[%s285 + $0x8] sm:$0xff] %vm463, %v4354
        %s4357 = sand.u32 %s144, 1
        %s4358 = scalar_lea.sflag [#allocation4], %s4357
        %s4359 = sand.u32 %s144, 1
        %s4360 = smul.addr %s4359, 32
        %s4361 = scalar_lea.vmem [#allocation7], %s4360
        %s4362 = sand.u32 %s170, 1
        %s4363 = scalar_lea.sflag [#allocation9], %s4362
        %s4364 = sand.u32 %s170, 1
        %s4365 = smul.addr %s4364, 16
        %s4366 = scalar_lea.vmem [#allocation8], %s4365
        // Predicated region
        $region49: #{tpu_custom_call.1} parent=39 // pred_check
          %p4367 = pneg %p154
        $region50: #{tpu_custom_call.1} parent=39 // pred_check_branch
          %4369 = sbr.rel (%p4367) target = $region52
        $region51: #{tpu_custom_call.1} parent=39 // pred_region
          %s4371 = ssub.s32 512, 512
          %4372 = vsyncadd %s4358, %s4371
          %s4373 = smul.addr %s26, 4
          %s4374 = smul.addr %s4373, 128
          %s4375 = scalar_lea.hbm %s5, %s4374
          %s4376 = sshll.u32 %s4361, 4
          %s4377 = int_to_ptr.vmem [resolvable:$true] %s4376
          %4382 = dma.vmem_to_hbm [thread:$0]  %s4377, 512, %s4375, %s4358, 128, 128, 8
        $region52: #{tpu_custom_call.1} parent=39 // pred_fallthru
          _
        // Predicated region
        $region53: #{tpu_custom_call.1} parent=39 // pred_check
          %p4383 = pneg %p180
        $region54: #{tpu_custom_call.1} parent=39 // pred_check_branch
          %4385 = sbr.rel (%p4383) target = $region56
        $region55: #{tpu_custom_call.1} parent=39 // pred_region
          %s4387 = ssub.s32 256, 256
          %4388 = vsyncadd %s4363, %s4387
          %s4389 = smul.addr %s26, 2
          %s4390 = smul.addr %s4389, 128
          %s4391 = scalar_lea.hbm %s6, %s4390
          %s4392 = sshll.u32 %s4366, 4
          %s4393 = int_to_ptr.vmem [resolvable:$true] %s4392
          %4398 = dma.vmem_to_hbm [thread:$0]  %s4393, 256, %s4391, %s4363, 128, 128, 8
        $region56: #{tpu_custom_call.1} parent=39 // pred_fallthru
          _
      $region40: #{tpu_custom_call.1} parent=5 // pred_fallthru
        _
      %p4399 = scmp.le.s32.totalorder 2, %s21
      // Predicated region
      $region57: #{tpu_custom_call.1} parent=5 // pred_check
        %p4400 = pneg %p4399
      $region58: #{tpu_custom_call.1} parent=5 // pred_check_branch
        %4402 = sbr.rel (%p4400) target = $region60
      $region59: #{tpu_custom_call.1} parent=5 // pred_region
        %s4403 = ssub.s32 %s21, 2
        // Predicated region
        $region61: #{tpu_custom_call.1} parent=59 // pred_check
          %p4404 = pneg %p160
        $region62: #{tpu_custom_call.1} parent=59 // pred_check_branch
          %4406 = sbr.rel (%p4404) target = $region64
        $region63: #{tpu_custom_call.1} parent=59 // pred_region
          %s4407 = sand.u32 %s145, 1
          %s4408 = scalar_lea.sflag [#allocation4], %s4407
          %s4409 = sand.u32 %s145, 1
          %s4410 = smul.addr %s4409, 32
          %s4411 = scalar_lea.vmem [#allocation7], %s4410
          %4412 = dma.done %s4408, 512
        $region64: #{tpu_custom_call.1} parent=59 // pred_fallthru
          _
        // Predicated region
        $region65: #{tpu_custom_call.1} parent=59 // pred_check
          %p4413 = pneg %p186
        $region66: #{tpu_custom_call.1} parent=59 // pred_check_branch
          %4415 = sbr.rel (%p4413) target = $region68
        $region67: #{tpu_custom_call.1} parent=59 // pred_region
          %s4416 = sand.u32 %s171, 1
          %s4417 = scalar_lea.sflag [#allocation9], %s4416
          %s4418 = sand.u32 %s171, 1
          %s4419 = smul.addr %s4418, 16
          %s4420 = scalar_lea.vmem [#allocation8], %s4419
          %4421 = dma.done %s4417, 256
        $region68: #{tpu_custom_call.1} parent=59 // pred_fallthru
          _
      $region60: #{tpu_custom_call.1} parent=5 // pred_fallthru
        _
    $region6: #{tpu_custom_call.1} parent=1 // loop_footer
      %s25 = sadd.s32 1, %s21
    $region7: #{tpu_custom_call.1} parent=1 // loop_footer_branch
      %20 = sbr.rel target = $region3
    $region8: #{tpu_custom_call.1} parent=1 // loop_exit
      _
    %4422 = vsyncpa [#allocation3], 1
    %s4423 = scalar_lea.sflag [#allocation3], 1
    %4424 = vsyncpa %s4423, 1
    %4425 = vsyncpa [#allocation6], 1
    %4426 = vsyncpa [#allocation4], 1
    %s4427 = scalar_lea.sflag [#allocation4], 1
    %4428 = vsyncpa %s4427, 1
    %4429 = vsyncpa [#allocation9], 1
    %s4430 = scalar_lea.sflag [#allocation9], 1
    %4431 = vsyncpa %s4430, 1

</llo_original>
